<compile_context>
chip_gen: v7x
topology: tpu7x:2x2x1
jax: 0.10.0
libtpu: 0.0.40
codegen_flags: <defaults>
</compile_context>

<pallas_src>
import jax
import jax.numpy as jnp
import numpy as np
from jax.experimental import pallas as pl
from jax.experimental.pallas import tpu as pltpu

# ---------------- config (small synthetic sizes) ----------------
HIDDEN = 32          # __C.HIDDEN_SIZE
N_HEAD = 4           # __C.MULTI_HEAD
HEAD_DIM = HIDDEN // N_HEAD
FF = 128             # __C.FF_SIZE
B = 2
LX = 8               # sequence length of x (the "100" axis)
LY = 16              # sequence length of y
NEG_INF = -1e9
LN_EPS = 1e-6


# ---------------- fused kernel (one batch-block of tokens per grid step) ----------------
def fui_kernel(x_ref, y_ref, bx_ref, by_ref,
               w_sa_qkv_ref, b_sa_qkv_ref, w_sa_m_ref, b_sa_m_ref,
               w_ga_q_ref, b_ga_q_ref, w_ga_kv_ref, b_ga_kv_ref,
               w_ga_m_ref, b_ga_m_ref,
               w_gsa_ref, b_gsa_ref, w_gga_ref, b_gga_ref,
               w_fsa_ref, b_fsa_ref, w_fga_ref, b_fga_ref, red_ref,
               w1_ref, b1_ref, w2_ref, b2_ref, ln_g_ref, ln_b_ref,
               o_ref):
    x = x_ref[...]                     # (TX, H)  flattened (batch, pos) tokens
    yv = y_ref[...]                    # (TY, H)
    bias_x = bx_ref[0]                 # (TX, TX) additive: -1e9 at pad / cross-batch keys
    bias_y = by_ref[0]                 # (TX, TY)

    H = x.shape[-1]
    hd = H // N_HEAD

    # ---- fused 2-D projections on flattened tokens (one MXU push each) ----
    qkv_sa = jnp.dot(x, w_sa_qkv_ref[...],
                     preferred_element_type=jnp.float32) + b_sa_qkv_ref[...]   # (TX, 3H)
    q_ga = jnp.dot(x, w_ga_q_ref[...],
                   preferred_element_type=jnp.float32) + b_ga_q_ref[...]       # (TX, H)
    kv_ga = jnp.dot(yv, w_ga_kv_ref[...],
                    preferred_element_type=jnp.float32) + b_ga_kv_ref[...]     # (TY, 2H)

    def mh_attend(slicer, bias, w_m_ref, b_m):
        # Per-head attention, unrolled (N_HEAD=4).  Merge = per-head matmul +
        # VPU accumulate (no head concat / lane placement).  1/sqrt(hd) is
        # already folded into the Q weights; bias already encodes the mask.
        acc = None
        for h in range(N_HEAD):
            q_h, k_h, v_h = slicer(h)                              # (Tq,hd),(Tk,hd),(Tk,hd)
            s = jnp.einsum('qd,kd->qk', q_h, k_h,
                           preferred_element_type=jnp.float32) + bias          # (Tq,Tk)
            s = s - jnp.max(s, axis=-1, keepdims=True)
            e = jnp.exp(s)
            p = e / jnp.sum(e, axis=-1, keepdims=True)             # exact softmax
            o_h = jnp.dot(p, v_h, preferred_element_type=jnp.float32)          # (Tq,hd)
            c = jnp.dot(o_h, w_m_ref[h], preferred_element_type=jnp.float32)   # (Tq,H)
            acc = c if acc is None else acc + c
        return acc + b_m

    def sa_slices(h):
        return (qkv_sa[:, h * hd:(h + 1) * hd],
                qkv_sa[:, H + h * hd:H + (h + 1) * hd],
                qkv_sa[:, 2 * H + h * hd:2 * H + (h + 1) * hd])

    def ga_slices(h):
        return (q_ga[:, h * hd:(h + 1) * hd],
                kv_ga[:, h * hd:(h + 1) * hd],
                kv_ga[:, H + h * hd:H + (h + 1) * hd])

    x_sa = mh_attend(sa_slices, bias_x, w_sa_m_ref, b_sa_m_ref[...])           # (TX, H)
    x_ga = mh_attend(ga_slices, bias_y, w_ga_m_ref, b_ga_m_ref[...])           # (TX, H)

    # ---- FAA gating: softmax over the {SA, GA} pair == sigmoid of difference (exact) ----
    g_sa = jax.nn.sigmoid(jnp.dot(x * x_sa, w_gsa_ref[...],
                                  preferred_element_type=jnp.float32) + b_gsa_ref[...])
    g_ga = jax.nn.sigmoid(jnp.dot(x * x_ga, w_gga_ref[...],
                                  preferred_element_type=jnp.float32) + b_gga_ref[...])
    fcd_sa = jax.nn.sigmoid(g_sa - g_ga)
    fcd_ga = 1.0 - fcd_sa

    # ---- 8-way fusion ----
    z_sa = jnp.dot(fcd_sa * x_sa, w_fsa_ref[...],
                   preferred_element_type=jnp.float32) + b_fsa_ref[...]        # (TX, 8H)
    z_ga = jnp.dot(fcd_ga * x_ga, w_fga_ref[...],
                   preferred_element_type=jnp.float32) + b_fga_ref[...]        # (TX, 8H)
    # Reduce over the 8 groups with one MXU matmul against a constant 0/1 matrix
    # (no sub-vreg lane slices / XLU rotations on the critical path).
    x_fmf = jnp.dot(z_sa * z_ga, red_ref[...],
                    preferred_element_type=jnp.float32)                        # (TX, H)

    # ---- FFN + residual + MCAN LayerNorm (unbiased std, eps outside sqrt) ----
    h1 = jnp.maximum(jnp.dot(x_fmf, w1_ref[...],
                             preferred_element_type=jnp.float32) + b1_ref[...], 0.0)
    f = jnp.dot(h1, w2_ref[...], preferred_element_type=jnp.float32) + b2_ref[...]
    yres = x_fmf + f
    mean = jnp.mean(yres, axis=-1, keepdims=True)
    d = yres - mean
    std = jnp.sqrt(jnp.sum(d * d, axis=-1, keepdims=True) * (1.0 / (H - 1)))
    o_ref[...] = ln_g_ref[...] * d / (std + LN_EPS) + ln_b_ref[...]


# ---------------- wrapper: weight / bias prep (trace-time) + pallas_call ----------------
def prepare_kernel_params(P):
    scale = 1.0 / np.sqrt(HEAD_DIM)

    # SA attention: fuse Q/K/V into (H, 3H); fold the score scale into Q (exact).
    wv, bv, wk, bk, wq, bq, wm, bm = P["mhatt_sa"]
    w_sa_qkv = jnp.concatenate([wq * scale, wk, wv], axis=1)      # (H, 3H)
    b_sa_qkv = jnp.concatenate([bq * scale, bk, bv], axis=1)      # (1, 3H)
    w_sa_m = wm.reshape(N_HEAD, HEAD_DIM, HIDDEN)                 # per-head merge weights
    b_sa_m = bm

    # GA attention: Q separate (input x), K/V fused (input y).
    wv, bv, wk, bk, wq, bq, wm, bm = P["mhatt_ga"]
    w_ga_q = wq * scale
    b_ga_q = bq * scale
    w_ga_kv = jnp.concatenate([wk, wv], axis=1)                   # (H, 2H)
    b_ga_kv = jnp.concatenate([bk, bv], axis=1)
    w_ga_m = wm.reshape(N_HEAD, HEAD_DIM, HIDDEN)
    b_ga_m = bm

    wsa, bsa, wga, bga, wfsa, bfsa, wfga, bfga = P["faa_fusion"]
    w1, b1, w2, b2, ln_g, ln_b = P["ffn_ln"]

    # 0/1 reduction matrix for the 8-way fusion sum: row g*H+d -> column d.
    red = jnp.tile(jnp.eye(HIDDEN, dtype=jnp.float32), (8, 1))    # (8H, H)

    return (w_sa_qkv, b_sa_qkv, w_sa_m, b_sa_m,
            w_ga_q, b_ga_q, w_ga_kv, b_ga_kv, w_ga_m, b_ga_m,
            wsa, bsa, wga, bga, wfsa, bfsa, wfga, bfga, red,
            w1, b1, w2, b2, ln_g, ln_b)


def _pick_batch_block(Bq):
    # v7x has 2 TensorCores per chip: keep a 2-way "parallel" grid so both are
    # used.  Single-TC chips (v5e/v6e): fold the whole batch into one grid step
    # (a grid would just be a sequential loop paying fixed per-step overhead).
    try:
        kind = jax.devices()[0].device_kind.lower()
    except Exception:
        kind = ""
    if ("v7" in kind or "7x" in kind) and Bq % 2 == 0:
        return Bq // 2
    return Bq


def _build_attn_bias(mask, bb, lq, lk):
    """(B,1,Lk) float mask (1.0 == padded key) -> additive score bias per batch
    block: (B//bb, bb*lq, bb*lk).  NEG_INF at padded keys and at cross-batch
    (query batch != key batch) positions, so folding batch into the token axis
    is exact (masked keys get probability exactly 0 after exp underflow)."""
    bq = mask.shape[0]
    nb = bq // bb
    pad = jnp.where(mask.reshape(bq, lk) > 0.5, NEG_INF, 0.0)     # (B, lk)
    pad = pad.reshape(nb, 1, bb * lk)                              # per-block key bias
    q_batch = jnp.repeat(jnp.arange(bb), lq)                       # (bb*lq,)
    k_batch = jnp.repeat(jnp.arange(bb), lk)                       # (bb*lk,)
    cross = jnp.where(q_batch[:, None] != k_batch[None, :], NEG_INF, 0.0)
    return cross[None] + pad                                       # (nb, bb*lq, bb*lk)


@jax.jit
def fui_forward(x, y, x_mask, y_mask, P):
    Bq, Lq, H = x.shape
    Lk = y.shape[1]
    bb = _pick_batch_block(Bq)       # batch elements folded per grid step
    nb = Bq // bb
    tx, ty = bb * Lq, bb * Lk

    weights = prepare_kernel_params(P)
    x2 = x.reshape(Bq * Lq, H)
    y2 = y.reshape(Bq * Lk, H)
    bias_x = _build_attn_bias(x_mask, bb, Lq, Lq)    # (nb, tx, tx)
    bias_y = _build_attn_bias(y_mask, bb, Lq, Lk)    # (nb, tx, ty)

    def full_spec(w):
        zero = (0,) * w.ndim
        return pl.BlockSpec(tuple(w.shape), lambda i: zero)

    in_specs = ([pl.BlockSpec((tx, H), lambda i: (i, 0)),
                 pl.BlockSpec((ty, H), lambda i: (i, 0)),
                 pl.BlockSpec((1, tx, tx), lambda i: (i, 0, 0)),
                 pl.BlockSpec((1, tx, ty), lambda i: (i, 0, 0))]
                + [full_spec(w) for w in weights])

    out = pl.pallas_call(
        fui_kernel,
        out_shape=jax.ShapeDtypeStruct((Bq * Lq, H), jnp.float32),
        grid_spec=pltpu.PrefetchScalarGridSpec(
            num_scalar_prefetch=0,
            grid=(nb,),
            in_specs=in_specs,
            out_specs=pl.BlockSpec((tx, H), lambda i: (i, 0))),
        compiler_params=pltpu.CompilerParams(
            dimension_semantics=("parallel",),
            vmem_limit_bytes=32 * 1024 * 1024),
    )(x2, y2, bias_x, bias_y, *weights)
    return out.reshape(Bq, Lq, H)


# ---------------- pure-JAX reference (correctness check) ----------------
def mhatt_ref(v, k, q, mask, prm):
    wv, bv, wk, bk, wq, bq, wm, bm = prm
    Bq, Lq, H = q.shape
    Lkv = k.shape[1]
    vv = (v @ wv + bv).reshape(Bq, Lkv, N_HEAD, HEAD_DIM).transpose(0, 2, 1, 3)
    kk = (k @ wk + bk).reshape(Bq, Lkv, N_HEAD, HEAD_DIM).transpose(0, 2, 1, 3)
    qq = (q @ wq + bq).reshape(Bq, Lq, N_HEAD, HEAD_DIM).transpose(0, 2, 1, 3)
    scores = (qq @ kk.transpose(0, 1, 3, 2)) / np.sqrt(HEAD_DIM)
    scores = jnp.where(mask[:, None] > 0.5, NEG_INF, scores)
    attn = jax.nn.softmax(scores, axis=-1)
    att = (attn @ vv).transpose(0, 2, 1, 3).reshape(Bq, Lq, H)
    return att @ wm + bm


def fui_ref(x, y, x_mask, y_mask, P):
    x_sa = mhatt_ref(x, x, x, x_mask, P["mhatt_sa"])
    x_ga = mhatt_ref(y, y, x, y_mask, P["mhatt_ga"])
    wsa, bsa, wga, bga, wfsa, bfsa, wfga, bfga = P["faa_fusion"]
    g_sa = jax.nn.sigmoid((x * x_sa) @ wsa + bsa)[..., None, :]
    g_ga = jax.nn.sigmoid((x * x_ga) @ wga + bga)[..., None, :]
    fcd = jax.nn.softmax(jnp.concatenate([g_sa, g_ga], axis=-2), axis=-2)
    fcd_sa, fcd_ga = fcd[..., 0, :], fcd[..., 1, :]
    Bq, Lq, H = x.shape
    z_sa = ((fcd_sa * x_sa) @ wfsa + bfsa).reshape(Bq, Lq, 8, H)
    z_ga = ((fcd_ga * x_ga) @ wfga + bfga).reshape(Bq, Lq, 8, H)
    x_fmf = jnp.sum(z_sa * z_ga, axis=-2)
    w1, b1, w2, b2, ga, be = P["ffn_ln"]
    yres = x_fmf + (jnp.maximum(x_fmf @ w1 + b1, 0.0) @ w2 + b2)
    mean = jnp.mean(yres, axis=-1, keepdims=True)
    d = yres - mean
    std = jnp.sqrt(jnp.sum(d * d, axis=-1, keepdims=True) / (H - 1))
    return ga * d / (std + LN_EPS) + be


# ---------------- deterministic parameter init ----------------
def init_linear(key, fan_in, fan_out):
    k1, k2 = jax.random.split(key)
    w = jax.random.normal(k1, (fan_in, fan_out), jnp.float32) / np.sqrt(fan_in)
    b = jax.random.normal(k2, (1, fan_out), jnp.float32) * 0.02
    return w, b


def make_params(key):
    keys = jax.random.split(key, 16)
    # mhatt_SA / mhatt_GA: linear_v, linear_k, linear_q, linear_merge
    mh_sa = sum((init_linear(keys[i], HIDDEN, HIDDEN) for i in range(4)), ())
    mh_ga = sum((init_linear(keys[4 + i], HIDDEN, HIDDEN) for i in range(4)), ())
    # FAA gating linears + fusion (H -> 8H) linears
    wsa, bsa = init_linear(keys[8], HIDDEN, HIDDEN)
    wga, bga = init_linear(keys[9], HIDDEN, HIDDEN)
    wfsa, bfsa = init_linear(keys[10], HIDDEN, 8 * HIDDEN)
    wfga, bfga = init_linear(keys[11], HIDDEN, 8 * HIDDEN)
    # FFN + LayerNorm(norm_ffn)
    w1, b1 = init_linear(keys[12], HIDDEN, FF)
    w2, b2 = init_linear(keys[13], FF, HIDDEN)
    ln_g = jnp.ones((1, HIDDEN), jnp.float32)
    ln_b = jnp.zeros((1, HIDDEN), jnp.float32)
    # TODO(synk): norm_fmf / dropout_fmf / linear_x_q / dropout_FCD are declared in
    # FUI.__init__ but never used in FUI.forward, so they are intentionally omitted.
    return {
        "mhatt_sa": mh_sa,
        "mhatt_ga": mh_ga,
        "faa_fusion": (wsa, bsa, wga, bga, wfsa, bfsa, wfga, bfga),
        "ffn_ln": (w1, b1, w2, b2, ln_g, ln_b),
    }


if __name__ == "__main__":
    root = jax.random.PRNGKey(0)
    kx, ky, kp = jax.random.split(root, 3)
    x = jax.random.normal(kx, (B, LX, HIDDEN), jnp.float32)
    y = jax.random.normal(ky, (B, LY, HIDDEN), jnp.float32)

    # masks: 1.0 == padded / masked key position
    x_mask = jnp.zeros((B, 1, LX), jnp.float32)
    y_mask = jnp.zeros((B, 1, LY), jnp.float32).at[1, 0, -3:].set(1.0)

    params = make_params(kp)

    out = fui_forward(x, y, x_mask, y_mask, params)
    out = jax.block_until_ready(out)

    # Reference at float32 matmul precision (TPU's default f32 dot is lower
    # precision).  The kernel itself has no fast-math approximations left, but the
    # MXU's f32 multi-pass matmuls may still round differently than XLA's, so keep
    # a modest tolerance.
    with jax.default_matmul_precision("float32"):
        ref = fui_ref(x, y, x_mask, y_mask, params)

    np.testing.assert_allclose(np.asarray(out), np.asarray(ref), rtol=1e-2, atol=1e-2)

    print("KERNEL_OK")
</pallas_src>

<mosaic_0001>
module attributes {stable_mosaic.version = 11 : i64} {
  func.func @fui_kernel(%arg0: i32, %arg1: memref<16x32xf32, #tpu.memory_space<vmem>>, %arg2: memref<32x32xf32, #tpu.memory_space<vmem>>, %arg3: memref<1x16x16xf32, #tpu.memory_space<vmem>>, %arg4: memref<1x16x32xf32, #tpu.memory_space<vmem>>, %arg5: memref<32x96xf32, #tpu.memory_space<vmem>>, %arg6: memref<1x96xf32, #tpu.memory_space<vmem>>, %arg7: memref<4x8x32xf32, #tpu.memory_space<vmem>>, %arg8: memref<1x32xf32, #tpu.memory_space<vmem>>, %arg9: memref<32x32xf32, #tpu.memory_space<vmem>>, %arg10: memref<1x32xf32, #tpu.memory_space<vmem>>, %arg11: memref<32x64xf32, #tpu.memory_space<vmem>>, %arg12: memref<1x64xf32, #tpu.memory_space<vmem>>, %arg13: memref<4x8x32xf32, #tpu.memory_space<vmem>>, %arg14: memref<1x32xf32, #tpu.memory_space<vmem>>, %arg15: memref<32x32xf32, #tpu.memory_space<vmem>>, %arg16: memref<1x32xf32, #tpu.memory_space<vmem>>, %arg17: memref<32x32xf32, #tpu.memory_space<vmem>>, %arg18: memref<1x32xf32, #tpu.memory_space<vmem>>, %arg19: memref<32x256xf32, #tpu.memory_space<vmem>>, %arg20: memref<1x256xf32, #tpu.memory_space<vmem>>, %arg21: memref<32x256xf32, #tpu.memory_space<vmem>>, %arg22: memref<1x256xf32, #tpu.memory_space<vmem>>, %arg23: memref<256x32xf32, #tpu.memory_space<vmem>>, %arg24: memref<32x128xf32, #tpu.memory_space<vmem>>, %arg25: memref<1x128xf32, #tpu.memory_space<vmem>>, %arg26: memref<128x32xf32, #tpu.memory_space<vmem>>, %arg27: memref<1x32xf32, #tpu.memory_space<vmem>>, %arg28: memref<1x32xf32, #tpu.memory_space<vmem>>, %arg29: memref<1x32xf32, #tpu.memory_space<vmem>>, %arg30: memref<16x32xf32, #tpu.memory_space<vmem>>) attributes {dimension_semantics = [#tpu.dimension_semantics<parallel>], iteration_bounds = array<i64: 1>, scalar_prefetch = 0 : i64, scratch_operands = 0 : i64, tpu.core_type = #tpu.core_type<tc>, window_params = [{transform_indices = @transform_0, window_bounds = array<i64: 16, 32>}, {transform_indices = @transform_1, window_bounds = array<i64: 32, 32>}, {transform_indices = @transform_2, window_bounds = array<i64: 1, 16, 16>}, {transform_indices = @transform_3, window_bounds = array<i64: 1, 16, 32>}, {pipeline_mode = #tpu.pipeline_mode<synchronous>, transform_indices = @transform_4, window_bounds = array<i64: 32, 96>}, {pipeline_mode = #tpu.pipeline_mode<synchronous>, transform_indices = @transform_5, window_bounds = array<i64: 1, 96>}, {pipeline_mode = #tpu.pipeline_mode<synchronous>, transform_indices = @transform_6, window_bounds = array<i64: 4, 8, 32>}, {pipeline_mode = #tpu.pipeline_mode<synchronous>, transform_indices = @transform_7, window_bounds = array<i64: 1, 32>}, {pipeline_mode = #tpu.pipeline_mode<synchronous>, transform_indices = @transform_8, window_bounds = array<i64: 32, 32>}, {pipeline_mode = #tpu.pipeline_mode<synchronous>, transform_indices = @transform_9, window_bounds = array<i64: 1, 32>}, {pipeline_mode = #tpu.pipeline_mode<synchronous>, transform_indices = @transform_10, window_bounds = array<i64: 32, 64>}, {pipeline_mode = #tpu.pipeline_mode<synchronous>, transform_indices = @transform_11, window_bounds = array<i64: 1, 64>}, {pipeline_mode = #tpu.pipeline_mode<synchronous>, transform_indices = @transform_12, window_bounds = array<i64: 4, 8, 32>}, {pipeline_mode = #tpu.pipeline_mode<synchronous>, transform_indices = @transform_13, window_bounds = array<i64: 1, 32>}, {pipeline_mode = #tpu.pipeline_mode<synchronous>, transform_indices = @transform_14, window_bounds = array<i64: 32, 32>}, {pipeline_mode = #tpu.pipeline_mode<synchronous>, transform_indices = @transform_15, window_bounds = array<i64: 1, 32>}, {pipeline_mode = #tpu.pipeline_mode<synchronous>, transform_indices = @transform_16, window_bounds = array<i64: 32, 32>}, {pipeline_mode = #tpu.pipeline_mode<synchronous>, transform_indices = @transform_17, window_bounds = array<i64: 1, 32>}, {pipeline_mode = #tpu.pipeline_mode<synchronous>, transform_indices = @transform_18, window_bounds = array<i64: 32, 256>}, {pipeline_mode = #tpu.pipeline_mode<synchronous>, transform_indices = @transform_19, window_bounds = array<i64: 1, 256>}, {pipeline_mode = #tpu.pipeline_mode<synchronous>, transform_indices = @transform_20, window_bounds = array<i64: 32, 256>}, {pipeline_mode = #tpu.pipeline_mode<synchronous>, transform_indices = @transform_21, window_bounds = array<i64: 1, 256>}, {pipeline_mode = #tpu.pipeline_mode<synchronous>, transform_indices = @transform_22, window_bounds = array<i64: 256, 32>}, {pipeline_mode = #tpu.pipeline_mode<synchronous>, transform_indices = @transform_23, window_bounds = array<i64: 32, 128>}, {pipeline_mode = #tpu.pipeline_mode<synchronous>, transform_indices = @transform_24, window_bounds = array<i64: 1, 128>}, {pipeline_mode = #tpu.pipeline_mode<synchronous>, transform_indices = @transform_25, window_bounds = array<i64: 128, 32>}, {pipeline_mode = #tpu.pipeline_mode<synchronous>, transform_indices = @transform_26, window_bounds = array<i64: 1, 32>}, {pipeline_mode = #tpu.pipeline_mode<synchronous>, transform_indices = @transform_27, window_bounds = array<i64: 1, 32>}, {pipeline_mode = #tpu.pipeline_mode<synchronous>, transform_indices = @transform_28, window_bounds = array<i64: 1, 32>}, {transform_indices = @transform_29, window_bounds = array<i64: 16, 32>}]} {
    %c0 = arith.constant 0 : index
    %c0_0 = arith.constant 0 : index
    %0 = vector.load %arg1[%c0, %c0_0] : memref<16x32xf32, #tpu.memory_space<vmem>>, vector<16x32xf32>
    %c0_1 = arith.constant 0 : index
    %c0_2 = arith.constant 0 : index
    %1 = vector.load %arg2[%c0_1, %c0_2] : memref<32x32xf32, #tpu.memory_space<vmem>>, vector<32x32xf32>
    %c0_3 = arith.constant 0 : index
    %c0_4 = arith.constant 0 : index
    %c0_5 = arith.constant 0 : index
    %2 = vector.load %arg3[%c0_3, %c0_4, %c0_5] : memref<1x16x16xf32, #tpu.memory_space<vmem>>, vector<1x16x16xf32>
    %3 = vector.shape_cast %2 : vector<1x16x16xf32> to vector<16x16xf32>
    %c0_6 = arith.constant 0 : index
    %c0_7 = arith.constant 0 : index
    %c0_8 = arith.constant 0 : index
    %4 = vector.load %arg4[%c0_6, %c0_7, %c0_8] : memref<1x16x32xf32, #tpu.memory_space<vmem>>, vector<1x16x32xf32>
    %5 = vector.shape_cast %4 : vector<1x16x32xf32> to vector<16x32xf32>
    %c0_9 = arith.constant 0 : index
    %c0_10 = arith.constant 0 : index
    %6 = vector.load %arg5[%c0_9, %c0_10] : memref<32x96xf32, #tpu.memory_space<vmem>>, vector<32x96xf32>
    %cst = arith.constant dense<0.000000e+00> : vector<16x96xf32>
    %7 = tpu.matmul %0, %6, %cst {dimension_numbers = #tpu.dot_dimension_numbers<[1], [0], [0], [1], [0, 0, 1, 1], [], []>} : vector<16x32xf32>, vector<32x96xf32>, vector<16x96xf32> -> vector<16x96xf32>
    %c0_11 = arith.constant 0 : index
    %c0_12 = arith.constant 0 : index
    %8 = vector.load %arg6[%c0_11, %c0_12] : memref<1x96xf32, #tpu.memory_space<vmem>>, vector<1x96xf32>
    %9 = vector.broadcast %8 : vector<1x96xf32> to vector<16x96xf32>
    %10 = arith.addf %7, %9 : vector<16x96xf32>
    %c0_13 = arith.constant 0 : index
    %c0_14 = arith.constant 0 : index
    %11 = vector.load %arg9[%c0_13, %c0_14] : memref<32x32xf32, #tpu.memory_space<vmem>>, vector<32x32xf32>
    %cst_15 = arith.constant dense<0.000000e+00> : vector<16x32xf32>
    %12 = tpu.matmul %0, %11, %cst_15 {dimension_numbers = #tpu.dot_dimension_numbers<[1], [0], [0], [1], [0, 0, 1, 1], [], []>} : vector<16x32xf32>, vector<32x32xf32>, vector<16x32xf32> -> vector<16x32xf32>
    %c0_16 = arith.constant 0 : index
    %c0_17 = arith.constant 0 : index
    %13 = vector.load %arg10[%c0_16, %c0_17] : memref<1x32xf32, #tpu.memory_space<vmem>>, vector<1x32xf32>
    %14 = vector.broadcast %13 : vector<1x32xf32> to vector<16x32xf32>
    %15 = arith.addf %12, %14 : vector<16x32xf32>
    %c0_18 = arith.constant 0 : index
    %c0_19 = arith.constant 0 : index
    %16 = vector.load %arg11[%c0_18, %c0_19] : memref<32x64xf32, #tpu.memory_space<vmem>>, vector<32x64xf32>
    %cst_20 = arith.constant dense<0.000000e+00> : vector<32x64xf32>
    %17 = tpu.matmul %1, %16, %cst_20 {dimension_numbers = #tpu.dot_dimension_numbers<[1], [0], [0], [1], [0, 0, 1, 1], [], []>} : vector<32x32xf32>, vector<32x64xf32>, vector<32x64xf32> -> vector<32x64xf32>
    %c0_21 = arith.constant 0 : index
    %c0_22 = arith.constant 0 : index
    %18 = vector.load %arg12[%c0_21, %c0_22] : memref<1x64xf32, #tpu.memory_space<vmem>>, vector<1x64xf32>
    %19 = vector.broadcast %18 : vector<1x64xf32> to vector<32x64xf32>
    %20 = arith.addf %17, %19 : vector<32x64xf32>
    %c0_23 = arith.constant 0 : index
    %c0_24 = arith.constant 0 : index
    %21 = vector.load %arg8[%c0_23, %c0_24] : memref<1x32xf32, #tpu.memory_space<vmem>>, vector<1x32xf32>
    %22 = vector.extract_strided_slice %10 {offsets = [0, 0], sizes = [16, 8], strides = [1, 1]} : vector<16x96xf32> to vector<16x8xf32>
    %23 = vector.extract_strided_slice %10 {offsets = [0, 32], sizes = [16, 8], strides = [1, 1]} : vector<16x96xf32> to vector<16x8xf32>
    %24 = vector.extract_strided_slice %10 {offsets = [0, 64], sizes = [16, 8], strides = [1, 1]} : vector<16x96xf32> to vector<16x8xf32>
    "tpu.trace_start"() <{level = 10 : i32, message = "qd,kd->qk"}> : () -> ()
    %cst_25 = arith.constant dense<0.000000e+00> : vector<16x16xf32>
    %25 = tpu.matmul %22, %23, %cst_25 {dimension_numbers = #tpu.dot_dimension_numbers<[1], [1], [0], [0], [0, 0, 1, 0], [], []>} : vector<16x8xf32>, vector<16x8xf32>, vector<16x16xf32> -> vector<16x16xf32>
    "tpu.trace_stop"() : () -> ()
    %26 = arith.addf %25, %3 : vector<16x16xf32>
    %cst_26 = arith.constant dense<0xFF800000> : vector<16xf32>
    %27 = vector.multi_reduction <maximumf>, %26, %cst_26 [1] : vector<16x16xf32> to vector<16xf32>
    %28 = vector.shape_cast %27 : vector<16xf32> to vector<16x1xf32>
    %29 = vector.broadcast %28 : vector<16x1xf32> to vector<16x16xf32>
    %30 = arith.subf %26, %29 : vector<16x16xf32>
    %31 = math.exp %30 : vector<16x16xf32>
    %cst_27 = arith.constant dense<0.000000e+00> : vector<16xf32>
    %32 = vector.multi_reduction <add>, %31, %cst_27 [1] : vector<16x16xf32> to vector<16xf32>
    %33 = vector.shape_cast %32 : vector<16xf32> to vector<16x1xf32>
    %34 = vector.broadcast %33 : vector<16x1xf32> to vector<16x16xf32>
    %35 = arith.divf %31, %34 : vector<16x16xf32>
    %cst_28 = arith.constant dense<0.000000e+00> : vector<16x8xf32>
    %36 = tpu.matmul %35, %24, %cst_28 {dimension_numbers = #tpu.dot_dimension_numbers<[1], [0], [0], [1], [0, 0, 1, 1], [], []>} : vector<16x16xf32>, vector<16x8xf32>, vector<16x8xf32> -> vector<16x8xf32>
    %c0_29 = arith.constant 0 : index
    %c0_30 = arith.constant 0 : index
    %c0_31 = arith.constant 0 : index
    %37 = vector.load %arg7[%c0_29, %c0_30, %c0_31] : memref<4x8x32xf32, #tpu.memory_space<vmem>>, vector<1x8x32xf32>
    %38 = vector.shape_cast %37 : vector<1x8x32xf32> to vector<8x32xf32>
    %cst_32 = arith.constant dense<0.000000e+00> : vector<16x32xf32>
    %39 = tpu.matmul %36, %38, %cst_32 {dimension_numbers = #tpu.dot_dimension_numbers<[1], [0], [0], [1], [0, 0, 1, 1], [], []>} : vector<16x8xf32>, vector<8x32xf32>, vector<16x32xf32> -> vector<16x32xf32>
    %40 = vector.extract_strided_slice %10 {offsets = [0, 8], sizes = [16, 8], strides = [1, 1]} : vector<16x96xf32> to vector<16x8xf32>
    %41 = vector.extract_strided_slice %10 {offsets = [0, 40], sizes = [16, 8], strides = [1, 1]} : vector<16x96xf32> to vector<16x8xf32>
    %42 = vector.extract_strided_slice %10 {offsets = [0, 72], sizes = [16, 8], strides = [1, 1]} : vector<16x96xf32> to vector<16x8xf32>
    "tpu.trace_start"() <{level = 10 : i32, message = "qd,kd->qk"}> : () -> ()
    %cst_33 = arith.constant dense<0.000000e+00> : vector<16x16xf32>
    %43 = tpu.matmul %40, %41, %cst_33 {dimension_numbers = #tpu.dot_dimension_numbers<[1], [1], [0], [0], [0, 0, 1, 0], [], []>} : vector<16x8xf32>, vector<16x8xf32>, vector<16x16xf32> -> vector<16x16xf32>
    "tpu.trace_stop"() : () -> ()
    %44 = arith.addf %43, %3 : vector<16x16xf32>
    %cst_34 = arith.constant dense<0xFF800000> : vector<16xf32>
    %45 = vector.multi_reduction <maximumf>, %44, %cst_34 [1] : vector<16x16xf32> to vector<16xf32>
    %46 = vector.shape_cast %45 : vector<16xf32> to vector<16x1xf32>
    %47 = vector.broadcast %46 : vector<16x1xf32> to vector<16x16xf32>
    %48 = arith.subf %44, %47 : vector<16x16xf32>
    %49 = math.exp %48 : vector<16x16xf32>
    %cst_35 = arith.constant dense<0.000000e+00> : vector<16xf32>
    %50 = vector.multi_reduction <add>, %49, %cst_35 [1] : vector<16x16xf32> to vector<16xf32>
    %51 = vector.shape_cast %50 : vector<16xf32> to vector<16x1xf32>
    %52 = vector.broadcast %51 : vector<16x1xf32> to vector<16x16xf32>
    %53 = arith.divf %49, %52 : vector<16x16xf32>
    %cst_36 = arith.constant dense<0.000000e+00> : vector<16x8xf32>
    %54 = tpu.matmul %53, %42, %cst_36 {dimension_numbers = #tpu.dot_dimension_numbers<[1], [0], [0], [1], [0, 0, 1, 1], [], []>} : vector<16x16xf32>, vector<16x8xf32>, vector<16x8xf32> -> vector<16x8xf32>
    %c1 = arith.constant 1 : index
    %c0_37 = arith.constant 0 : index
    %c0_38 = arith.constant 0 : index
    %55 = vector.load %arg7[%c1, %c0_37, %c0_38] : memref<4x8x32xf32, #tpu.memory_space<vmem>>, vector<1x8x32xf32>
    %56 = vector.shape_cast %55 : vector<1x8x32xf32> to vector<8x32xf32>
    %cst_39 = arith.constant dense<0.000000e+00> : vector<16x32xf32>
    %57 = tpu.matmul %54, %56, %cst_39 {dimension_numbers = #tpu.dot_dimension_numbers<[1], [0], [0], [1], [0, 0, 1, 1], [], []>} : vector<16x8xf32>, vector<8x32xf32>, vector<16x32xf32> -> vector<16x32xf32>
    %58 = arith.addf %39, %57 : vector<16x32xf32>
    %59 = vector.extract_strided_slice %10 {offsets = [0, 16], sizes = [16, 8], strides = [1, 1]} : vector<16x96xf32> to vector<16x8xf32>
    %60 = vector.extract_strided_slice %10 {offsets = [0, 48], sizes = [16, 8], strides = [1, 1]} : vector<16x96xf32> to vector<16x8xf32>
    %61 = vector.extract_strided_slice %10 {offsets = [0, 80], sizes = [16, 8], strides = [1, 1]} : vector<16x96xf32> to vector<16x8xf32>
    "tpu.trace_start"() <{level = 10 : i32, message = "qd,kd->qk"}> : () -> ()
    %cst_40 = arith.constant dense<0.000000e+00> : vector<16x16xf32>
    %62 = tpu.matmul %59, %60, %cst_40 {dimension_numbers = #tpu.dot_dimension_numbers<[1], [1], [0], [0], [0, 0, 1, 0], [], []>} : vector<16x8xf32>, vector<16x8xf32>, vector<16x16xf32> -> vector<16x16xf32>
    "tpu.trace_stop"() : () -> ()
    %63 = arith.addf %62, %3 : vector<16x16xf32>
    %cst_41 = arith.constant dense<0xFF800000> : vector<16xf32>
    %64 = vector.multi_reduction <maximumf>, %63, %cst_41 [1] : vector<16x16xf32> to vector<16xf32>
    %65 = vector.shape_cast %64 : vector<16xf32> to vector<16x1xf32>
    %66 = vector.broadcast %65 : vector<16x1xf32> to vector<16x16xf32>
    %67 = arith.subf %63, %66 : vector<16x16xf32>
    %68 = math.exp %67 : vector<16x16xf32>
    %cst_42 = arith.constant dense<0.000000e+00> : vector<16xf32>
    %69 = vector.multi_reduction <add>, %68, %cst_42 [1] : vector<16x16xf32> to vector<16xf32>
    %70 = vector.shape_cast %69 : vector<16xf32> to vector<16x1xf32>
    %71 = vector.broadcast %70 : vector<16x1xf32> to vector<16x16xf32>
    %72 = arith.divf %68, %71 : vector<16x16xf32>
    %cst_43 = arith.constant dense<0.000000e+00> : vector<16x8xf32>
    %73 = tpu.matmul %72, %61, %cst_43 {dimension_numbers = #tpu.dot_dimension_numbers<[1], [0], [0], [1], [0, 0, 1, 1], [], []>} : vector<16x16xf32>, vector<16x8xf32>, vector<16x8xf32> -> vector<16x8xf32>
    %c2 = arith.constant 2 : index
    %c0_44 = arith.constant 0 : index
    %c0_45 = arith.constant 0 : index
    %74 = vector.load %arg7[%c2, %c0_44, %c0_45] : memref<4x8x32xf32, #tpu.memory_space<vmem>>, vector<1x8x32xf32>
    %75 = vector.shape_cast %74 : vector<1x8x32xf32> to vector<8x32xf32>
    %cst_46 = arith.constant dense<0.000000e+00> : vector<16x32xf32>
    %76 = tpu.matmul %73, %75, %cst_46 {dimension_numbers = #tpu.dot_dimension_numbers<[1], [0], [0], [1], [0, 0, 1, 1], [], []>} : vector<16x8xf32>, vector<8x32xf32>, vector<16x32xf32> -> vector<16x32xf32>
    %77 = arith.addf %58, %76 : vector<16x32xf32>
    %78 = vector.extract_strided_slice %10 {offsets = [0, 24], sizes = [16, 8], strides = [1, 1]} : vector<16x96xf32> to vector<16x8xf32>
    %79 = vector.extract_strided_slice %10 {offsets = [0, 56], sizes = [16, 8], strides = [1, 1]} : vector<16x96xf32> to vector<16x8xf32>
    %80 = vector.extract_strided_slice %10 {offsets = [0, 88], sizes = [16, 8], strides = [1, 1]} : vector<16x96xf32> to vector<16x8xf32>
    "tpu.trace_start"() <{level = 10 : i32, message = "qd,kd->qk"}> : () -> ()
    %cst_47 = arith.constant dense<0.000000e+00> : vector<16x16xf32>
    %81 = tpu.matmul %78, %79, %cst_47 {dimension_numbers = #tpu.dot_dimension_numbers<[1], [1], [0], [0], [0, 0, 1, 0], [], []>} : vector<16x8xf32>, vector<16x8xf32>, vector<16x16xf32> -> vector<16x16xf32>
    "tpu.trace_stop"() : () -> ()
    %82 = arith.addf %81, %3 : vector<16x16xf32>
    %cst_48 = arith.constant dense<0xFF800000> : vector<16xf32>
    %83 = vector.multi_reduction <maximumf>, %82, %cst_48 [1] : vector<16x16xf32> to vector<16xf32>
    %84 = vector.shape_cast %83 : vector<16xf32> to vector<16x1xf32>
    %85 = vector.broadcast %84 : vector<16x1xf32> to vector<16x16xf32>
    %86 = arith.subf %82, %85 : vector<16x16xf32>
    %87 = math.exp %86 : vector<16x16xf32>
    %cst_49 = arith.constant dense<0.000000e+00> : vector<16xf32>
    %88 = vector.multi_reduction <add>, %87, %cst_49 [1] : vector<16x16xf32> to vector<16xf32>
    %89 = vector.shape_cast %88 : vector<16xf32> to vector<16x1xf32>
    %90 = vector.broadcast %89 : vector<16x1xf32> to vector<16x16xf32>
    %91 = arith.divf %87, %90 : vector<16x16xf32>
    %cst_50 = arith.constant dense<0.000000e+00> : vector<16x8xf32>
    %92 = tpu.matmul %91, %80, %cst_50 {dimension_numbers = #tpu.dot_dimension_numbers<[1], [0], [0], [1], [0, 0, 1, 1], [], []>} : vector<16x16xf32>, vector<16x8xf32>, vector<16x8xf32> -> vector<16x8xf32>
    %c3 = arith.constant 3 : index
    %c0_51 = arith.constant 0 : index
    %c0_52 = arith.constant 0 : index
    %93 = vector.load %arg7[%c3, %c0_51, %c0_52] : memref<4x8x32xf32, #tpu.memory_space<vmem>>, vector<1x8x32xf32>
    %94 = vector.shape_cast %93 : vector<1x8x32xf32> to vector<8x32xf32>
    %cst_53 = arith.constant dense<0.000000e+00> : vector<16x32xf32>
    %95 = tpu.matmul %92, %94, %cst_53 {dimension_numbers = #tpu.dot_dimension_numbers<[1], [0], [0], [1], [0, 0, 1, 1], [], []>} : vector<16x8xf32>, vector<8x32xf32>, vector<16x32xf32> -> vector<16x32xf32>
    %96 = arith.addf %77, %95 : vector<16x32xf32>
    %97 = vector.broadcast %21 : vector<1x32xf32> to vector<16x32xf32>
    %98 = arith.addf %96, %97 : vector<16x32xf32>
    %c0_54 = arith.constant 0 : index
    %c0_55 = arith.constant 0 : index
    %99 = vector.load %arg14[%c0_54, %c0_55] : memref<1x32xf32, #tpu.memory_space<vmem>>, vector<1x32xf32>
    %100 = vector.extract_strided_slice %15 {offsets = [0, 0], sizes = [16, 8], strides = [1, 1]} : vector<16x32xf32> to vector<16x8xf32>
    %101 = vector.extract_strided_slice %20 {offsets = [0, 0], sizes = [32, 8], strides = [1, 1]} : vector<32x64xf32> to vector<32x8xf32>
    %102 = vector.extract_strided_slice %20 {offsets = [0, 32], sizes = [32, 8], strides = [1, 1]} : vector<32x64xf32> to vector<32x8xf32>
    "tpu.trace_start"() <{level = 10 : i32, message = "qd,kd->qk"}> : () -> ()
    %cst_56 = arith.constant dense<0.000000e+00> : vector<16x32xf32>
    %103 = tpu.matmul %100, %101, %cst_56 {dimension_numbers = #tpu.dot_dimension_numbers<[1], [1], [0], [0], [0, 0, 1, 0], [], []>} : vector<16x8xf32>, vector<32x8xf32>, vector<16x32xf32> -> vector<16x32xf32>
    "tpu.trace_stop"() : () -> ()
    %104 = arith.addf %103, %5 : vector<16x32xf32>
    %cst_57 = arith.constant dense<0xFF800000> : vector<16xf32>
    %105 = vector.multi_reduction <maximumf>, %104, %cst_57 [1] : vector<16x32xf32> to vector<16xf32>
    %106 = vector.shape_cast %105 : vector<16xf32> to vector<16x1xf32>
    %107 = vector.broadcast %106 : vector<16x1xf32> to vector<16x32xf32>
    %108 = arith.subf %104, %107 : vector<16x32xf32>
    %109 = math.exp %108 : vector<16x32xf32>
    %cst_58 = arith.constant dense<0.000000e+00> : vector<16xf32>
    %110 = vector.multi_reduction <add>, %109, %cst_58 [1] : vector<16x32xf32> to vector<16xf32>
    %111 = vector.shape_cast %110 : vector<16xf32> to vector<16x1xf32>
    %112 = vector.broadcast %111 : vector<16x1xf32> to vector<16x32xf32>
    %113 = arith.divf %109, %112 : vector<16x32xf32>
    %cst_59 = arith.constant dense<0.000000e+00> : vector<16x8xf32>
    %114 = tpu.matmul %113, %102, %cst_59 {dimension_numbers = #tpu.dot_dimension_numbers<[1], [0], [0], [1], [0, 0, 1, 1], [], []>} : vector<16x32xf32>, vector<32x8xf32>, vector<16x8xf32> -> vector<16x8xf32>
    %c0_60 = arith.constant 0 : index
    %c0_61 = arith.constant 0 : index
    %c0_62 = arith.constant 0 : index
    %115 = vector.load %arg13[%c0_60, %c0_61, %c0_62] : memref<4x8x32xf32, #tpu.memory_space<vmem>>, vector<1x8x32xf32>
    %116 = vector.shape_cast %115 : vector<1x8x32xf32> to vector<8x32xf32>
    %cst_63 = arith.constant dense<0.000000e+00> : vector<16x32xf32>
    %117 = tpu.matmul %114, %116, %cst_63 {dimension_numbers = #tpu.dot_dimension_numbers<[1], [0], [0], [1], [0, 0, 1, 1], [], []>} : vector<16x8xf32>, vector<8x32xf32>, vector<16x32xf32> -> vector<16x32xf32>
    %118 = vector.extract_strided_slice %15 {offsets = [0, 8], sizes = [16, 8], strides = [1, 1]} : vector<16x32xf32> to vector<16x8xf32>
    %119 = vector.extract_strided_slice %20 {offsets = [0, 8], sizes = [32, 8], strides = [1, 1]} : vector<32x64xf32> to vector<32x8xf32>
    %120 = vector.extract_strided_slice %20 {offsets = [0, 40], sizes = [32, 8], strides = [1, 1]} : vector<32x64xf32> to vector<32x8xf32>
    "tpu.trace_start"() <{level = 10 : i32, message = "qd,kd->qk"}> : () -> ()
    %cst_64 = arith.constant dense<0.000000e+00> : vector<16x32xf32>
    %121 = tpu.matmul %118, %119, %cst_64 {dimension_numbers = #tpu.dot_dimension_numbers<[1], [1], [0], [0], [0, 0, 1, 0], [], []>} : vector<16x8xf32>, vector<32x8xf32>, vector<16x32xf32> -> vector<16x32xf32>
    "tpu.trace_stop"() : () -> ()
    %122 = arith.addf %121, %5 : vector<16x32xf32>
    %cst_65 = arith.constant dense<0xFF800000> : vector<16xf32>
    %123 = vector.multi_reduction <maximumf>, %122, %cst_65 [1] : vector<16x32xf32> to vector<16xf32>
    %124 = vector.shape_cast %123 : vector<16xf32> to vector<16x1xf32>
    %125 = vector.broadcast %124 : vector<16x1xf32> to vector<16x32xf32>
    %126 = arith.subf %122, %125 : vector<16x32xf32>
    %127 = math.exp %126 : vector<16x32xf32>
    %cst_66 = arith.constant dense<0.000000e+00> : vector<16xf32>
    %128 = vector.multi_reduction <add>, %127, %cst_66 [1] : vector<16x32xf32> to vector<16xf32>
    %129 = vector.shape_cast %128 : vector<16xf32> to vector<16x1xf32>
    %130 = vector.broadcast %129 : vector<16x1xf32> to vector<16x32xf32>
    %131 = arith.divf %127, %130 : vector<16x32xf32>
    %cst_67 = arith.constant dense<0.000000e+00> : vector<16x8xf32>
    %132 = tpu.matmul %131, %120, %cst_67 {dimension_numbers = #tpu.dot_dimension_numbers<[1], [0], [0], [1], [0, 0, 1, 1], [], []>} : vector<16x32xf32>, vector<32x8xf32>, vector<16x8xf32> -> vector<16x8xf32>
    %c1_68 = arith.constant 1 : index
    %c0_69 = arith.constant 0 : index
    %c0_70 = arith.constant 0 : index
    %133 = vector.load %arg13[%c1_68, %c0_69, %c0_70] : memref<4x8x32xf32, #tpu.memory_space<vmem>>, vector<1x8x32xf32>
    %134 = vector.shape_cast %133 : vector<1x8x32xf32> to vector<8x32xf32>
    %cst_71 = arith.constant dense<0.000000e+00> : vector<16x32xf32>
    %135 = tpu.matmul %132, %134, %cst_71 {dimension_numbers = #tpu.dot_dimension_numbers<[1], [0], [0], [1], [0, 0, 1, 1], [], []>} : vector<16x8xf32>, vector<8x32xf32>, vector<16x32xf32> -> vector<16x32xf32>
    %136 = arith.addf %117, %135 : vector<16x32xf32>
    %137 = vector.extract_strided_slice %15 {offsets = [0, 16], sizes = [16, 8], strides = [1, 1]} : vector<16x32xf32> to vector<16x8xf32>
    %138 = vector.extract_strided_slice %20 {offsets = [0, 16], sizes = [32, 8], strides = [1, 1]} : vector<32x64xf32> to vector<32x8xf32>
    %139 = vector.extract_strided_slice %20 {offsets = [0, 48], sizes = [32, 8], strides = [1, 1]} : vector<32x64xf32> to vector<32x8xf32>
    "tpu.trace_start"() <{level = 10 : i32, message = "qd,kd->qk"}> : () -> ()
    %cst_72 = arith.constant dense<0.000000e+00> : vector<16x32xf32>
    %140 = tpu.matmul %137, %138, %cst_72 {dimension_numbers = #tpu.dot_dimension_numbers<[1], [1], [0], [0], [0, 0, 1, 0], [], []>} : vector<16x8xf32>, vector<32x8xf32>, vector<16x32xf32> -> vector<16x32xf32>
    "tpu.trace_stop"() : () -> ()
    %141 = arith.addf %140, %5 : vector<16x32xf32>
    %cst_73 = arith.constant dense<0xFF800000> : vector<16xf32>
    %142 = vector.multi_reduction <maximumf>, %141, %cst_73 [1] : vector<16x32xf32> to vector<16xf32>
    %143 = vector.shape_cast %142 : vector<16xf32> to vector<16x1xf32>
    %144 = vector.broadcast %143 : vector<16x1xf32> to vector<16x32xf32>
    %145 = arith.subf %141, %144 : vector<16x32xf32>
    %146 = math.exp %145 : vector<16x32xf32>
    %cst_74 = arith.constant dense<0.000000e+00> : vector<16xf32>
    %147 = vector.multi_reduction <add>, %146, %cst_74 [1] : vector<16x32xf32> to vector<16xf32>
    %148 = vector.shape_cast %147 : vector<16xf32> to vector<16x1xf32>
    %149 = vector.broadcast %148 : vector<16x1xf32> to vector<16x32xf32>
    %150 = arith.divf %146, %149 : vector<16x32xf32>
    %cst_75 = arith.constant dense<0.000000e+00> : vector<16x8xf32>
    %151 = tpu.matmul %150, %139, %cst_75 {dimension_numbers = #tpu.dot_dimension_numbers<[1], [0], [0], [1], [0, 0, 1, 1], [], []>} : vector<16x32xf32>, vector<32x8xf32>, vector<16x8xf32> -> vector<16x8xf32>
    %c2_76 = arith.constant 2 : index
    %c0_77 = arith.constant 0 : index
    %c0_78 = arith.constant 0 : index
    %152 = vector.load %arg13[%c2_76, %c0_77, %c0_78] : memref<4x8x32xf32, #tpu.memory_space<vmem>>, vector<1x8x32xf32>
    %153 = vector.shape_cast %152 : vector<1x8x32xf32> to vector<8x32xf32>
    %cst_79 = arith.constant dense<0.000000e+00> : vector<16x32xf32>
    %154 = tpu.matmul %151, %153, %cst_79 {dimension_numbers = #tpu.dot_dimension_numbers<[1], [0], [0], [1], [0, 0, 1, 1], [], []>} : vector<16x8xf32>, vector<8x32xf32>, vector<16x32xf32> -> vector<16x32xf32>
    %155 = arith.addf %136, %154 : vector<16x32xf32>
    %156 = vector.extract_strided_slice %15 {offsets = [0, 24], sizes = [16, 8], strides = [1, 1]} : vector<16x32xf32> to vector<16x8xf32>
    %157 = vector.extract_strided_slice %20 {offsets = [0, 24], sizes = [32, 8], strides = [1, 1]} : vector<32x64xf32> to vector<32x8xf32>
    %158 = vector.extract_strided_slice %20 {offsets = [0, 56], sizes = [32, 8], strides = [1, 1]} : vector<32x64xf32> to vector<32x8xf32>
    "tpu.trace_start"() <{level = 10 : i32, message = "qd,kd->qk"}> : () -> ()
    %cst_80 = arith.constant dense<0.000000e+00> : vector<16x32xf32>
    %159 = tpu.matmul %156, %157, %cst_80 {dimension_numbers = #tpu.dot_dimension_numbers<[1], [1], [0], [0], [0, 0, 1, 0], [], []>} : vector<16x8xf32>, vector<32x8xf32>, vector<16x32xf32> -> vector<16x32xf32>
    "tpu.trace_stop"() : () -> ()
    %160 = arith.addf %159, %5 : vector<16x32xf32>
    %cst_81 = arith.constant dense<0xFF800000> : vector<16xf32>
    %161 = vector.multi_reduction <maximumf>, %160, %cst_81 [1] : vector<16x32xf32> to vector<16xf32>
    %162 = vector.shape_cast %161 : vector<16xf32> to vector<16x1xf32>
    %163 = vector.broadcast %162 : vector<16x1xf32> to vector<16x32xf32>
    %164 = arith.subf %160, %163 : vector<16x32xf32>
    %165 = math.exp %164 : vector<16x32xf32>
    %cst_82 = arith.constant dense<0.000000e+00> : vector<16xf32>
    %166 = vector.multi_reduction <add>, %165, %cst_82 [1] : vector<16x32xf32> to vector<16xf32>
    %167 = vector.shape_cast %166 : vector<16xf32> to vector<16x1xf32>
    %168 = vector.broadcast %167 : vector<16x1xf32> to vector<16x32xf32>
    %169 = arith.divf %165, %168 : vector<16x32xf32>
    %cst_83 = arith.constant dense<0.000000e+00> : vector<16x8xf32>
    %170 = tpu.matmul %169, %158, %cst_83 {dimension_numbers = #tpu.dot_dimension_numbers<[1], [0], [0], [1], [0, 0, 1, 1], [], []>} : vector<16x32xf32>, vector<32x8xf32>, vector<16x8xf32> -> vector<16x8xf32>
    %c3_84 = arith.constant 3 : index
    %c0_85 = arith.constant 0 : index
    %c0_86 = arith.constant 0 : index
    %171 = vector.load %arg13[%c3_84, %c0_85, %c0_86] : memref<4x8x32xf32, #tpu.memory_space<vmem>>, vector<1x8x32xf32>
    %172 = vector.shape_cast %171 : vector<1x8x32xf32> to vector<8x32xf32>
    %cst_87 = arith.constant dense<0.000000e+00> : vector<16x32xf32>
    %173 = tpu.matmul %170, %172, %cst_87 {dimension_numbers = #tpu.dot_dimension_numbers<[1], [0], [0], [1], [0, 0, 1, 1], [], []>} : vector<16x8xf32>, vector<8x32xf32>, vector<16x32xf32> -> vector<16x32xf32>
    %174 = arith.addf %155, %173 : vector<16x32xf32>
    %175 = vector.broadcast %99 : vector<1x32xf32> to vector<16x32xf32>
    %176 = arith.addf %174, %175 : vector<16x32xf32>
    %177 = arith.mulf %0, %98 : vector<16x32xf32>
    %c0_88 = arith.constant 0 : index
    %c0_89 = arith.constant 0 : index
    %178 = vector.load %arg15[%c0_88, %c0_89] : memref<32x32xf32, #tpu.memory_space<vmem>>, vector<32x32xf32>
    %cst_90 = arith.constant dense<0.000000e+00> : vector<16x32xf32>
    %179 = tpu.matmul %177, %178, %cst_90 {dimension_numbers = #tpu.dot_dimension_numbers<[1], [0], [0], [1], [0, 0, 1, 1], [], []>} : vector<16x32xf32>, vector<32x32xf32>, vector<16x32xf32> -> vector<16x32xf32>
    %c0_91 = arith.constant 0 : index
    %c0_92 = arith.constant 0 : index
    %180 = vector.load %arg16[%c0_91, %c0_92] : memref<1x32xf32, #tpu.memory_space<vmem>>, vector<1x32xf32>
    %181 = vector.broadcast %180 : vector<1x32xf32> to vector<16x32xf32>
    %182 = arith.addf %179, %181 : vector<16x32xf32>
    %183 = arith.negf %182 : vector<16x32xf32>
    %184 = math.exp %183 : vector<16x32xf32>
    %cst_93 = arith.constant 1.000000e+00 : f32
    %185 = vector.broadcast %cst_93 : f32 to vector<16x32xf32>
    %186 = arith.addf %185, %184 : vector<16x32xf32>
    %187 = arith.divf %185, %186 : vector<16x32xf32>
    %188 = arith.mulf %0, %176 : vector<16x32xf32>
    %c0_94 = arith.constant 0 : index
    %c0_95 = arith.constant 0 : index
    %189 = vector.load %arg17[%c0_94, %c0_95] : memref<32x32xf32, #tpu.memory_space<vmem>>, vector<32x32xf32>
    %cst_96 = arith.constant dense<0.000000e+00> : vector<16x32xf32>
    %190 = tpu.matmul %188, %189, %cst_96 {dimension_numbers = #tpu.dot_dimension_numbers<[1], [0], [0], [1], [0, 0, 1, 1], [], []>} : vector<16x32xf32>, vector<32x32xf32>, vector<16x32xf32> -> vector<16x32xf32>
    %c0_97 = arith.constant 0 : index
    %c0_98 = arith.constant 0 : index
    %191 = vector.load %arg18[%c0_97, %c0_98] : memref<1x32xf32, #tpu.memory_space<vmem>>, vector<1x32xf32>
    %192 = vector.broadcast %191 : vector<1x32xf32> to vector<16x32xf32>
    %193 = arith.addf %190, %192 : vector<16x32xf32>
    %194 = arith.negf %193 : vector<16x32xf32>
    %195 = math.exp %194 : vector<16x32xf32>
    %cst_99 = arith.constant 1.000000e+00 : f32
    %196 = vector.broadcast %cst_99 : f32 to vector<16x32xf32>
    %197 = arith.addf %196, %195 : vector<16x32xf32>
    %198 = arith.divf %196, %197 : vector<16x32xf32>
    %199 = arith.subf %187, %198 : vector<16x32xf32>
    %200 = arith.negf %199 : vector<16x32xf32>
    %201 = math.exp %200 : vector<16x32xf32>
    %cst_100 = arith.constant 1.000000e+00 : f32
    %202 = vector.broadcast %cst_100 : f32 to vector<16x32xf32>
    %203 = arith.addf %202, %201 : vector<16x32xf32>
    %204 = arith.divf %202, %203 : vector<16x32xf32>
    %cst_101 = arith.constant 1.000000e+00 : f32
    %205 = vector.broadcast %cst_101 : f32 to vector<16x32xf32>
    %206 = arith.subf %205, %204 : vector<16x32xf32>
    %207 = arith.mulf %204, %98 : vector<16x32xf32>
    %c0_102 = arith.constant 0 : index
    %c0_103 = arith.constant 0 : index
    %208 = vector.load %arg19[%c0_102, %c0_103] : memref<32x256xf32, #tpu.memory_space<vmem>>, vector<32x256xf32>
    %cst_104 = arith.constant dense<0.000000e+00> : vector<16x256xf32>
    %209 = tpu.matmul %207, %208, %cst_104 {dimension_numbers = #tpu.dot_dimension_numbers<[1], [0], [0], [1], [0, 0, 1, 1], [], []>} : vector<16x32xf32>, vector<32x256xf32>, vector<16x256xf32> -> vector<16x256xf32>
    %c0_105 = arith.constant 0 : index
    %c0_106 = arith.constant 0 : index
    %210 = vector.load %arg20[%c0_105, %c0_106] : memref<1x256xf32, #tpu.memory_space<vmem>>, vector<1x256xf32>
    %211 = vector.broadcast %210 : vector<1x256xf32> to vector<16x256xf32>
    %212 = arith.addf %209, %211 : vector<16x256xf32>
    %213 = arith.mulf %206, %176 : vector<16x32xf32>
    %c0_107 = arith.constant 0 : index
    %c0_108 = arith.constant 0 : index
    %214 = vector.load %arg21[%c0_107, %c0_108] : memref<32x256xf32, #tpu.memory_space<vmem>>, vector<32x256xf32>
    %cst_109 = arith.constant dense<0.000000e+00> : vector<16x256xf32>
    %215 = tpu.matmul %213, %214, %cst_109 {dimension_numbers = #tpu.dot_dimension_numbers<[1], [0], [0], [1], [0, 0, 1, 1], [], []>} : vector<16x32xf32>, vector<32x256xf32>, vector<16x256xf32> -> vector<16x256xf32>
    %c0_110 = arith.constant 0 : index
    %c0_111 = arith.constant 0 : index
    %216 = vector.load %arg22[%c0_110, %c0_111] : memref<1x256xf32, #tpu.memory_space<vmem>>, vector<1x256xf32>
    %217 = vector.broadcast %216 : vector<1x256xf32> to vector<16x256xf32>
    %218 = arith.addf %215, %217 : vector<16x256xf32>
    %219 = arith.mulf %212, %218 : vector<16x256xf32>
    %c0_112 = arith.constant 0 : index
    %c0_113 = arith.constant 0 : index
    %220 = vector.load %arg23[%c0_112, %c0_113] : memref<256x32xf32, #tpu.memory_space<vmem>>, vector<256x32xf32>
    %cst_114 = arith.constant dense<0.000000e+00> : vector<16x32xf32>
    %221 = tpu.matmul %219, %220, %cst_114 {dimension_numbers = #tpu.dot_dimension_numbers<[1], [0], [0], [1], [0, 0, 1, 1], [], []>} : vector<16x256xf32>, vector<256x32xf32>, vector<16x32xf32> -> vector<16x32xf32>
    %c0_115 = arith.constant 0 : index
    %c0_116 = arith.constant 0 : index
    %222 = vector.load %arg24[%c0_115, %c0_116] : memref<32x128xf32, #tpu.memory_space<vmem>>, vector<32x128xf32>
    %cst_117 = arith.constant dense<0.000000e+00> : vector<16x128xf32>
    %223 = tpu.matmul %221, %222, %cst_117 {dimension_numbers = #tpu.dot_dimension_numbers<[1], [0], [0], [1], [0, 0, 1, 1], [], []>} : vector<16x32xf32>, vector<32x128xf32>, vector<16x128xf32> -> vector<16x128xf32>
    %c0_118 = arith.constant 0 : index
    %c0_119 = arith.constant 0 : index
    %224 = vector.load %arg25[%c0_118, %c0_119] : memref<1x128xf32, #tpu.memory_space<vmem>>, vector<1x128xf32>
    %225 = vector.broadcast %224 : vector<1x128xf32> to vector<16x128xf32>
    %226 = arith.addf %223, %225 : vector<16x128xf32>
    %cst_120 = arith.constant 0.000000e+00 : f32
    %227 = vector.broadcast %cst_120 : f32 to vector<16x128xf32>
    %228 = arith.maximumf %226, %227 : vector<16x128xf32>
    %c0_121 = arith.constant 0 : index
    %c0_122 = arith.constant 0 : index
    %229 = vector.load %arg26[%c0_121, %c0_122] : memref<128x32xf32, #tpu.memory_space<vmem>>, vector<128x32xf32>
    %cst_123 = arith.constant dense<0.000000e+00> : vector<16x32xf32>
    %230 = tpu.matmul %228, %229, %cst_123 {dimension_numbers = #tpu.dot_dimension_numbers<[1], [0], [0], [1], [0, 0, 1, 1], [], []>} : vector<16x128xf32>, vector<128x32xf32>, vector<16x32xf32> -> vector<16x32xf32>
    %c0_124 = arith.constant 0 : index
    %c0_125 = arith.constant 0 : index
    %231 = vector.load %arg27[%c0_124, %c0_125] : memref<1x32xf32, #tpu.memory_space<vmem>>, vector<1x32xf32>
    %232 = vector.broadcast %231 : vector<1x32xf32> to vector<16x32xf32>
    %233 = arith.addf %230, %232 : vector<16x32xf32>
    %234 = arith.addf %221, %233 : vector<16x32xf32>
    %cst_126 = arith.constant dense<0.000000e+00> : vector<16xf32>
    %235 = vector.multi_reduction <add>, %234, %cst_126 [1] : vector<16x32xf32> to vector<16xf32>
    %236 = vector.shape_cast %235 : vector<16xf32> to vector<16x1xf32>
    %cst_127 = arith.constant 3.200000e+01 : f32
    %237 = vector.broadcast %cst_127 : f32 to vector<16x1xf32>
    %238 = arith.divf %236, %237 : vector<16x1xf32>
    %239 = vector.broadcast %238 : vector<16x1xf32> to vector<16x32xf32>
    %240 = arith.subf %234, %239 : vector<16x32xf32>
    %241 = arith.mulf %240, %240 : vector<16x32xf32>
    %cst_128 = arith.constant dense<0.000000e+00> : vector<16xf32>
    %242 = vector.multi_reduction <add>, %241, %cst_128 [1] : vector<16x32xf32> to vector<16xf32>
    %243 = vector.shape_cast %242 : vector<16xf32> to vector<16x1xf32>
    %cst_129 = arith.constant 0.0322580636 : f32
    %244 = vector.broadcast %cst_129 : f32 to vector<16x1xf32>
    %245 = arith.mulf %243, %244 : vector<16x1xf32>
    %246 = math.sqrt %245 : vector<16x1xf32>
    %c0_130 = arith.constant 0 : index
    %c0_131 = arith.constant 0 : index
    %247 = vector.load %arg28[%c0_130, %c0_131] : memref<1x32xf32, #tpu.memory_space<vmem>>, vector<1x32xf32>
    %248 = vector.broadcast %247 : vector<1x32xf32> to vector<16x32xf32>
    %249 = arith.mulf %248, %240 : vector<16x32xf32>
    %cst_132 = arith.constant 9.99999997E-7 : f32
    %250 = vector.broadcast %cst_132 : f32 to vector<16x1xf32>
    %251 = arith.addf %246, %250 : vector<16x1xf32>
    %252 = vector.broadcast %251 : vector<16x1xf32> to vector<16x32xf32>
    %253 = arith.divf %249, %252 : vector<16x32xf32>
    %c0_133 = arith.constant 0 : index
    %c0_134 = arith.constant 0 : index
    %254 = vector.load %arg29[%c0_133, %c0_134] : memref<1x32xf32, #tpu.memory_space<vmem>>, vector<1x32xf32>
    %255 = vector.broadcast %254 : vector<1x32xf32> to vector<16x32xf32>
    %256 = arith.addf %253, %255 : vector<16x32xf32>
    %c0_135 = arith.constant 0 : index
    %c0_136 = arith.constant 0 : index
    %257 = vector.load %arg30[%c0_135, %c0_136] : memref<16x32xf32, #tpu.memory_space<vmem>>, vector<16x32xf32>
    tpu.vector_store %arg30[%c0_135, %c0_136], %256 {strides = array<i32>} : memref<16x32xf32, #tpu.memory_space<vmem>>, vector<16x32xf32>,
    return
  }
  func.func @transform_0(%arg0: i32) -> (i32, i32) {
    %c0_i32 = arith.constant 0 : i32
    %c0_i32_0 = arith.constant 0 : i32
    return %arg0, %c0_i32 : i32, i32
  }
  func.func @transform_1(%arg0: i32) -> (i32, i32) {
    %c0_i32 = arith.constant 0 : i32
    %c0_i32_0 = arith.constant 0 : i32
    return %arg0, %c0_i32 : i32, i32
  }
  func.func @transform_2(%arg0: i32) -> (i32, i32, i32) {
    %c0_i32 = arith.constant 0 : i32
    %c0_i32_0 = arith.constant 0 : i32
    %c0_i32_1 = arith.constant 0 : i32
    return %arg0, %c0_i32, %c0_i32_0 : i32, i32, i32
  }
  func.func @transform_3(%arg0: i32) -> (i32, i32, i32) {
    %c0_i32 = arith.constant 0 : i32
    %c0_i32_0 = arith.constant 0 : i32
    %c0_i32_1 = arith.constant 0 : i32
    return %arg0, %c0_i32, %c0_i32_0 : i32, i32, i32
  }
  func.func @transform_4(%arg0: i32) -> (i32, i32) {
    %c0_i32 = arith.constant 0 : i32
    %c0_i32_0 = arith.constant 0 : i32
    %c0_i32_1 = arith.constant 0 : i32
    return %c0_i32, %c0_i32_0 : i32, i32
  }
  func.func @transform_5(%arg0: i32) -> (i32, i32) {
    %c0_i32 = arith.constant 0 : i32
    %c0_i32_0 = arith.constant 0 : i32
    %c0_i32_1 = arith.constant 0 : i32
    return %c0_i32, %c0_i32_0 : i32, i32
  }
  func.func @transform_6(%arg0: i32) -> (i32, i32, i32) {
    %c0_i32 = arith.constant 0 : i32
    %c0_i32_0 = arith.constant 0 : i32
    %c0_i32_1 = arith.constant 0 : i32
    %c0_i32_2 = arith.constant 0 : i32
    return %c0_i32, %c0_i32_0, %c0_i32_1 : i32, i32, i32
  }
  func.func @transform_7(%arg0: i32) -> (i32, i32) {
    %c0_i32 = arith.constant 0 : i32
    %c0_i32_0 = arith.constant 0 : i32
    %c0_i32_1 = arith.constant 0 : i32
    return %c0_i32, %c0_i32_0 : i32, i32
  }
  func.func @transform_8(%arg0: i32) -> (i32, i32) {
    %c0_i32 = arith.constant 0 : i32
    %c0_i32_0 = arith.constant 0 : i32
    %c0_i32_1 = arith.constant 0 : i32
    return %c0_i32, %c0_i32_0 : i32, i32
  }
  func.func @transform_9(%arg0: i32) -> (i32, i32) {
    %c0_i32 = arith.constant 0 : i32
    %c0_i32_0 = arith.constant 0 : i32
    %c0_i32_1 = arith.constant 0 : i32
    return %c0_i32, %c0_i32_0 : i32, i32
  }
  func.func @transform_10(%arg0: i32) -> (i32, i32) {
    %c0_i32 = arith.constant 0 : i32
    %c0_i32_0 = arith.constant 0 : i32
    %c0_i32_1 = arith.constant 0 : i32
    return %c0_i32, %c0_i32_0 : i32, i32
  }
  func.func @transform_11(%arg0: i32) -> (i32, i32) {
    %c0_i32 = arith.constant 0 : i32
    %c0_i32_0 = arith.constant 0 : i32
    %c0_i32_1 = arith.constant 0 : i32
    return %c0_i32, %c0_i32_0 : i32, i32
  }
  func.func @transform_12(%arg0: i32) -> (i32, i32, i32) {
    %c0_i32 = arith.constant 0 : i32
    %c0_i32_0 = arith.constant 0 : i32
    %c0_i32_1 = arith.constant 0 : i32
    %c0_i32_2 = arith.constant 0 : i32
    return %c0_i32, %c0_i32_0, %c0_i32_1 : i32, i32, i32
  }
  func.func @transform_13(%arg0: i32) -> (i32, i32) {
    %c0_i32 = arith.constant 0 : i32
    %c0_i32_0 = arith.constant 0 : i32
    %c0_i32_1 = arith.constant 0 : i32
    return %c0_i32, %c0_i32_0 : i32, i32
  }
  func.func @transform_14(%arg0: i32) -> (i32, i32) {
    %c0_i32 = arith.constant 0 : i32
    %c0_i32_0 = arith.constant 0 : i32
    %c0_i32_1 = arith.constant 0 : i32
    return %c0_i32, %c0_i32_0 : i32, i32
  }
  func.func @transform_15(%arg0: i32) -> (i32, i32) {
    %c0_i32 = arith.constant 0 : i32
    %c0_i32_0 = arith.constant 0 : i32
    %c0_i32_1 = arith.constant 0 : i32
    return %c0_i32, %c0_i32_0 : i32, i32
  }
  func.func @transform_16(%arg0: i32) -> (i32, i32) {
    %c0_i32 = arith.constant 0 : i32
    %c0_i32_0 = arith.constant 0 : i32
    %c0_i32_1 = arith.constant 0 : i32
    return %c0_i32, %c0_i32_0 : i32, i32
  }
  func.func @transform_17(%arg0: i32) -> (i32, i32) {
    %c0_i32 = arith.constant 0 : i32
    %c0_i32_0 = arith.constant 0 : i32
    %c0_i32_1 = arith.constant 0 : i32
    return %c0_i32, %c0_i32_0 : i32, i32
  }
  func.func @transform_18(%arg0: i32) -> (i32, i32) {
    %c0_i32 = arith.constant 0 : i32
    %c0_i32_0 = arith.constant 0 : i32
    %c0_i32_1 = arith.constant 0 : i32
    return %c0_i32, %c0_i32_0 : i32, i32
  }
  func.func @transform_19(%arg0: i32) -> (i32, i32) {
    %c0_i32 = arith.constant 0 : i32
    %c0_i32_0 = arith.constant 0 : i32
    %c0_i32_1 = arith.constant 0 : i32
    return %c0_i32, %c0_i32_0 : i32, i32
  }
  func.func @transform_20(%arg0: i32) -> (i32, i32) {
    %c0_i32 = arith.constant 0 : i32
    %c0_i32_0 = arith.constant 0 : i32
    %c0_i32_1 = arith.constant 0 : i32
    return %c0_i32, %c0_i32_0 : i32, i32
  }
  func.func @transform_21(%arg0: i32) -> (i32, i32) {
    %c0_i32 = arith.constant 0 : i32
    %c0_i32_0 = arith.constant 0 : i32
    %c0_i32_1 = arith.constant 0 : i32
    return %c0_i32, %c0_i32_0 : i32, i32
  }
  func.func @transform_22(%arg0: i32) -> (i32, i32) {
    %c0_i32 = arith.constant 0 : i32
    %c0_i32_0 = arith.constant 0 : i32
    %c0_i32_1 = arith.constant 0 : i32
    return %c0_i32, %c0_i32_0 : i32, i32
  }
  func.func @transform_23(%arg0: i32) -> (i32, i32) {
    %c0_i32 = arith.constant 0 : i32
    %c0_i32_0 = arith.constant 0 : i32
    %c0_i32_1 = arith.constant 0 : i32
    return %c0_i32, %c0_i32_0 : i32, i32
  }
  func.func @transform_24(%arg0: i32) -> (i32, i32) {
    %c0_i32 = arith.constant 0 : i32
    %c0_i32_0 = arith.constant 0 : i32
    %c0_i32_1 = arith.constant 0 : i32
    return %c0_i32, %c0_i32_0 : i32, i32
  }
  func.func @transform_25(%arg0: i32) -> (i32, i32) {
    %c0_i32 = arith.constant 0 : i32
    %c0_i32_0 = arith.constant 0 : i32
    %c0_i32_1 = arith.constant 0 : i32
    return %c0_i32, %c0_i32_0 : i32, i32
  }
  func.func @transform_26(%arg0: i32) -> (i32, i32) {
    %c0_i32 = arith.constant 0 : i32
    %c0_i32_0 = arith.constant 0 : i32
    %c0_i32_1 = arith.constant 0 : i32
    return %c0_i32, %c0_i32_0 : i32, i32
  }
  func.func @transform_27(%arg0: i32) -> (i32, i32) {
    %c0_i32 = arith.constant 0 : i32
    %c0_i32_0 = arith.constant 0 : i32
    %c0_i32_1 = arith.constant 0 : i32
    return %c0_i32, %c0_i32_0 : i32, i32
  }
  func.func @transform_28(%arg0: i32) -> (i32, i32) {
    %c0_i32 = arith.constant 0 : i32
    %c0_i32_0 = arith.constant 0 : i32
    %c0_i32_1 = arith.constant 0 : i32
    return %c0_i32, %c0_i32_0 : i32, i32
  }
  func.func @transform_29(%arg0: i32) -> (i32, i32) {
    %c0_i32 = arith.constant 0 : i32
    %c0_i32_0 = arith.constant 0 : i32
    return %arg0, %c0_i32 : i32, i32
  }
}

</mosaic_0001>

<llo_original>
// kernel: fui_forward.1
$region0: #{fui_forward.1}
  #allocation0 [shape = 'u32[]', space=smem, size = 0x4, offset = 0x4, fixed_abs, tag = 'smem constant byte address 0x4 - core index']
  #allocation1 [shape = 'u32[144,128]{1,0:T(1,128)}', space=vmem, size = 0x12000, scoped, tag = 'internal scratch']
  %s0 = inlined_call_operand.smem [shape: u32[30], index: -1, kind: input, shape index: {}]
  %s1 = sld [smem:[%s0]]
  %s2 = scalar_lea.smem %s0, 1
  %s3 = sld [smem:[%s2]]
  %s4 = scalar_lea.smem %s0, 2
  %s5 = sld [smem:[%s4]]
  %s6 = scalar_lea.smem %s0, 3
  %s7 = sld [smem:[%s6]]
  %s8 = scalar_lea.smem %s0, 4
  %s9 = sld [smem:[%s8]]
  %s10 = scalar_lea.smem %s0, 5
  %s11 = sld [smem:[%s10]]
  %s12 = scalar_lea.smem %s0, 6
  %s13 = sld [smem:[%s12]]
  %s14 = scalar_lea.smem %s0, 7
  %s15 = sld [smem:[%s14]]
  %s16 = scalar_lea.smem %s0, 8
  %s17 = sld [smem:[%s16]]
  %s18 = scalar_lea.smem %s0, 9
  %s19 = sld [smem:[%s18]]
  %s20 = scalar_lea.smem %s0, 10
  %s21 = sld [smem:[%s20]]
  %s22 = scalar_lea.smem %s0, 11
  %s23 = sld [smem:[%s22]]
  %s24 = scalar_lea.smem %s0, 12
  %s25 = sld [smem:[%s24]]
  %s26 = scalar_lea.smem %s0, 13
  %s27 = sld [smem:[%s26]]
  %s28 = scalar_lea.smem %s0, 14
  %s29 = sld [smem:[%s28]]
  %s30 = scalar_lea.smem %s0, 15
  %s31 = sld [smem:[%s30]]
  %s32 = scalar_lea.smem %s0, 16
  %s33 = sld [smem:[%s32]]
  %s34 = scalar_lea.smem %s0, 17
  %s35 = sld [smem:[%s34]]
  %s36 = scalar_lea.smem %s0, 18
  %s37 = sld [smem:[%s36]]
  %s38 = scalar_lea.smem %s0, 19
  %s39 = sld [smem:[%s38]]
  %s40 = scalar_lea.smem %s0, 20
  %s41 = sld [smem:[%s40]]
  %s42 = scalar_lea.smem %s0, 21
  %s43 = sld [smem:[%s42]]
  %s44 = scalar_lea.smem %s0, 22
  %s45 = sld [smem:[%s44]]
  %s46 = scalar_lea.smem %s0, 23
  %s47 = sld [smem:[%s46]]
  %s48 = scalar_lea.smem %s0, 24
  %s49 = sld [smem:[%s48]]
  %s50 = scalar_lea.smem %s0, 25
  %s51 = sld [smem:[%s50]]
  %s52 = scalar_lea.smem %s0, 26
  %s53 = sld [smem:[%s52]]
  %s54 = scalar_lea.smem %s0, 27
  %s55 = sld [smem:[%s54]]
  %s56 = scalar_lea.smem %s0, 28
  %s57 = sld [smem:[%s56]]
  %s58 = scalar_lea.smem %s0, 29
  %s59 = sld [smem:[%s58]]
  %s60 = sld [smem:[#allocation0]]
  $region126: #{fui_forward.1} parent=0
    _
  %s62 = ssub.s32 1, %s60
  %s63 = scalar_select 0, %s62, %s60
  $region1: #{fui_forward.1} parent=0
    #allocation2 [shape = 'u8[8192]{0}', space=vmem, size = 0x2000, scoped, tag = 'output window, operand 0, single buffered']
    #allocation3 [shape = 's32[1]{0}', space=sflag, size = 0x4, scoped, tag = 'scoped memory for fui_forward.1']
    %64 = vsyncpa [#allocation3], 0
    // Predicated region
    $region2: #{fui_forward.1} parent=1 // pred_check
      _
    $region3: #{fui_forward.1} parent=1 // pred_check_branch
      %66 = sbr.rel (0) target = $region5
    $region4: #{fui_forward.1} parent=1 // pred_region
      _
    $region5: #{fui_forward.1} parent=1 // pred_fallthru
      _
    // Predicated region
    $region6: #{fui_forward.1} parent=1 // pred_check
      _
    $region7: #{fui_forward.1} parent=1 // pred_check_branch
      %68 = sbr.rel (0) target = $region9
    $region8: #{fui_forward.1} parent=1 // pred_region
      _
    $region9: #{fui_forward.1} parent=1 // pred_fallthru
      _
    // Predicated region
    $region10: #{fui_forward.1} parent=1 // pred_check
      _
    $region11: #{fui_forward.1} parent=1 // pred_check_branch
      %70 = sbr.rel (0) target = $region13
    $region12: #{fui_forward.1} parent=1 // pred_region
      _
    $region13: #{fui_forward.1} parent=1 // pred_fallthru
      _
    // Predicated region
    $region14: #{fui_forward.1} parent=1 // pred_check
      _
    $region15: #{fui_forward.1} parent=1 // pred_check_branch
      %72 = sbr.rel (0) target = $region17
    $region16: #{fui_forward.1} parent=1 // pred_region
      _
    $region17: #{fui_forward.1} parent=1 // pred_fallthru
      _
    // Predicated region
    $region18: #{fui_forward.1} parent=1 // pred_check
      _
    $region19: #{fui_forward.1} parent=1 // pred_check_branch
      %74 = sbr.rel (0) target = $region21
    $region20: #{fui_forward.1} parent=1 // pred_region
      _
    $region21: #{fui_forward.1} parent=1 // pred_fallthru
      _
    // Predicated region
    $region22: #{fui_forward.1} parent=1 // pred_check
      _
    $region23: #{fui_forward.1} parent=1 // pred_check_branch
      %76 = sbr.rel (0) target = $region25
    $region24: #{fui_forward.1} parent=1 // pred_region
      _
    $region25: #{fui_forward.1} parent=1 // pred_fallthru
      _
    // Predicated region
    $region26: #{fui_forward.1} parent=1 // pred_check
      _
    $region27: #{fui_forward.1} parent=1 // pred_check_branch
      %78 = sbr.rel (0) target = $region29
    $region28: #{fui_forward.1} parent=1 // pred_region
      _
    $region29: #{fui_forward.1} parent=1 // pred_fallthru
      _
    // Predicated region
    $region30: #{fui_forward.1} parent=1 // pred_check
      _
    $region31: #{fui_forward.1} parent=1 // pred_check_branch
      %80 = sbr.rel (0) target = $region33
    $region32: #{fui_forward.1} parent=1 // pred_region
      _
    $region33: #{fui_forward.1} parent=1 // pred_fallthru
      _
    // Predicated region
    $region34: #{fui_forward.1} parent=1 // pred_check
      _
    $region35: #{fui_forward.1} parent=1 // pred_check_branch
      %82 = sbr.rel (0) target = $region37
    $region36: #{fui_forward.1} parent=1 // pred_region
      _
    $region37: #{fui_forward.1} parent=1 // pred_fallthru
      _
    // Predicated region
    $region38: #{fui_forward.1} parent=1 // pred_check
      _
    $region39: #{fui_forward.1} parent=1 // pred_check_branch
      %84 = sbr.rel (0) target = $region41
    $region40: #{fui_forward.1} parent=1 // pred_region
      _
    $region41: #{fui_forward.1} parent=1 // pred_fallthru
      _
    // Predicated region
    $region42: #{fui_forward.1} parent=1 // pred_check
      _
    $region43: #{fui_forward.1} parent=1 // pred_check_branch
      %86 = sbr.rel (0) target = $region45
    $region44: #{fui_forward.1} parent=1 // pred_region
      _
    $region45: #{fui_forward.1} parent=1 // pred_fallthru
      _
    // Predicated region
    $region46: #{fui_forward.1} parent=1 // pred_check
      _
    $region47: #{fui_forward.1} parent=1 // pred_check_branch
      %88 = sbr.rel (0) target = $region49
    $region48: #{fui_forward.1} parent=1 // pred_region
      _
    $region49: #{fui_forward.1} parent=1 // pred_fallthru
      _
    // Predicated region
    $region50: #{fui_forward.1} parent=1 // pred_check
      _
    $region51: #{fui_forward.1} parent=1 // pred_check_branch
      %90 = sbr.rel (0) target = $region53
    $region52: #{fui_forward.1} parent=1 // pred_region
      _
    $region53: #{fui_forward.1} parent=1 // pred_fallthru
      _
    // Predicated region
    $region54: #{fui_forward.1} parent=1 // pred_check
      _
    $region55: #{fui_forward.1} parent=1 // pred_check_branch
      %92 = sbr.rel (0) target = $region57
    $region56: #{fui_forward.1} parent=1 // pred_region
      _
    $region57: #{fui_forward.1} parent=1 // pred_fallthru
      _
    // Predicated region
    $region58: #{fui_forward.1} parent=1 // pred_check
      _
    $region59: #{fui_forward.1} parent=1 // pred_check_branch
      %94 = sbr.rel (0) target = $region61
    $region60: #{fui_forward.1} parent=1 // pred_region
      _
    $region61: #{fui_forward.1} parent=1 // pred_fallthru
      _
    // Predicated region
    $region62: #{fui_forward.1} parent=1 // pred_check
      _
    $region63: #{fui_forward.1} parent=1 // pred_check_branch
      %96 = sbr.rel (0) target = $region65
    $region64: #{fui_forward.1} parent=1 // pred_region
      _
    $region65: #{fui_forward.1} parent=1 // pred_fallthru
      _
    // Predicated region
    $region66: #{fui_forward.1} parent=1 // pred_check
      _
    $region67: #{fui_forward.1} parent=1 // pred_check_branch
      %98 = sbr.rel (0) target = $region69
    $region68: #{fui_forward.1} parent=1 // pred_region
      _
    $region69: #{fui_forward.1} parent=1 // pred_fallthru
      _
    // Predicated region
    $region70: #{fui_forward.1} parent=1 // pred_check
      _
    $region71: #{fui_forward.1} parent=1 // pred_check_branch
      %100 = sbr.rel (0) target = $region73
    $region72: #{fui_forward.1} parent=1 // pred_region
      _
    $region73: #{fui_forward.1} parent=1 // pred_fallthru
      _
    // Predicated region
    $region74: #{fui_forward.1} parent=1 // pred_check
      _
    $region75: #{fui_forward.1} parent=1 // pred_check_branch
      %102 = sbr.rel (0) target = $region77
    $region76: #{fui_forward.1} parent=1 // pred_region
      _
    $region77: #{fui_forward.1} parent=1 // pred_fallthru
      _
    // Predicated region
    $region78: #{fui_forward.1} parent=1 // pred_check
      _
    $region79: #{fui_forward.1} parent=1 // pred_check_branch
      %104 = sbr.rel (0) target = $region81
    $region80: #{fui_forward.1} parent=1 // pred_region
      _
    $region81: #{fui_forward.1} parent=1 // pred_fallthru
      _
    // Predicated region
    $region82: #{fui_forward.1} parent=1 // pred_check
      _
    $region83: #{fui_forward.1} parent=1 // pred_check_branch
      %106 = sbr.rel (0) target = $region85
    $region84: #{fui_forward.1} parent=1 // pred_region
      _
    $region85: #{fui_forward.1} parent=1 // pred_fallthru
      _
    // Predicated region
    $region86: #{fui_forward.1} parent=1 // pred_check
      _
    $region87: #{fui_forward.1} parent=1 // pred_check_branch
      %108 = sbr.rel (0) target = $region89
    $region88: #{fui_forward.1} parent=1 // pred_region
      _
    $region89: #{fui_forward.1} parent=1 // pred_fallthru
      _
    // Predicated region
    $region90: #{fui_forward.1} parent=1 // pred_check
      _
    $region91: #{fui_forward.1} parent=1 // pred_check_branch
      %110 = sbr.rel (0) target = $region93
    $region92: #{fui_forward.1} parent=1 // pred_region
      _
    $region93: #{fui_forward.1} parent=1 // pred_fallthru
      _
    // Predicated region
    $region94: #{fui_forward.1} parent=1 // pred_check
      _
    $region95: #{fui_forward.1} parent=1 // pred_check_branch
      %112 = sbr.rel (0) target = $region97
    $region96: #{fui_forward.1} parent=1 // pred_region
      _
    $region97: #{fui_forward.1} parent=1 // pred_fallthru
      _
    // Predicated region
    $region98: #{fui_forward.1} parent=1 // pred_check
      _
    $region99: #{fui_forward.1} parent=1 // pred_check_branch
      %114 = sbr.rel (0) target = $region101
    $region100: #{fui_forward.1} parent=1 // pred_region
      _
    $region101: #{fui_forward.1} parent=1 // pred_fallthru
      _
    // Predicated region
    $region102: #{fui_forward.1} parent=1 // pred_check
      _
    $region103: #{fui_forward.1} parent=1 // pred_check_branch
      %116 = sbr.rel (0) target = $region105
    $region104: #{fui_forward.1} parent=1 // pred_region
      _
    $region105: #{fui_forward.1} parent=1 // pred_fallthru
      _
    // Predicated region
    $region106: #{fui_forward.1} parent=1 // pred_check
      _
    $region107: #{fui_forward.1} parent=1 // pred_check_branch
      %118 = sbr.rel (0) target = $region109
    $region108: #{fui_forward.1} parent=1 // pred_region
      _
    $region109: #{fui_forward.1} parent=1 // pred_fallthru
      _
    // Predicated region
    $region110: #{fui_forward.1} parent=1 // pred_check
      _
    $region111: #{fui_forward.1} parent=1 // pred_check_branch
      %120 = sbr.rel (0) target = $region113
    $region112: #{fui_forward.1} parent=1 // pred_region
      _
    $region113: #{fui_forward.1} parent=1 // pred_fallthru
      _
    // Predicated region
    $region114: #{fui_forward.1} parent=1 // pred_check
      _
    $region115: #{fui_forward.1} parent=1 // pred_check_branch
      %122 = sbr.rel (0) target = $region117
    $region116: #{fui_forward.1} parent=1 // pred_region
      _
    $region117: #{fui_forward.1} parent=1 // pred_fallthru
      _
    %v123 = vld [vmem:[%s1] sm:$0xff]
    %v124 = vld [vmem:[%s1 + $0x8] sm:$0xff]
    %v125 = vld [vmem:[%s3] sm:$0xff]
    %v126 = vld [vmem:[%s3 + $0x8] sm:$0xff]
    %v127 = vld [vmem:[%s3 + $0x10] sm:$0xff]
    %v128 = vld [vmem:[%s3 + $0x18] sm:$0xff]
    %v129 = vld [vmem:[%s5] sm:$0xff]
    %v130 = vld [vmem:[%s5 + $0x8] sm:$0xff]
    %v131 = vld [vmem:[%s7] sm:$0xff]
    %v132 = vld [vmem:[%s7 + $0x8] sm:$0xff]
    %v133 = vld [vmem:[%s9] sm:$0xff]
    %v134 = vld [vmem:[%s9 + $0x8] sm:$0xff]
    %v135 = vld [vmem:[%s9 + $0x10] sm:$0xff]
    %v136 = vld [vmem:[%s9 + $0x18] sm:$0xff]
    %v137 = vld [vmem:[%s11] sm:$0x1]
    %v139 = vlaneseq
    %v140 = vshrl.u32 %v139, 7
    %v141 = vsub.s32 0, %v140
    %v142 = vrot.slane %v137, %v141
    %vm144 = vcmask 261120
    %v146 = vsel %vm144, %v123, 0
    %v149 = vsel %vm144, %v124, 0
    %151 = vmatprep.subr.mxu0 0.0
    %152 = vmatpush1.msra.mxu0 %v133
    %153 = vmatprep.subr.mxu0 0.0
    %154 = vmatpush1.msra.mxu0 %v134
    %155 = vmatprep.subr.mxu0 0.0
    %156 = vmatpush1.msra.mxu0 %v135
    %157 = vmatprep.subr.mxu0 0.0
    %158 = vmatpush1.msra.mxu0 %v136
    %159 = vmatprep.subr.mxu0 0.0
    %160 = vmatpush1.msra.mxu0 0.0
    %161 = vmatprep.subr.mxu0 0.0
    %162 = vmatpush1.msra.mxu0 0.0
    %163 = vmatprep.subr.mxu0 0.0
    %164 = vmatpush1.msra.mxu0 0.0
    %165 = vmatprep.subr.mxu0 0.0
    %166 = vmatpush1.msra.mxu0 0.0
    %167 = vmatprep.subr.mxu0 0.0
    %168 = vmatpush1.msra.mxu0 0.0
    %169 = vmatprep.subr.mxu0 0.0
    %170 = vmatpush1.msra.mxu0 0.0
    %171 = vmatprep.subr.mxu0 0.0
    %172 = vmatpush1.msra.mxu0 0.0
    %173 = vmatprep.subr.mxu0 0.0
    %174 = vmatpush1.msra.mxu0 0.0
    %175 = vmatprep.subr.mxu0 0.0
    %176 = vmatpush1.msra.mxu0 0.0
    %177 = vmatprep.subr.mxu0 0.0
    %178 = vmatpush1.msra.mxu0 0.0
    %179 = vmatprep.subr.mxu0 0.0
    %180 = vmatpush1.msra.mxu0 0.0
    %181 = vmatprep.subr.mxu0 0.0
    %182 = vmatpush1.msra.mxu0 0.0
    %183 = vmatprep.subr.mxu0 0.0
    %184 = vmatpush1.msra.mxu0 0.0
    %185 = vmatprep.subr.mxu0 0.0
    %186 = vmatpush1.msra.mxu0 0.0
    %187 = vmatprep.subr.mxu0 0.0
    %188 = vmatpush1.msra.mxu0 0.0
    %189 = vmatprep.subr.mxu0 0.0
    %190 = vmatpush1.msra.mxu0 0.0
    %191 = vmatprep.subr.mxu0 0.0
    %192 = vmatpush1.msra.mxu0 0.0
    %193 = vmatprep.subr.mxu0 0.0
    %194 = vmatpush1.msra.mxu0 0.0
    %195 = vmatprep.subr.mxu0 0.0
    %196 = vmatpush1.msra.mxu0 0.0
    %197 = vmatprep.subr.mxu0 0.0
    %198 = vmatpush1.msra.mxu0 0.0
    %199 = vmatprep.subr.mxu0 0.0
    %200 = vmatpush1.msra.mxu0 0.0
    %201 = vmatprep.subr.mxu0 0.0
    %202 = vmatpush1.msra.mxu0 0.0
    %203 = vmatprep.subr.mxu0 0.0
    %204 = vmatpush1.msra.mxu0 0.0
    %205 = vmatprep.subr.mxu0 0.0
    %206 = vmatpush1.msra.mxu0 0.0
    %207 = vmatprep.subr.mxu0 0.0
    %208 = vmatpush1.msra.mxu0 0.0
    %209 = vmatprep.subr.mxu0 0.0
    %210 = vmatpush1.msra.mxu0 0.0
    %211 = vmatprep.subr.mxu0 0.0
    %212 = vmatpush1.msra.mxu0 0.0
    %213 = vmatprep.subr.mxu0 0.0
    %214 = vmatpush1.msra.mxu0 0.0
    %215 = vmatprep.mubr.f32.mxu0 0.0
    %216 = vmatmul.mubr.f32.gmra.mrb[0].mxu0 %v146
    %v217 = vpop.f32.mrb[0].mxu0
    %v218 = vadd.f32 %v142, %v217
    %v219 = vpop.f32.mrb[0].mxu0
    %220 = vmatprep.mubr.f32.mxu0 0.0
    %221 = vmatmul.mubr.f32.gmra.mrb[0].mxu0 %v149
    %v222 = vpop.f32.mrb[0].mxu0
    %v223 = vadd.f32 %v142, %v222
    %v224 = vpop.f32.mrb[0].mxu0
    %225 = vdwg.mxu0
    %v226 = vld [vmem:[%s17] sm:$0xff]
    %v227 = vld [vmem:[%s17 + $0x8] sm:$0xff]
    %v228 = vld [vmem:[%s17 + $0x10] sm:$0xff]
    %v229 = vld [vmem:[%s17 + $0x18] sm:$0xff]
    %v230 = vld [vmem:[%s19] sm:$0x1]
    %v232 = vlaneseq
    %v233 = vshrl.u32 %v232, 7
    %v234 = vsub.s32 0, %v233
    %v235 = vrot.slane %v230, %v234
    %237 = vmatprep.subr.mxu0 0.0
    %238 = vmatpush1.msra.mxu0 %v226
    %239 = vmatprep.subr.mxu0 0.0
    %240 = vmatpush1.msra.mxu0 %v227
    %241 = vmatprep.subr.mxu0 0.0
    %242 = vmatpush1.msra.mxu0 %v228
    %243 = vmatprep.subr.mxu0 0.0
    %244 = vmatpush1.msra.mxu0 %v229
    %245 = vmatprep.subr.mxu0 0.0
    %246 = vmatpush1.msra.mxu0 0.0
    %247 = vmatprep.subr.mxu0 0.0
    %248 = vmatpush1.msra.mxu0 0.0
    %249 = vmatprep.subr.mxu0 0.0
    %250 = vmatpush1.msra.mxu0 0.0
    %251 = vmatprep.subr.mxu0 0.0
    %252 = vmatpush1.msra.mxu0 0.0
    %253 = vmatprep.subr.mxu0 0.0
    %254 = vmatpush1.msra.mxu0 0.0
    %255 = vmatprep.subr.mxu0 0.0
    %256 = vmatpush1.msra.mxu0 0.0
    %257 = vmatprep.subr.mxu0 0.0
    %258 = vmatpush1.msra.mxu0 0.0
    %259 = vmatprep.subr.mxu0 0.0
    %260 = vmatpush1.msra.mxu0 0.0
    %261 = vmatprep.subr.mxu0 0.0
    %262 = vmatpush1.msra.mxu0 0.0
    %263 = vmatprep.subr.mxu0 0.0
    %264 = vmatpush1.msra.mxu0 0.0
    %265 = vmatprep.subr.mxu0 0.0
    %266 = vmatpush1.msra.mxu0 0.0
    %267 = vmatprep.subr.mxu0 0.0
    %268 = vmatpush1.msra.mxu0 0.0
    %269 = vmatprep.subr.mxu0 0.0
    %270 = vmatpush1.msra.mxu0 0.0
    %271 = vmatprep.subr.mxu0 0.0
    %272 = vmatpush1.msra.mxu0 0.0
    %273 = vmatprep.subr.mxu0 0.0
    %274 = vmatpush1.msra.mxu0 0.0
    %275 = vmatprep.subr.mxu0 0.0
    %276 = vmatpush1.msra.mxu0 0.0
    %277 = vmatprep.subr.mxu0 0.0
    %278 = vmatpush1.msra.mxu0 0.0
    %279 = vmatprep.subr.mxu0 0.0
    %280 = vmatpush1.msra.mxu0 0.0
    %281 = vmatprep.subr.mxu0 0.0
    %282 = vmatpush1.msra.mxu0 0.0
    %283 = vmatprep.subr.mxu0 0.0
    %284 = vmatpush1.msra.mxu0 0.0
    %285 = vmatprep.subr.mxu0 0.0
    %286 = vmatpush1.msra.mxu0 0.0
    %287 = vmatprep.subr.mxu0 0.0
    %288 = vmatpush1.msra.mxu0 0.0
    %289 = vmatprep.subr.mxu0 0.0
    %290 = vmatpush1.msra.mxu0 0.0
    %291 = vmatprep.subr.mxu0 0.0
    %292 = vmatpush1.msra.mxu0 0.0
    %293 = vmatprep.subr.mxu0 0.0
    %294 = vmatpush1.msra.mxu0 0.0
    %295 = vmatprep.subr.mxu0 0.0
    %296 = vmatpush1.msra.mxu0 0.0
    %297 = vmatprep.subr.mxu0 0.0
    %298 = vmatpush1.msra.mxu0 0.0
    %299 = vmatprep.subr.mxu0 0.0
    %300 = vmatpush1.msra.mxu0 0.0
    %301 = vmatprep.mubr.f32.mxu0 0.0
    %302 = vmatmul.mubr.f32.gmra.mrb[0].mxu0 %v146
    %v303 = vpop.f32.mrb[0].mxu0
    %v304 = vadd.f32 %v235, %v303
    %v305 = vpop.f32.mrb[0].mxu0
    %306 = vmatprep.mubr.f32.mxu0 0.0
    %307 = vmatmul.mubr.f32.gmra.mrb[0].mxu0 %v149
    %v308 = vpop.f32.mrb[0].mxu0
    %v309 = vadd.f32 %v235, %v308
    %v310 = vpop.f32.mrb[0].mxu0
    %311 = vdwg.mxu0
    %v312 = vld [vmem:[%s21] sm:$0xff]
    %v313 = vld [vmem:[%s21 + $0x8] sm:$0xff]
    %v314 = vld [vmem:[%s21 + $0x10] sm:$0xff]
    %v315 = vld [vmem:[%s21 + $0x18] sm:$0xff]
    %v316 = vld [vmem:[%s23] sm:$0x1]
    %v318 = vlaneseq
    %v319 = vshrl.u32 %v318, 7
    %v320 = vsub.s32 0, %v319
    %v321 = vrot.slane %v316, %v320
    %v324 = vsel %vm144, %v125, 0
    %v327 = vsel %vm144, %v126, 0
    %v330 = vsel %vm144, %v127, 0
    %v333 = vsel %vm144, %v128, 0
    %335 = vmatprep.subr.mxu0 0.0
    %336 = vmatpush1.msra.mxu0 %v312
    %337 = vmatprep.subr.mxu0 0.0
    %338 = vmatpush1.msra.mxu0 %v313
    %339 = vmatprep.subr.mxu0 0.0
    %340 = vmatpush1.msra.mxu0 %v314
    %341 = vmatprep.subr.mxu0 0.0
    %342 = vmatpush1.msra.mxu0 %v315
    %343 = vmatprep.subr.mxu0 0.0
    %344 = vmatpush1.msra.mxu0 0.0
    %345 = vmatprep.subr.mxu0 0.0
    %346 = vmatpush1.msra.mxu0 0.0
    %347 = vmatprep.subr.mxu0 0.0
    %348 = vmatpush1.msra.mxu0 0.0
    %349 = vmatprep.subr.mxu0 0.0
    %350 = vmatpush1.msra.mxu0 0.0
    %351 = vmatprep.subr.mxu0 0.0
    %352 = vmatpush1.msra.mxu0 0.0
    %353 = vmatprep.subr.mxu0 0.0
    %354 = vmatpush1.msra.mxu0 0.0
    %355 = vmatprep.subr.mxu0 0.0
    %356 = vmatpush1.msra.mxu0 0.0
    %357 = vmatprep.subr.mxu0 0.0
    %358 = vmatpush1.msra.mxu0 0.0
    %359 = vmatprep.subr.mxu0 0.0
    %360 = vmatpush1.msra.mxu0 0.0
    %361 = vmatprep.subr.mxu0 0.0
    %362 = vmatpush1.msra.mxu0 0.0
    %363 = vmatprep.subr.mxu0 0.0
    %364 = vmatpush1.msra.mxu0 0.0
    %365 = vmatprep.subr.mxu0 0.0
    %366 = vmatpush1.msra.mxu0 0.0
    %367 = vmatprep.subr.mxu0 0.0
    %368 = vmatpush1.msra.mxu0 0.0
    %369 = vmatprep.subr.mxu0 0.0
    %370 = vmatpush1.msra.mxu0 0.0
    %371 = vmatprep.subr.mxu0 0.0
    %372 = vmatpush1.msra.mxu0 0.0
    %373 = vmatprep.subr.mxu0 0.0
    %374 = vmatpush1.msra.mxu0 0.0
    %375 = vmatprep.subr.mxu0 0.0
    %376 = vmatpush1.msra.mxu0 0.0
    %377 = vmatprep.subr.mxu0 0.0
    %378 = vmatpush1.msra.mxu0 0.0
    %379 = vmatprep.subr.mxu0 0.0
    %380 = vmatpush1.msra.mxu0 0.0
    %381 = vmatprep.subr.mxu0 0.0
    %382 = vmatpush1.msra.mxu0 0.0
    %383 = vmatprep.subr.mxu0 0.0
    %384 = vmatpush1.msra.mxu0 0.0
    %385 = vmatprep.subr.mxu0 0.0
    %386 = vmatpush1.msra.mxu0 0.0
    %387 = vmatprep.subr.mxu0 0.0
    %388 = vmatpush1.msra.mxu0 0.0
    %389 = vmatprep.subr.mxu0 0.0
    %390 = vmatpush1.msra.mxu0 0.0
    %391 = vmatprep.subr.mxu0 0.0
    %392 = vmatpush1.msra.mxu0 0.0
    %393 = vmatprep.subr.mxu0 0.0
    %394 = vmatpush1.msra.mxu0 0.0
    %395 = vmatprep.subr.mxu0 0.0
    %396 = vmatpush1.msra.mxu0 0.0
    %397 = vmatprep.subr.mxu0 0.0
    %398 = vmatpush1.msra.mxu0 0.0
    %399 = vmatprep.mubr.f32.mxu0 0.0
    %400 = vmatmul.mubr.f32.gmra.mrb[0].mxu0 %v324
    %v401 = vpop.f32.mrb[0].mxu0
    %v402 = vadd.f32 %v321, %v401
    %v403 = vpop.f32.mrb[0].mxu0
    %404 = vmatprep.mubr.f32.mxu0 0.0
    %405 = vmatmul.mubr.f32.gmra.mrb[0].mxu0 %v327
    %v406 = vpop.f32.mrb[0].mxu0
    %v407 = vadd.f32 %v321, %v406
    %v408 = vpop.f32.mrb[0].mxu0
    %409 = vmatprep.mubr.f32.mxu0 0.0
    %410 = vmatmul.mubr.f32.gmra.mrb[0].mxu0 %v330
    %v411 = vpop.f32.mrb[0].mxu0
    %v412 = vadd.f32 %v321, %v411
    %v413 = vpop.f32.mrb[0].mxu0
    %414 = vmatprep.mubr.f32.mxu0 0.0
    %415 = vmatmul.mubr.f32.gmra.mrb[0].mxu0 %v333
    %v416 = vpop.f32.mrb[0].mxu0
    %v417 = vadd.f32 %v321, %v416
    %v418 = vpop.f32.mrb[0].mxu0
    %419 = vdwg.mxu0
    %v420 = vld [vmem:[%s15] sm:$0x1]
    %423 = vrot.lane.b32.xlu0 %v218, 96
    %v424 = vpop.permute.xlu0 %423
    %425 = vrot.lane.b32.xlu0 %v223, 96
    %v426 = vpop.permute.xlu0 %425
    %vm427 = vcmask 64512
    %v428 = vsel %vm427, %v218, 0
    %v430 = vsel %vm427, %v223, 0
    %v432 = vsel %vm427, %v424, 0
    %v434 = vsel %vm427, %v426, 0
    %436 = vmatprep.subr.mxu0 0.0
    %437 = vmatpush1.xpose.msra.mxu0 %v432
    %438 = vmatprep.subr.mxu0 0.0
    %439 = vmatpush1.xpose.msra.mxu0 %v434
    %440 = vmatprep.subr.mxu0 0.0
    %441 = vmatpush1.xpose.msra.mxu0 0.0
    %442 = vmatprep.subr.mxu0 0.0
    %443 = vmatpush1.xpose.msra.mxu0 0.0
    %444 = vmatprep.subr.mxu0 0.0
    %445 = vmatpush1.xpose.msra.mxu0 0.0
    %446 = vmatprep.subr.mxu0 0.0
    %447 = vmatpush1.xpose.msra.mxu0 0.0
    %448 = vmatprep.subr.mxu0 0.0
    %449 = vmatpush1.xpose.msra.mxu0 0.0
    %450 = vmatprep.subr.mxu0 0.0
    %451 = vmatpush1.xpose.msra.mxu0 0.0
    %452 = vmatprep.subr.mxu0 0.0
    %453 = vmatpush1.xpose.msra.mxu0 0.0
    %454 = vmatprep.subr.mxu0 0.0
    %455 = vmatpush1.xpose.msra.mxu0 0.0
    %456 = vmatprep.subr.mxu0 0.0
    %457 = vmatpush1.xpose.msra.mxu0 0.0
    %458 = vmatprep.subr.mxu0 0.0
    %459 = vmatpush1.xpose.msra.mxu0 0.0
    %460 = vmatprep.subr.mxu0 0.0
    %461 = vmatpush1.xpose.msra.mxu0 0.0
    %462 = vmatprep.subr.mxu0 0.0
    %463 = vmatpush1.xpose.msra.mxu0 0.0
    %464 = vmatprep.subr.mxu0 0.0
    %465 = vmatpush1.xpose.msra.mxu0 0.0
    %466 = vmatprep.subr.mxu0 0.0
    %467 = vmatpush1.xpose.msra.mxu0 0.0
    %468 = vmatprep.subr.mxu0 0.0
    %469 = vmatpush1.xpose.msra.mxu0 0.0
    %470 = vmatprep.subr.mxu0 0.0
    %471 = vmatpush1.xpose.msra.mxu0 0.0
    %472 = vmatprep.subr.mxu0 0.0
    %473 = vmatpush1.xpose.msra.mxu0 0.0
    %474 = vmatprep.subr.mxu0 0.0
    %475 = vmatpush1.xpose.msra.mxu0 0.0
    %476 = vmatprep.subr.mxu0 0.0
    %477 = vmatpush1.xpose.msra.mxu0 0.0
    %478 = vmatprep.subr.mxu0 0.0
    %479 = vmatpush1.xpose.msra.mxu0 0.0
    %480 = vmatprep.subr.mxu0 0.0
    %481 = vmatpush1.xpose.msra.mxu0 0.0
    %482 = vmatprep.subr.mxu0 0.0
    %483 = vmatpush1.xpose.msra.mxu0 0.0
    %484 = vmatprep.subr.mxu0 0.0
    %485 = vmatpush1.xpose.msra.mxu0 0.0
    %486 = vmatprep.subr.mxu0 0.0
    %487 = vmatpush1.xpose.msra.mxu0 0.0
    %488 = vmatprep.subr.mxu0 0.0
    %489 = vmatpush1.xpose.msra.mxu0 0.0
    %490 = vmatprep.subr.mxu0 0.0
    %491 = vmatpush1.xpose.msra.mxu0 0.0
    %492 = vmatprep.subr.mxu0 0.0
    %493 = vmatpush1.xpose.msra.mxu0 0.0
    %494 = vmatprep.subr.mxu0 0.0
    %495 = vmatpush1.xpose.msra.mxu0 0.0
    %496 = vmatprep.subr.mxu0 0.0
    %497 = vmatpush1.xpose.msra.mxu0 0.0
    %498 = vmatprep.subr.mxu0 0.0
    %499 = vmatpush1.xpose.msra.mxu0 0.0
    %500 = vmatprep.mubr.f32.mxu0 0.0
    %501 = vmatmul.mubr.f32.gmra.mrb[0].mxu0 %v428
    %v502 = vpop.f32.mrb[0].mxu0
    %v503 = vadd.f32 %v129, %v502
    %v504 = vpop.f32.mrb[0].mxu0
    %505 = vmatprep.mubr.f32.mxu0 0.0
    %506 = vmatmul.mubr.f32.gmra.mrb[0].mxu0 %v430
    %v507 = vpop.f32.mrb[0].mxu0
    %v508 = vadd.f32 %v130, %v507
    %v509 = vpop.f32.mrb[0].mxu0
    %510 = vdwg.mxu0
    %vm511 = vcmask 130048
    %v512 = vsel %vm511, %v503, -inf
    %513 = vmax.xlane.f32.xlu0 %v512
    %v514 = vpop.xlane.xlu0 %513
    %v515 = vsel %vm511, %v508, -inf
    %516 = vmax.xlane.f32.xlu0 %v515
    %v517 = vpop.xlane.xlu0 %516
    %v518 = vsub.f32 %v503, %v514
    %v519 = vsub.f32 %v508, %v517
    %v520 = vmul.f32 %v518, 1.442695
    %v521 = vpow.pop %v520
    %v522 = vmul.f32 %v519, 1.442695
    %v523 = vpow.pop %v522
    %v524 = vsel %vm511, %v521, 0.0
    %525 = vadd.xlane.f32.xlu0 %v524
    %v526 = vpop.xlane.xlu0 %525
    %v527 = vsel %vm511, %v523, 0.0
    %528 = vadd.xlane.f32.xlu0 %v527
    %v529 = vpop.xlane.xlu0 %528
    %v530 = vrcp.pop %v526
    %v531 = vmul.f32 %v521, %v530
    %v532 = vrcp.pop %v529
    %v533 = vmul.f32 %v523, %v532
    %534 = vrot.lane.b32.xlu0 %v218, 64
    %v535 = vpop.permute.xlu0 %534
    %536 = vrot.lane.b32.xlu0 %v223, 64
    %v537 = vpop.permute.xlu0 %536
    %v541 = vsel %vm511, %v531, 0
    %v544 = vsel %vm511, %v533, 0
    %546 = vmatprep.subr.mxu0 0.0
    %547 = vmatpush1.msra.mxu0 %v535
    %548 = vmatprep.subr.mxu0 0.0
    %549 = vmatpush1.msra.mxu0 %v537
    %550 = vmatprep.subr.mxu0 0.0
    %551 = vmatpush1.msra.mxu0 0.0
    %552 = vmatprep.subr.mxu0 0.0
    %553 = vmatpush1.msra.mxu0 0.0
    %554 = vmatprep.subr.mxu0 0.0
    %555 = vmatpush1.msra.mxu0 0.0
    %556 = vmatprep.subr.mxu0 0.0
    %557 = vmatpush1.msra.mxu0 0.0
    %558 = vmatprep.subr.mxu0 0.0
    %559 = vmatpush1.msra.mxu0 0.0
    %560 = vmatprep.subr.mxu0 0.0
    %561 = vmatpush1.msra.mxu0 0.0
    %562 = vmatprep.subr.mxu0 0.0
    %563 = vmatpush1.msra.mxu0 0.0
    %564 = vmatprep.subr.mxu0 0.0
    %565 = vmatpush1.msra.mxu0 0.0
    %566 = vmatprep.subr.mxu0 0.0
    %567 = vmatpush1.msra.mxu0 0.0
    %568 = vmatprep.subr.mxu0 0.0
    %569 = vmatpush1.msra.mxu0 0.0
    %570 = vmatprep.subr.mxu0 0.0
    %571 = vmatpush1.msra.mxu0 0.0
    %572 = vmatprep.subr.mxu0 0.0
    %573 = vmatpush1.msra.mxu0 0.0
    %574 = vmatprep.subr.mxu0 0.0
    %575 = vmatpush1.msra.mxu0 0.0
    %576 = vmatprep.subr.mxu0 0.0
    %577 = vmatpush1.msra.mxu0 0.0
    %578 = vmatprep.subr.mxu0 0.0
    %579 = vmatpush1.msra.mxu0 0.0
    %580 = vmatprep.subr.mxu0 0.0
    %581 = vmatpush1.msra.mxu0 0.0
    %582 = vmatprep.subr.mxu0 0.0
    %583 = vmatpush1.msra.mxu0 0.0
    %584 = vmatprep.subr.mxu0 0.0
    %585 = vmatpush1.msra.mxu0 0.0
    %586 = vmatprep.subr.mxu0 0.0
    %587 = vmatpush1.msra.mxu0 0.0
    %588 = vmatprep.subr.mxu0 0.0
    %589 = vmatpush1.msra.mxu0 0.0
    %590 = vmatprep.subr.mxu0 0.0
    %591 = vmatpush1.msra.mxu0 0.0
    %592 = vmatprep.subr.mxu0 0.0
    %593 = vmatpush1.msra.mxu0 0.0
    %594 = vmatprep.subr.mxu0 0.0
    %595 = vmatpush1.msra.mxu0 0.0
    %596 = vmatprep.subr.mxu0 0.0
    %597 = vmatpush1.msra.mxu0 0.0
    %598 = vmatprep.subr.mxu0 0.0
    %599 = vmatpush1.msra.mxu0 0.0
    %600 = vmatprep.subr.mxu0 0.0
    %601 = vmatpush1.msra.mxu0 0.0
    %602 = vmatprep.subr.mxu0 0.0
    %603 = vmatpush1.msra.mxu0 0.0
    %604 = vmatprep.subr.mxu0 0.0
    %605 = vmatpush1.msra.mxu0 0.0
    %606 = vmatprep.subr.mxu0 0.0
    %607 = vmatpush1.msra.mxu0 0.0
    %608 = vmatprep.subr.mxu0 0.0
    %609 = vmatpush1.msra.mxu0 0.0
    %610 = vmatprep.mubr.f32.mxu0 0.0
    %611 = vmatmul.mubr.f32.gmra.mrb[0].mxu0 %v541
    %v612 = vpop.f32.mrb[0].mxu0
    %v613 = vadd.f32 0.0, %v612
    %v614 = vpop.f32.mrb[0].mxu0
    %615 = vmatprep.mubr.f32.mxu0 0.0
    %616 = vmatmul.mubr.f32.gmra.mrb[0].mxu0 %v544
    %v617 = vpop.f32.mrb[0].mxu0
    %v618 = vadd.f32 0.0, %v617
    %v619 = vpop.f32.mrb[0].mxu0
    %620 = vdwg.mxu0
    %v621 = vld [vmem:[%s13] sm:$0xff]
    %622 = vrot.lane.b32.xlu0 %v218, 120
    %v623 = vpop.permute.xlu0 %622
    %624 = vrot.lane.b32.xlu0 %v223, 120
    %v625 = vpop.permute.xlu0 %624
    %626 = vrot.lane.b32.xlu0 %v218, 88
    %v627 = vpop.permute.xlu0 %626
    %628 = vrot.lane.b32.xlu0 %v223, 88
    %v629 = vpop.permute.xlu0 %628
    %v630 = vsel %vm427, %v623, 0
    %v632 = vsel %vm427, %v625, 0
    %v634 = vsel %vm427, %v627, 0
    %v636 = vsel %vm427, %v629, 0
    %638 = vmatprep.subr.mxu0 0.0
    %639 = vmatpush1.xpose.msra.mxu0 %v634
    %640 = vmatprep.subr.mxu0 0.0
    %641 = vmatpush1.xpose.msra.mxu0 %v636
    %642 = vmatprep.subr.mxu0 0.0
    %643 = vmatpush1.xpose.msra.mxu0 0.0
    %644 = vmatprep.subr.mxu0 0.0
    %645 = vmatpush1.xpose.msra.mxu0 0.0
    %646 = vmatprep.subr.mxu0 0.0
    %647 = vmatpush1.xpose.msra.mxu0 0.0
    %648 = vmatprep.subr.mxu0 0.0
    %649 = vmatpush1.xpose.msra.mxu0 0.0
    %650 = vmatprep.subr.mxu0 0.0
    %651 = vmatpush1.xpose.msra.mxu0 0.0
    %652 = vmatprep.subr.mxu0 0.0
    %653 = vmatpush1.xpose.msra.mxu0 0.0
    %654 = vmatprep.subr.mxu0 0.0
    %655 = vmatpush1.xpose.msra.mxu0 0.0
    %656 = vmatprep.subr.mxu0 0.0
    %657 = vmatpush1.xpose.msra.mxu0 0.0
    %658 = vmatprep.subr.mxu0 0.0
    %659 = vmatpush1.xpose.msra.mxu0 0.0
    %660 = vmatprep.subr.mxu0 0.0
    %661 = vmatpush1.xpose.msra.mxu0 0.0
    %662 = vmatprep.subr.mxu0 0.0
    %663 = vmatpush1.xpose.msra.mxu0 0.0
    %664 = vmatprep.subr.mxu0 0.0
    %665 = vmatpush1.xpose.msra.mxu0 0.0
    %666 = vmatprep.subr.mxu0 0.0
    %667 = vmatpush1.xpose.msra.mxu0 0.0
    %668 = vmatprep.subr.mxu0 0.0
    %669 = vmatpush1.xpose.msra.mxu0 0.0
    %670 = vmatprep.subr.mxu0 0.0
    %671 = vmatpush1.xpose.msra.mxu0 0.0
    %672 = vmatprep.subr.mxu0 0.0
    %673 = vmatpush1.xpose.msra.mxu0 0.0
    %674 = vmatprep.subr.mxu0 0.0
    %675 = vmatpush1.xpose.msra.mxu0 0.0
    %676 = vmatprep.subr.mxu0 0.0
    %677 = vmatpush1.xpose.msra.mxu0 0.0
    %678 = vmatprep.subr.mxu0 0.0
    %679 = vmatpush1.xpose.msra.mxu0 0.0
    %680 = vmatprep.subr.mxu0 0.0
    %681 = vmatpush1.xpose.msra.mxu0 0.0
    %682 = vmatprep.subr.mxu0 0.0
    %683 = vmatpush1.xpose.msra.mxu0 0.0
    %684 = vmatprep.subr.mxu0 0.0
    %685 = vmatpush1.xpose.msra.mxu0 0.0
    %686 = vmatprep.subr.mxu0 0.0
    %687 = vmatpush1.xpose.msra.mxu0 0.0
    %688 = vmatprep.subr.mxu0 0.0
    %689 = vmatpush1.xpose.msra.mxu0 0.0
    %690 = vmatprep.subr.mxu0 0.0
    %691 = vmatpush1.xpose.msra.mxu0 0.0
    %692 = vmatprep.subr.mxu0 0.0
    %693 = vmatpush1.xpose.msra.mxu0 0.0
    %694 = vmatprep.subr.mxu0 0.0
    %695 = vmatpush1.xpose.msra.mxu0 0.0
    %696 = vmatprep.subr.mxu0 0.0
    %697 = vmatpush1.xpose.msra.mxu0 0.0
    %698 = vmatprep.subr.mxu0 0.0
    %699 = vmatpush1.xpose.msra.mxu0 0.0
    %700 = vmatprep.subr.mxu0 0.0
    %701 = vmatpush1.xpose.msra.mxu0 0.0
    %702 = vmatprep.mubr.f32.mxu0 0.0
    %703 = vmatmul.mubr.f32.gmra.mrb[0].mxu0 %v630
    %v704 = vpop.f32.mrb[0].mxu0
    %v705 = vadd.f32 %v129, %v704
    %v706 = vpop.f32.mrb[0].mxu0
    %707 = vmatprep.mubr.f32.mxu0 0.0
    %708 = vmatmul.mubr.f32.gmra.mrb[0].mxu0 %v632
    %v709 = vpop.f32.mrb[0].mxu0
    %v710 = vadd.f32 %v130, %v709
    %v711 = vpop.f32.mrb[0].mxu0
    %712 = vdwg.mxu0
    %v713 = vsel %vm511, %v705, -inf
    %714 = vmax.xlane.f32.xlu0 %v713
    %v715 = vpop.xlane.xlu0 %714
    %v716 = vsel %vm511, %v710, -inf
    %717 = vmax.xlane.f32.xlu0 %v716
    %v718 = vpop.xlane.xlu0 %717
    %v719 = vsub.f32 %v705, %v715
    %v720 = vsub.f32 %v710, %v718
    %v721 = vmul.f32 %v719, 1.442695
    %v722 = vpow.pop %v721
    %v723 = vmul.f32 %v720, 1.442695
    %v724 = vpow.pop %v723
    %v725 = vsel %vm511, %v722, 0.0
    %726 = vadd.xlane.f32.xlu0 %v725
    %v727 = vpop.xlane.xlu0 %726
    %v728 = vsel %vm511, %v724, 0.0
    %729 = vadd.xlane.f32.xlu0 %v728
    %v730 = vpop.xlane.xlu0 %729
    %v731 = vrcp.pop %v727
    %v732 = vmul.f32 %v722, %v731
    %v733 = vrcp.pop %v730
    %v734 = vmul.f32 %v724, %v733
    %735 = vrot.lane.b32.xlu0 %v218, 56
    %v736 = vpop.permute.xlu0 %735
    %737 = vrot.lane.b32.xlu0 %v223, 56
    %v738 = vpop.permute.xlu0 %737
    %v742 = vsel %vm511, %v732, 0
    %v745 = vsel %vm511, %v734, 0
    %747 = vmatprep.subr.mxu0 0.0
    %748 = vmatpush1.msra.mxu0 %v736
    %749 = vmatprep.subr.mxu0 0.0
    %750 = vmatpush1.msra.mxu0 %v738
    %751 = vmatprep.subr.mxu0 0.0
    %752 = vmatpush1.msra.mxu0 0.0
    %753 = vmatprep.subr.mxu0 0.0
    %754 = vmatpush1.msra.mxu0 0.0
    %755 = vmatprep.subr.mxu0 0.0
    %756 = vmatpush1.msra.mxu0 0.0
    %757 = vmatprep.subr.mxu0 0.0
    %758 = vmatpush1.msra.mxu0 0.0
    %759 = vmatprep.subr.mxu0 0.0
    %760 = vmatpush1.msra.mxu0 0.0
    %761 = vmatprep.subr.mxu0 0.0
    %762 = vmatpush1.msra.mxu0 0.0
    %763 = vmatprep.subr.mxu0 0.0
    %764 = vmatpush1.msra.mxu0 0.0
    %765 = vmatprep.subr.mxu0 0.0
    %766 = vmatpush1.msra.mxu0 0.0
    %767 = vmatprep.subr.mxu0 0.0
    %768 = vmatpush1.msra.mxu0 0.0
    %769 = vmatprep.subr.mxu0 0.0
    %770 = vmatpush1.msra.mxu0 0.0
    %771 = vmatprep.subr.mxu0 0.0
    %772 = vmatpush1.msra.mxu0 0.0
    %773 = vmatprep.subr.mxu0 0.0
    %774 = vmatpush1.msra.mxu0 0.0
    %775 = vmatprep.subr.mxu0 0.0
    %776 = vmatpush1.msra.mxu0 0.0
    %777 = vmatprep.subr.mxu0 0.0
    %778 = vmatpush1.msra.mxu0 0.0
    %779 = vmatprep.subr.mxu0 0.0
    %780 = vmatpush1.msra.mxu0 0.0
    %781 = vmatprep.subr.mxu0 0.0
    %782 = vmatpush1.msra.mxu0 0.0
    %783 = vmatprep.subr.mxu0 0.0
    %784 = vmatpush1.msra.mxu0 0.0
    %785 = vmatprep.subr.mxu0 0.0
    %786 = vmatpush1.msra.mxu0 0.0
    %787 = vmatprep.subr.mxu0 0.0
    %788 = vmatpush1.msra.mxu0 0.0
    %789 = vmatprep.subr.mxu0 0.0
    %790 = vmatpush1.msra.mxu0 0.0
    %791 = vmatprep.subr.mxu0 0.0
    %792 = vmatpush1.msra.mxu0 0.0
    %793 = vmatprep.subr.mxu0 0.0
    %794 = vmatpush1.msra.mxu0 0.0
    %795 = vmatprep.subr.mxu0 0.0
    %796 = vmatpush1.msra.mxu0 0.0
    %797 = vmatprep.subr.mxu0 0.0
    %798 = vmatpush1.msra.mxu0 0.0
    %799 = vmatprep.subr.mxu0 0.0
    %800 = vmatpush1.msra.mxu0 0.0
    %801 = vmatprep.subr.mxu0 0.0
    %802 = vmatpush1.msra.mxu0 0.0
    %803 = vmatprep.subr.mxu0 0.0
    %804 = vmatpush1.msra.mxu0 0.0
    %805 = vmatprep.subr.mxu0 0.0
    %806 = vmatpush1.msra.mxu0 0.0
    %807 = vmatprep.subr.mxu0 0.0
    %808 = vmatpush1.msra.mxu0 0.0
    %809 = vmatprep.subr.mxu0 0.0
    %810 = vmatpush1.msra.mxu0 0.0
    %811 = vmatprep.mubr.f32.mxu0 0.0
    %812 = vmatmul.mubr.f32.gmra.mrb[0].mxu0 %v742
    %v813 = vpop.f32.mrb[0].mxu0
    %v814 = vadd.f32 0.0, %v813
    %v815 = vpop.f32.mrb[0].mxu0
    %816 = vmatprep.mubr.f32.mxu0 0.0
    %817 = vmatmul.mubr.f32.gmra.mrb[0].mxu0 %v745
    %v818 = vpop.f32.mrb[0].mxu0
    %v819 = vadd.f32 0.0, %v818
    %v820 = vpop.f32.mrb[0].mxu0
    %821 = vdwg.mxu0
    %s822 = scalar_lea.vmem %s13, 8
    %v823 = vld [vmem:[%s822] sm:$0xff]
    %v825 = vsel %vm427, %v814, 0
    %v828 = vsel %vm427, %v819, 0
    %830 = vmatprep.subr.mxu0 0.0
    %831 = vmatpush1.msra.mxu0 %v823
    %832 = vmatprep.subr.mxu0 0.0
    %833 = vmatpush1.msra.mxu0 0.0
    %834 = vmatprep.subr.mxu0 0.0
    %835 = vmatpush1.msra.mxu0 0.0
    %836 = vmatprep.subr.mxu0 0.0
    %837 = vmatpush1.msra.mxu0 0.0
    %838 = vmatprep.subr.mxu0 0.0
    %839 = vmatpush1.msra.mxu0 0.0
    %840 = vmatprep.subr.mxu0 0.0
    %841 = vmatpush1.msra.mxu0 0.0
    %842 = vmatprep.subr.mxu0 0.0
    %843 = vmatpush1.msra.mxu0 0.0
    %844 = vmatprep.subr.mxu0 0.0
    %845 = vmatpush1.msra.mxu0 0.0
    %846 = vmatprep.subr.mxu0 0.0
    %847 = vmatpush1.msra.mxu0 0.0
    %848 = vmatprep.subr.mxu0 0.0
    %849 = vmatpush1.msra.mxu0 0.0
    %850 = vmatprep.subr.mxu0 0.0
    %851 = vmatpush1.msra.mxu0 0.0
    %852 = vmatprep.subr.mxu0 0.0
    %853 = vmatpush1.msra.mxu0 0.0
    %854 = vmatprep.subr.mxu0 0.0
    %855 = vmatpush1.msra.mxu0 0.0
    %856 = vmatprep.subr.mxu0 0.0
    %857 = vmatpush1.msra.mxu0 0.0
    %858 = vmatprep.subr.mxu0 0.0
    %859 = vmatpush1.msra.mxu0 0.0
    %860 = vmatprep.subr.mxu0 0.0
    %861 = vmatpush1.msra.mxu0 0.0
    %862 = vmatprep.subr.mxu0 0.0
    %863 = vmatpush1.msra.mxu0 0.0
    %864 = vmatprep.subr.mxu0 0.0
    %865 = vmatpush1.msra.mxu0 0.0
    %866 = vmatprep.subr.mxu0 0.0
    %867 = vmatpush1.msra.mxu0 0.0
    %868 = vmatprep.subr.mxu0 0.0
    %869 = vmatpush1.msra.mxu0 0.0
    %870 = vmatprep.subr.mxu0 0.0
    %871 = vmatpush1.msra.mxu0 0.0
    %872 = vmatprep.subr.mxu0 0.0
    %873 = vmatpush1.msra.mxu0 0.0
    %874 = vmatprep.subr.mxu0 0.0
    %875 = vmatpush1.msra.mxu0 0.0
    %876 = vmatprep.subr.mxu0 0.0
    %877 = vmatpush1.msra.mxu0 0.0
    %878 = vmatprep.subr.mxu0 0.0
    %879 = vmatpush1.msra.mxu0 0.0
    %880 = vmatprep.subr.mxu0 0.0
    %881 = vmatpush1.msra.mxu0 0.0
    %882 = vmatprep.subr.mxu0 0.0
    %883 = vmatpush1.msra.mxu0 0.0
    %884 = vmatprep.subr.mxu0 0.0
    %885 = vmatpush1.msra.mxu0 0.0
    %886 = vmatprep.subr.mxu0 0.0
    %887 = vmatpush1.msra.mxu0 0.0
    %888 = vmatprep.subr.mxu0 0.0
    %889 = vmatpush1.msra.mxu0 0.0
    %890 = vmatprep.subr.mxu0 0.0
    %891 = vmatpush1.msra.mxu0 0.0
    %892 = vmatprep.subr.mxu0 0.0
    %893 = vmatpush1.msra.mxu0 0.0
    %894 = vmatprep.mubr.f32.mxu0 0.0
    %895 = vmatmul.mubr.f32.gmra.mrb[0].mxu0 %v825
    %v896 = vpop.f32.mrb[0].mxu0
    %v897 = vadd.f32 0.0, %v896
    %v898 = vpop.f32.mrb[0].mxu0
    %899 = vmatprep.mubr.f32.mxu0 0.0
    %900 = vmatmul.mubr.f32.gmra.mrb[0].mxu0 %v828
    %v901 = vpop.f32.mrb[0].mxu0
    %v902 = vadd.f32 0.0, %v901
    %v903 = vpop.f32.mrb[0].mxu0
    %904 = vdwg.mxu0
    %v906 = vsel %vm427, %v613, 0
    %v909 = vsel %vm427, %v618, 0
    %911 = vmatprep.subr.mxu0 0.0
    %912 = vmatpush1.msra.mxu0 %v621
    %913 = vmatprep.subr.mxu0 0.0
    %914 = vmatpush1.msra.mxu0 0.0
    %915 = vmatprep.subr.mxu0 0.0
    %916 = vmatpush1.msra.mxu0 0.0
    %917 = vmatprep.subr.mxu0 0.0
    %918 = vmatpush1.msra.mxu0 0.0
    %919 = vmatprep.subr.mxu0 0.0
    %920 = vmatpush1.msra.mxu0 0.0
    %921 = vmatprep.subr.mxu0 0.0
    %922 = vmatpush1.msra.mxu0 0.0
    %923 = vmatprep.subr.mxu0 0.0
    %924 = vmatpush1.msra.mxu0 0.0
    %925 = vmatprep.subr.mxu0 0.0
    %926 = vmatpush1.msra.mxu0 0.0
    %927 = vmatprep.subr.mxu0 0.0
    %928 = vmatpush1.msra.mxu0 0.0
    %929 = vmatprep.subr.mxu0 0.0
    %930 = vmatpush1.msra.mxu0 0.0
    %931 = vmatprep.subr.mxu0 0.0
    %932 = vmatpush1.msra.mxu0 0.0
    %933 = vmatprep.subr.mxu0 0.0
    %934 = vmatpush1.msra.mxu0 0.0
    %935 = vmatprep.subr.mxu0 0.0
    %936 = vmatpush1.msra.mxu0 0.0
    %937 = vmatprep.subr.mxu0 0.0
    %938 = vmatpush1.msra.mxu0 0.0
    %939 = vmatprep.subr.mxu0 0.0
    %940 = vmatpush1.msra.mxu0 0.0
    %941 = vmatprep.subr.mxu0 0.0
    %942 = vmatpush1.msra.mxu0 0.0
    %943 = vmatprep.subr.mxu0 0.0
    %944 = vmatpush1.msra.mxu0 0.0
    %945 = vmatprep.subr.mxu0 0.0
    %946 = vmatpush1.msra.mxu0 0.0
    %947 = vmatprep.subr.mxu0 0.0
    %948 = vmatpush1.msra.mxu0 0.0
    %949 = vmatprep.subr.mxu0 0.0
    %950 = vmatpush1.msra.mxu0 0.0
    %951 = vmatprep.subr.mxu0 0.0
    %952 = vmatpush1.msra.mxu0 0.0
    %953 = vmatprep.subr.mxu0 0.0
    %954 = vmatpush1.msra.mxu0 0.0
    %955 = vmatprep.subr.mxu0 0.0
    %956 = vmatpush1.msra.mxu0 0.0
    %957 = vmatprep.subr.mxu0 0.0
    %958 = vmatpush1.msra.mxu0 0.0
    %959 = vmatprep.subr.mxu0 0.0
    %960 = vmatpush1.msra.mxu0 0.0
    %961 = vmatprep.subr.mxu0 0.0
    %962 = vmatpush1.msra.mxu0 0.0
    %963 = vmatprep.subr.mxu0 0.0
    %964 = vmatpush1.msra.mxu0 0.0
    %965 = vmatprep.subr.mxu0 0.0
    %966 = vmatpush1.msra.mxu0 0.0
    %967 = vmatprep.subr.mxu0 0.0
    %968 = vmatpush1.msra.mxu0 0.0
    %969 = vmatprep.subr.mxu0 0.0
    %970 = vmatpush1.msra.mxu0 0.0
    %971 = vmatprep.subr.mxu0 0.0
    %972 = vmatpush1.msra.mxu0 0.0
    %973 = vmatprep.subr.mxu0 0.0
    %974 = vmatpush1.msra.mxu0 0.0
    %975 = vmatprep.mubr.f32.mxu0 0.0
    %976 = vmatmul.mubr.f32.gmra.mrb[0].mxu0 %v906
    %v977 = vpop.f32.mrb[0].mxu0
    %v978 = vadd.f32 %v897, %v977
    %v979 = vpop.f32.mrb[0].mxu0
    %980 = vmatprep.mubr.f32.mxu0 0.0
    %981 = vmatmul.mubr.f32.gmra.mrb[0].mxu0 %v909
    %v982 = vpop.f32.mrb[0].mxu0
    %v983 = vadd.f32 %v902, %v982
    %v984 = vpop.f32.mrb[0].mxu0
    %985 = vdwg.mxu0
    %986 = vrot.lane.b32.xlu0 %v218, 112
    %v987 = vpop.permute.xlu0 %986
    %988 = vrot.lane.b32.xlu0 %v223, 112
    %v989 = vpop.permute.xlu0 %988
    %990 = vrot.lane.b32.xlu0 %v218, 80
    %v991 = vpop.permute.xlu0 %990
    %992 = vrot.lane.b32.xlu0 %v223, 80
    %v993 = vpop.permute.xlu0 %992
    %v994 = vsel %vm427, %v987, 0
    %v996 = vsel %vm427, %v989, 0
    %v998 = vsel %vm427, %v991, 0
    %v1000 = vsel %vm427, %v993, 0
    %1002 = vmatprep.subr.mxu0 0.0
    %1003 = vmatpush1.xpose.msra.mxu0 %v998
    %1004 = vmatprep.subr.mxu0 0.0
    %1005 = vmatpush1.xpose.msra.mxu0 %v1000
    %1006 = vmatprep.subr.mxu0 0.0
    %1007 = vmatpush1.xpose.msra.mxu0 0.0
    %1008 = vmatprep.subr.mxu0 0.0
    %1009 = vmatpush1.xpose.msra.mxu0 0.0
    %1010 = vmatprep.subr.mxu0 0.0
    %1011 = vmatpush1.xpose.msra.mxu0 0.0
    %1012 = vmatprep.subr.mxu0 0.0
    %1013 = vmatpush1.xpose.msra.mxu0 0.0
    %1014 = vmatprep.subr.mxu0 0.0
    %1015 = vmatpush1.xpose.msra.mxu0 0.0
    %1016 = vmatprep.subr.mxu0 0.0
    %1017 = vmatpush1.xpose.msra.mxu0 0.0
    %1018 = vmatprep.subr.mxu0 0.0
    %1019 = vmatpush1.xpose.msra.mxu0 0.0
    %1020 = vmatprep.subr.mxu0 0.0
    %1021 = vmatpush1.xpose.msra.mxu0 0.0
    %1022 = vmatprep.subr.mxu0 0.0
    %1023 = vmatpush1.xpose.msra.mxu0 0.0
    %1024 = vmatprep.subr.mxu0 0.0
    %1025 = vmatpush1.xpose.msra.mxu0 0.0
    %1026 = vmatprep.subr.mxu0 0.0
    %1027 = vmatpush1.xpose.msra.mxu0 0.0
    %1028 = vmatprep.subr.mxu0 0.0
    %1029 = vmatpush1.xpose.msra.mxu0 0.0
    %1030 = vmatprep.subr.mxu0 0.0
    %1031 = vmatpush1.xpose.msra.mxu0 0.0
    %1032 = vmatprep.subr.mxu0 0.0
    %1033 = vmatpush1.xpose.msra.mxu0 0.0
    %1034 = vmatprep.subr.mxu0 0.0
    %1035 = vmatpush1.xpose.msra.mxu0 0.0
    %1036 = vmatprep.subr.mxu0 0.0
    %1037 = vmatpush1.xpose.msra.mxu0 0.0
    %1038 = vmatprep.subr.mxu0 0.0
    %1039 = vmatpush1.xpose.msra.mxu0 0.0
    %1040 = vmatprep.subr.mxu0 0.0
    %1041 = vmatpush1.xpose.msra.mxu0 0.0
    %1042 = vmatprep.subr.mxu0 0.0
    %1043 = vmatpush1.xpose.msra.mxu0 0.0
    %1044 = vmatprep.subr.mxu0 0.0
    %1045 = vmatpush1.xpose.msra.mxu0 0.0
    %1046 = vmatprep.subr.mxu0 0.0
    %1047 = vmatpush1.xpose.msra.mxu0 0.0
    %1048 = vmatprep.subr.mxu0 0.0
    %1049 = vmatpush1.xpose.msra.mxu0 0.0
    %1050 = vmatprep.subr.mxu0 0.0
    %1051 = vmatpush1.xpose.msra.mxu0 0.0
    %1052 = vmatprep.subr.mxu0 0.0
    %1053 = vmatpush1.xpose.msra.mxu0 0.0
    %1054 = vmatprep.subr.mxu0 0.0
    %1055 = vmatpush1.xpose.msra.mxu0 0.0
    %1056 = vmatprep.subr.mxu0 0.0
    %1057 = vmatpush1.xpose.msra.mxu0 0.0
    %1058 = vmatprep.subr.mxu0 0.0
    %1059 = vmatpush1.xpose.msra.mxu0 0.0
    %1060 = vmatprep.subr.mxu0 0.0
    %1061 = vmatpush1.xpose.msra.mxu0 0.0
    %1062 = vmatprep.subr.mxu0 0.0
    %1063 = vmatpush1.xpose.msra.mxu0 0.0
    %1064 = vmatprep.subr.mxu0 0.0
    %1065 = vmatpush1.xpose.msra.mxu0 0.0
    %1066 = vmatprep.mubr.f32.mxu0 0.0
    %1067 = vmatmul.mubr.f32.gmra.mrb[0].mxu0 %v994
    %v1068 = vpop.f32.mrb[0].mxu0
    %v1069 = vadd.f32 %v129, %v1068
    %v1070 = vpop.f32.mrb[0].mxu0
    %1071 = vmatprep.mubr.f32.mxu0 0.0
    %1072 = vmatmul.mubr.f32.gmra.mrb[0].mxu0 %v996
    %v1073 = vpop.f32.mrb[0].mxu0
    %v1074 = vadd.f32 %v130, %v1073
    %v1075 = vpop.f32.mrb[0].mxu0
    %1076 = vdwg.mxu0
    %v1077 = vsel %vm511, %v1069, -inf
    %1078 = vmax.xlane.f32.xlu0 %v1077
    %v1079 = vpop.xlane.xlu0 %1078
    %v1080 = vsel %vm511, %v1074, -inf
    %1081 = vmax.xlane.f32.xlu0 %v1080
    %v1082 = vpop.xlane.xlu0 %1081
    %v1083 = vsub.f32 %v1069, %v1079
    %v1084 = vsub.f32 %v1074, %v1082
    %v1085 = vmul.f32 %v1083, 1.442695
    %v1086 = vpow.pop %v1085
    %v1087 = vmul.f32 %v1084, 1.442695
    %v1088 = vpow.pop %v1087
    %v1089 = vsel %vm511, %v1086, 0.0
    %1090 = vadd.xlane.f32.xlu0 %v1089
    %v1091 = vpop.xlane.xlu0 %1090
    %v1092 = vsel %vm511, %v1088, 0.0
    %1093 = vadd.xlane.f32.xlu0 %v1092
    %v1094 = vpop.xlane.xlu0 %1093
    %v1095 = vrcp.pop %v1091
    %v1096 = vmul.f32 %v1086, %v1095
    %v1097 = vrcp.pop %v1094
    %v1098 = vmul.f32 %v1088, %v1097
    %1099 = vrot.lane.b32.xlu0 %v218, 48
    %v1100 = vpop.permute.xlu0 %1099
    %1101 = vrot.lane.b32.xlu0 %v223, 48
    %v1102 = vpop.permute.xlu0 %1101
    %v1106 = vsel %vm511, %v1096, 0
    %v1109 = vsel %vm511, %v1098, 0
    %1111 = vmatprep.subr.mxu0 0.0
    %1112 = vmatpush1.msra.mxu0 %v1100
    %1113 = vmatprep.subr.mxu0 0.0
    %1114 = vmatpush1.msra.mxu0 %v1102
    %1115 = vmatprep.subr.mxu0 0.0
    %1116 = vmatpush1.msra.mxu0 0.0
    %1117 = vmatprep.subr.mxu0 0.0
    %1118 = vmatpush1.msra.mxu0 0.0
    %1119 = vmatprep.subr.mxu0 0.0
    %1120 = vmatpush1.msra.mxu0 0.0
    %1121 = vmatprep.subr.mxu0 0.0
    %1122 = vmatpush1.msra.mxu0 0.0
    %1123 = vmatprep.subr.mxu0 0.0
    %1124 = vmatpush1.msra.mxu0 0.0
    %1125 = vmatprep.subr.mxu0 0.0
    %1126 = vmatpush1.msra.mxu0 0.0
    %1127 = vmatprep.subr.mxu0 0.0
    %1128 = vmatpush1.msra.mxu0 0.0
    %1129 = vmatprep.subr.mxu0 0.0
    %1130 = vmatpush1.msra.mxu0 0.0
    %1131 = vmatprep.subr.mxu0 0.0
    %1132 = vmatpush1.msra.mxu0 0.0
    %1133 = vmatprep.subr.mxu0 0.0
    %1134 = vmatpush1.msra.mxu0 0.0
    %1135 = vmatprep.subr.mxu0 0.0
    %1136 = vmatpush1.msra.mxu0 0.0
    %1137 = vmatprep.subr.mxu0 0.0
    %1138 = vmatpush1.msra.mxu0 0.0
    %1139 = vmatprep.subr.mxu0 0.0
    %1140 = vmatpush1.msra.mxu0 0.0
    %1141 = vmatprep.subr.mxu0 0.0
    %1142 = vmatpush1.msra.mxu0 0.0
    %1143 = vmatprep.subr.mxu0 0.0
    %1144 = vmatpush1.msra.mxu0 0.0
    %1145 = vmatprep.subr.mxu0 0.0
    %1146 = vmatpush1.msra.mxu0 0.0
    %1147 = vmatprep.subr.mxu0 0.0
    %1148 = vmatpush1.msra.mxu0 0.0
    %1149 = vmatprep.subr.mxu0 0.0
    %1150 = vmatpush1.msra.mxu0 0.0
    %1151 = vmatprep.subr.mxu0 0.0
    %1152 = vmatpush1.msra.mxu0 0.0
    %1153 = vmatprep.subr.mxu0 0.0
    %1154 = vmatpush1.msra.mxu0 0.0
    %1155 = vmatprep.subr.mxu0 0.0
    %1156 = vmatpush1.msra.mxu0 0.0
    %1157 = vmatprep.subr.mxu0 0.0
    %1158 = vmatpush1.msra.mxu0 0.0
    %1159 = vmatprep.subr.mxu0 0.0
    %1160 = vmatpush1.msra.mxu0 0.0
    %1161 = vmatprep.subr.mxu0 0.0
    %1162 = vmatpush1.msra.mxu0 0.0
    %1163 = vmatprep.subr.mxu0 0.0
    %1164 = vmatpush1.msra.mxu0 0.0
    %1165 = vmatprep.subr.mxu0 0.0
    %1166 = vmatpush1.msra.mxu0 0.0
    %1167 = vmatprep.subr.mxu0 0.0
    %1168 = vmatpush1.msra.mxu0 0.0
    %1169 = vmatprep.subr.mxu0 0.0
    %1170 = vmatpush1.msra.mxu0 0.0
    %1171 = vmatprep.subr.mxu0 0.0
    %1172 = vmatpush1.msra.mxu0 0.0
    %1173 = vmatprep.subr.mxu0 0.0
    %1174 = vmatpush1.msra.mxu0 0.0
    %1175 = vmatprep.mubr.f32.mxu0 0.0
    %1176 = vmatmul.mubr.f32.gmra.mrb[0].mxu0 %v1106
    %v1177 = vpop.f32.mrb[0].mxu0
    %v1178 = vadd.f32 0.0, %v1177
    %v1179 = vpop.f32.mrb[0].mxu0
    %1180 = vmatprep.mubr.f32.mxu0 0.0
    %1181 = vmatmul.mubr.f32.gmra.mrb[0].mxu0 %v1109
    %v1182 = vpop.f32.mrb[0].mxu0
    %v1183 = vadd.f32 0.0, %v1182
    %v1184 = vpop.f32.mrb[0].mxu0
    %1185 = vdwg.mxu0
    %s1186 = scalar_lea.vmem %s13, 16
    %v1187 = vld [vmem:[%s1186] sm:$0xff]
    %v1189 = vsel %vm427, %v1178, 0
    %v1192 = vsel %vm427, %v1183, 0
    %1194 = vmatprep.subr.mxu0 0.0
    %1195 = vmatpush1.msra.mxu0 %v1187
    %1196 = vmatprep.subr.mxu0 0.0
    %1197 = vmatpush1.msra.mxu0 0.0
    %1198 = vmatprep.subr.mxu0 0.0
    %1199 = vmatpush1.msra.mxu0 0.0
    %1200 = vmatprep.subr.mxu0 0.0
    %1201 = vmatpush1.msra.mxu0 0.0
    %1202 = vmatprep.subr.mxu0 0.0
    %1203 = vmatpush1.msra.mxu0 0.0
    %1204 = vmatprep.subr.mxu0 0.0
    %1205 = vmatpush1.msra.mxu0 0.0
    %1206 = vmatprep.subr.mxu0 0.0
    %1207 = vmatpush1.msra.mxu0 0.0
    %1208 = vmatprep.subr.mxu0 0.0
    %1209 = vmatpush1.msra.mxu0 0.0
    %1210 = vmatprep.subr.mxu0 0.0
    %1211 = vmatpush1.msra.mxu0 0.0
    %1212 = vmatprep.subr.mxu0 0.0
    %1213 = vmatpush1.msra.mxu0 0.0
    %1214 = vmatprep.subr.mxu0 0.0
    %1215 = vmatpush1.msra.mxu0 0.0
    %1216 = vmatprep.subr.mxu0 0.0
    %1217 = vmatpush1.msra.mxu0 0.0
    %1218 = vmatprep.subr.mxu0 0.0
    %1219 = vmatpush1.msra.mxu0 0.0
    %1220 = vmatprep.subr.mxu0 0.0
    %1221 = vmatpush1.msra.mxu0 0.0
    %1222 = vmatprep.subr.mxu0 0.0
    %1223 = vmatpush1.msra.mxu0 0.0
    %1224 = vmatprep.subr.mxu0 0.0
    %1225 = vmatpush1.msra.mxu0 0.0
    %1226 = vmatprep.subr.mxu0 0.0
    %1227 = vmatpush1.msra.mxu0 0.0
    %1228 = vmatprep.subr.mxu0 0.0
    %1229 = vmatpush1.msra.mxu0 0.0
    %1230 = vmatprep.subr.mxu0 0.0
    %1231 = vmatpush1.msra.mxu0 0.0
    %1232 = vmatprep.subr.mxu0 0.0
    %1233 = vmatpush1.msra.mxu0 0.0
    %1234 = vmatprep.subr.mxu0 0.0
    %1235 = vmatpush1.msra.mxu0 0.0
    %1236 = vmatprep.subr.mxu0 0.0
    %1237 = vmatpush1.msra.mxu0 0.0
    %1238 = vmatprep.subr.mxu0 0.0
    %1239 = vmatpush1.msra.mxu0 0.0
    %1240 = vmatprep.subr.mxu0 0.0
    %1241 = vmatpush1.msra.mxu0 0.0
    %1242 = vmatprep.subr.mxu0 0.0
    %1243 = vmatpush1.msra.mxu0 0.0
    %1244 = vmatprep.subr.mxu0 0.0
    %1245 = vmatpush1.msra.mxu0 0.0
    %1246 = vmatprep.subr.mxu0 0.0
    %1247 = vmatpush1.msra.mxu0 0.0
    %1248 = vmatprep.subr.mxu0 0.0
    %1249 = vmatpush1.msra.mxu0 0.0
    %1250 = vmatprep.subr.mxu0 0.0
    %1251 = vmatpush1.msra.mxu0 0.0
    %1252 = vmatprep.subr.mxu0 0.0
    %1253 = vmatpush1.msra.mxu0 0.0
    %1254 = vmatprep.subr.mxu0 0.0
    %1255 = vmatpush1.msra.mxu0 0.0
    %1256 = vmatprep.subr.mxu0 0.0
    %1257 = vmatpush1.msra.mxu0 0.0
    %1258 = vmatprep.mubr.f32.mxu0 0.0
    %1259 = vmatmul.mubr.f32.gmra.mrb[0].mxu0 %v1189
    %v1260 = vpop.f32.mrb[0].mxu0
    %v1261 = vadd.f32 0.0, %v1260
    %v1262 = vpop.f32.mrb[0].mxu0
    %1263 = vmatprep.mubr.f32.mxu0 0.0
    %1264 = vmatmul.mubr.f32.gmra.mrb[0].mxu0 %v1192
    %v1265 = vpop.f32.mrb[0].mxu0
    %v1266 = vadd.f32 0.0, %v1265
    %v1267 = vpop.f32.mrb[0].mxu0
    %1268 = vdwg.mxu0
    %v1269 = vadd.f32 %v978, %v1261
    %v1270 = vadd.f32 %v983, %v1266
    %1271 = vrot.lane.b32.xlu0 %v218, 104
    %v1272 = vpop.permute.xlu0 %1271
    %1273 = vrot.lane.b32.xlu0 %v223, 104
    %v1274 = vpop.permute.xlu0 %1273
    %1275 = vrot.lane.b32.xlu0 %v218, 72
    %v1276 = vpop.permute.xlu0 %1275
    %1277 = vrot.lane.b32.xlu0 %v223, 72
    %v1278 = vpop.permute.xlu0 %1277
    %v1279 = vsel %vm427, %v1272, 0
    %v1281 = vsel %vm427, %v1274, 0
    %v1283 = vsel %vm427, %v1276, 0
    %v1285 = vsel %vm427, %v1278, 0
    %1287 = vmatprep.subr.mxu0 0.0
    %1288 = vmatpush1.xpose.msra.mxu0 %v1283
    %1289 = vmatprep.subr.mxu0 0.0
    %1290 = vmatpush1.xpose.msra.mxu0 %v1285
    %1291 = vmatprep.subr.mxu0 0.0
    %1292 = vmatpush1.xpose.msra.mxu0 0.0
    %1293 = vmatprep.subr.mxu0 0.0
    %1294 = vmatpush1.xpose.msra.mxu0 0.0
    %1295 = vmatprep.subr.mxu0 0.0
    %1296 = vmatpush1.xpose.msra.mxu0 0.0
    %1297 = vmatprep.subr.mxu0 0.0
    %1298 = vmatpush1.xpose.msra.mxu0 0.0
    %1299 = vmatprep.subr.mxu0 0.0
    %1300 = vmatpush1.xpose.msra.mxu0 0.0
    %1301 = vmatprep.subr.mxu0 0.0
    %1302 = vmatpush1.xpose.msra.mxu0 0.0
    %1303 = vmatprep.subr.mxu0 0.0
    %1304 = vmatpush1.xpose.msra.mxu0 0.0
    %1305 = vmatprep.subr.mxu0 0.0
    %1306 = vmatpush1.xpose.msra.mxu0 0.0
    %1307 = vmatprep.subr.mxu0 0.0
    %1308 = vmatpush1.xpose.msra.mxu0 0.0
    %1309 = vmatprep.subr.mxu0 0.0
    %1310 = vmatpush1.xpose.msra.mxu0 0.0
    %1311 = vmatprep.subr.mxu0 0.0
    %1312 = vmatpush1.xpose.msra.mxu0 0.0
    %1313 = vmatprep.subr.mxu0 0.0
    %1314 = vmatpush1.xpose.msra.mxu0 0.0
    %1315 = vmatprep.subr.mxu0 0.0
    %1316 = vmatpush1.xpose.msra.mxu0 0.0
    %1317 = vmatprep.subr.mxu0 0.0
    %1318 = vmatpush1.xpose.msra.mxu0 0.0
    %1319 = vmatprep.subr.mxu0 0.0
    %1320 = vmatpush1.xpose.msra.mxu0 0.0
    %1321 = vmatprep.subr.mxu0 0.0
    %1322 = vmatpush1.xpose.msra.mxu0 0.0
    %1323 = vmatprep.subr.mxu0 0.0
    %1324 = vmatpush1.xpose.msra.mxu0 0.0
    %1325 = vmatprep.subr.mxu0 0.0
    %1326 = vmatpush1.xpose.msra.mxu0 0.0
    %1327 = vmatprep.subr.mxu0 0.0
    %1328 = vmatpush1.xpose.msra.mxu0 0.0
    %1329 = vmatprep.subr.mxu0 0.0
    %1330 = vmatpush1.xpose.msra.mxu0 0.0
    %1331 = vmatprep.subr.mxu0 0.0
    %1332 = vmatpush1.xpose.msra.mxu0 0.0
    %1333 = vmatprep.subr.mxu0 0.0
    %1334 = vmatpush1.xpose.msra.mxu0 0.0
    %1335 = vmatprep.subr.mxu0 0.0
    %1336 = vmatpush1.xpose.msra.mxu0 0.0
    %1337 = vmatprep.subr.mxu0 0.0
    %1338 = vmatpush1.xpose.msra.mxu0 0.0
    %1339 = vmatprep.subr.mxu0 0.0
    %1340 = vmatpush1.xpose.msra.mxu0 0.0
    %1341 = vmatprep.subr.mxu0 0.0
    %1342 = vmatpush1.xpose.msra.mxu0 0.0
    %1343 = vmatprep.subr.mxu0 0.0
    %1344 = vmatpush1.xpose.msra.mxu0 0.0
    %1345 = vmatprep.subr.mxu0 0.0
    %1346 = vmatpush1.xpose.msra.mxu0 0.0
    %1347 = vmatprep.subr.mxu0 0.0
    %1348 = vmatpush1.xpose.msra.mxu0 0.0
    %1349 = vmatprep.subr.mxu0 0.0
    %1350 = vmatpush1.xpose.msra.mxu0 0.0
    %1351 = vmatprep.mubr.f32.mxu0 0.0
    %1352 = vmatmul.mubr.f32.gmra.mrb[0].mxu0 %v1279
    %v1353 = vpop.f32.mrb[0].mxu0
    %v1354 = vadd.f32 %v129, %v1353
    %v1355 = vpop.f32.mrb[0].mxu0
    %1356 = vmatprep.mubr.f32.mxu0 0.0
    %1357 = vmatmul.mubr.f32.gmra.mrb[0].mxu0 %v1281
    %v1358 = vpop.f32.mrb[0].mxu0
    %v1359 = vadd.f32 %v130, %v1358
    %v1360 = vpop.f32.mrb[0].mxu0
    %1361 = vdwg.mxu0
    %v1362 = vsel %vm511, %v1354, -inf
    %1363 = vmax.xlane.f32.xlu0 %v1362
    %v1364 = vpop.xlane.xlu0 %1363
    %v1365 = vsel %vm511, %v1359, -inf
    %1366 = vmax.xlane.f32.xlu0 %v1365
    %v1367 = vpop.xlane.xlu0 %1366
    %v1368 = vsub.f32 %v1354, %v1364
    %v1369 = vsub.f32 %v1359, %v1367
    %v1370 = vmul.f32 %v1368, 1.442695
    %v1371 = vpow.pop %v1370
    %v1372 = vmul.f32 %v1369, 1.442695
    %v1373 = vpow.pop %v1372
    %v1374 = vsel %vm511, %v1371, 0.0
    %1375 = vadd.xlane.f32.xlu0 %v1374
    %v1376 = vpop.xlane.xlu0 %1375
    %v1377 = vsel %vm511, %v1373, 0.0
    %1378 = vadd.xlane.f32.xlu0 %v1377
    %v1379 = vpop.xlane.xlu0 %1378
    %v1380 = vrcp.pop %v1376
    %v1381 = vmul.f32 %v1371, %v1380
    %v1382 = vrcp.pop %v1379
    %v1383 = vmul.f32 %v1373, %v1382
    %1384 = vrot.lane.b32.xlu0 %v218, 40
    %v1385 = vpop.permute.xlu0 %1384
    %1386 = vrot.lane.b32.xlu0 %v223, 40
    %v1387 = vpop.permute.xlu0 %1386
    %v1391 = vsel %vm511, %v1381, 0
    %v1394 = vsel %vm511, %v1383, 0
    %1396 = vmatprep.subr.mxu0 0.0
    %1397 = vmatpush1.msra.mxu0 %v1385
    %1398 = vmatprep.subr.mxu0 0.0
    %1399 = vmatpush1.msra.mxu0 %v1387
    %1400 = vmatprep.subr.mxu0 0.0
    %1401 = vmatpush1.msra.mxu0 0.0
    %1402 = vmatprep.subr.mxu0 0.0
    %1403 = vmatpush1.msra.mxu0 0.0
    %1404 = vmatprep.subr.mxu0 0.0
    %1405 = vmatpush1.msra.mxu0 0.0
    %1406 = vmatprep.subr.mxu0 0.0
    %1407 = vmatpush1.msra.mxu0 0.0
    %1408 = vmatprep.subr.mxu0 0.0
    %1409 = vmatpush1.msra.mxu0 0.0
    %1410 = vmatprep.subr.mxu0 0.0
    %1411 = vmatpush1.msra.mxu0 0.0
    %1412 = vmatprep.subr.mxu0 0.0
    %1413 = vmatpush1.msra.mxu0 0.0
    %1414 = vmatprep.subr.mxu0 0.0
    %1415 = vmatpush1.msra.mxu0 0.0
    %1416 = vmatprep.subr.mxu0 0.0
    %1417 = vmatpush1.msra.mxu0 0.0
    %1418 = vmatprep.subr.mxu0 0.0
    %1419 = vmatpush1.msra.mxu0 0.0
    %1420 = vmatprep.subr.mxu0 0.0
    %1421 = vmatpush1.msra.mxu0 0.0
    %1422 = vmatprep.subr.mxu0 0.0
    %1423 = vmatpush1.msra.mxu0 0.0
    %1424 = vmatprep.subr.mxu0 0.0
    %1425 = vmatpush1.msra.mxu0 0.0
    %1426 = vmatprep.subr.mxu0 0.0
    %1427 = vmatpush1.msra.mxu0 0.0
    %1428 = vmatprep.subr.mxu0 0.0
    %1429 = vmatpush1.msra.mxu0 0.0
    %1430 = vmatprep.subr.mxu0 0.0
    %1431 = vmatpush1.msra.mxu0 0.0
    %1432 = vmatprep.subr.mxu0 0.0
    %1433 = vmatpush1.msra.mxu0 0.0
    %1434 = vmatprep.subr.mxu0 0.0
    %1435 = vmatpush1.msra.mxu0 0.0
    %1436 = vmatprep.subr.mxu0 0.0
    %1437 = vmatpush1.msra.mxu0 0.0
    %1438 = vmatprep.subr.mxu0 0.0
    %1439 = vmatpush1.msra.mxu0 0.0
    %1440 = vmatprep.subr.mxu0 0.0
    %1441 = vmatpush1.msra.mxu0 0.0
    %1442 = vmatprep.subr.mxu0 0.0
    %1443 = vmatpush1.msra.mxu0 0.0
    %1444 = vmatprep.subr.mxu0 0.0
    %1445 = vmatpush1.msra.mxu0 0.0
    %1446 = vmatprep.subr.mxu0 0.0
    %1447 = vmatpush1.msra.mxu0 0.0
    %1448 = vmatprep.subr.mxu0 0.0
    %1449 = vmatpush1.msra.mxu0 0.0
    %1450 = vmatprep.subr.mxu0 0.0
    %1451 = vmatpush1.msra.mxu0 0.0
    %1452 = vmatprep.subr.mxu0 0.0
    %1453 = vmatpush1.msra.mxu0 0.0
    %1454 = vmatprep.subr.mxu0 0.0
    %1455 = vmatpush1.msra.mxu0 0.0
    %1456 = vmatprep.subr.mxu0 0.0
    %1457 = vmatpush1.msra.mxu0 0.0
    %1458 = vmatprep.subr.mxu0 0.0
    %1459 = vmatpush1.msra.mxu0 0.0
    %1460 = vmatprep.mubr.f32.mxu0 0.0
    %1461 = vmatmul.mubr.f32.gmra.mrb[0].mxu0 %v1391
    %v1462 = vpop.f32.mrb[0].mxu0
    %v1463 = vadd.f32 0.0, %v1462
    %v1464 = vpop.f32.mrb[0].mxu0
    %1465 = vmatprep.mubr.f32.mxu0 0.0
    %1466 = vmatmul.mubr.f32.gmra.mrb[0].mxu0 %v1394
    %v1467 = vpop.f32.mrb[0].mxu0
    %v1468 = vadd.f32 0.0, %v1467
    %v1469 = vpop.f32.mrb[0].mxu0
    %1470 = vdwg.mxu0
    %s1471 = scalar_lea.vmem %s13, 24
    %v1472 = vld [vmem:[%s1471] sm:$0xff]
    %v1474 = vsel %vm427, %v1463, 0
    %v1477 = vsel %vm427, %v1468, 0
    %1479 = vmatprep.subr.mxu0 0.0
    %1480 = vmatpush1.msra.mxu0 %v1472
    %1481 = vmatprep.subr.mxu0 0.0
    %1482 = vmatpush1.msra.mxu0 0.0
    %1483 = vmatprep.subr.mxu0 0.0
    %1484 = vmatpush1.msra.mxu0 0.0
    %1485 = vmatprep.subr.mxu0 0.0
    %1486 = vmatpush1.msra.mxu0 0.0
    %1487 = vmatprep.subr.mxu0 0.0
    %1488 = vmatpush1.msra.mxu0 0.0
    %1489 = vmatprep.subr.mxu0 0.0
    %1490 = vmatpush1.msra.mxu0 0.0
    %1491 = vmatprep.subr.mxu0 0.0
    %1492 = vmatpush1.msra.mxu0 0.0
    %1493 = vmatprep.subr.mxu0 0.0
    %1494 = vmatpush1.msra.mxu0 0.0
    %1495 = vmatprep.subr.mxu0 0.0
    %1496 = vmatpush1.msra.mxu0 0.0
    %1497 = vmatprep.subr.mxu0 0.0
    %1498 = vmatpush1.msra.mxu0 0.0
    %1499 = vmatprep.subr.mxu0 0.0
    %1500 = vmatpush1.msra.mxu0 0.0
    %1501 = vmatprep.subr.mxu0 0.0
    %1502 = vmatpush1.msra.mxu0 0.0
    %1503 = vmatprep.subr.mxu0 0.0
    %1504 = vmatpush1.msra.mxu0 0.0
    %1505 = vmatprep.subr.mxu0 0.0
    %1506 = vmatpush1.msra.mxu0 0.0
    %1507 = vmatprep.subr.mxu0 0.0
    %1508 = vmatpush1.msra.mxu0 0.0
    %1509 = vmatprep.subr.mxu0 0.0
    %1510 = vmatpush1.msra.mxu0 0.0
    %1511 = vmatprep.subr.mxu0 0.0
    %1512 = vmatpush1.msra.mxu0 0.0
    %1513 = vmatprep.subr.mxu0 0.0
    %1514 = vmatpush1.msra.mxu0 0.0
    %1515 = vmatprep.subr.mxu0 0.0
    %1516 = vmatpush1.msra.mxu0 0.0
    %1517 = vmatprep.subr.mxu0 0.0
    %1518 = vmatpush1.msra.mxu0 0.0
    %1519 = vmatprep.subr.mxu0 0.0
    %1520 = vmatpush1.msra.mxu0 0.0
    %1521 = vmatprep.subr.mxu0 0.0
    %1522 = vmatpush1.msra.mxu0 0.0
    %1523 = vmatprep.subr.mxu0 0.0
    %1524 = vmatpush1.msra.mxu0 0.0
    %1525 = vmatprep.subr.mxu0 0.0
    %1526 = vmatpush1.msra.mxu0 0.0
    %1527 = vmatprep.subr.mxu0 0.0
    %1528 = vmatpush1.msra.mxu0 0.0
    %1529 = vmatprep.subr.mxu0 0.0
    %1530 = vmatpush1.msra.mxu0 0.0
    %1531 = vmatprep.subr.mxu0 0.0
    %1532 = vmatpush1.msra.mxu0 0.0
    %1533 = vmatprep.subr.mxu0 0.0
    %1534 = vmatpush1.msra.mxu0 0.0
    %1535 = vmatprep.subr.mxu0 0.0
    %1536 = vmatpush1.msra.mxu0 0.0
    %1537 = vmatprep.subr.mxu0 0.0
    %1538 = vmatpush1.msra.mxu0 0.0
    %1539 = vmatprep.subr.mxu0 0.0
    %1540 = vmatpush1.msra.mxu0 0.0
    %1541 = vmatprep.subr.mxu0 0.0
    %1542 = vmatpush1.msra.mxu0 0.0
    %1543 = vmatprep.mubr.f32.mxu0 0.0
    %1544 = vmatmul.mubr.f32.gmra.mrb[0].mxu0 %v1474
    %v1545 = vpop.f32.mrb[0].mxu0
    %v1546 = vadd.f32 0.0, %v1545
    %v1547 = vpop.f32.mrb[0].mxu0
    %1548 = vmatprep.mubr.f32.mxu0 0.0
    %1549 = vmatmul.mubr.f32.gmra.mrb[0].mxu0 %v1477
    %v1550 = vpop.f32.mrb[0].mxu0
    %v1551 = vadd.f32 0.0, %v1550
    %v1552 = vpop.f32.mrb[0].mxu0
    %1553 = vdwg.mxu0
    %v1554 = vadd.f32 %v1269, %v1546
    %v1555 = vadd.f32 %v1270, %v1551
    %v1557 = vlaneseq
    %v1558 = vshrl.u32 %v1557, 7
    %v1559 = vsub.s32 0, %v1558
    %v1560 = vrot.slane %v420, %v1559
    %v1562 = vadd.f32 %v1554, %v1560
    %v1563 = vadd.f32 %v1555, %v1560
    %v1564 = vld [vmem:[%s27] sm:$0x1]
    %v1566 = vsel %vm427, %v304, 0
    %v1569 = vsel %vm427, %v309, 0
    %v1572 = vsel %vm427, %v402, 0
    %v1575 = vsel %vm427, %v407, 0
    %v1578 = vsel %vm427, %v412, 0
    %v1581 = vsel %vm427, %v417, 0
    %1583 = vmatprep.subr.mxu0 0.0
    %1584 = vmatpush1.xpose.msra.mxu0 %v1572
    %1585 = vmatprep.subr.mxu0 0.0
    %1586 = vmatpush1.xpose.msra.mxu0 %v1575
    %1587 = vmatprep.subr.mxu0 0.0
    %1588 = vmatpush1.xpose.msra.mxu0 %v1578
    %1589 = vmatprep.subr.mxu0 0.0
    %1590 = vmatpush1.xpose.msra.mxu0 %v1581
    %1591 = vmatprep.subr.mxu0 0.0
    %1592 = vmatpush1.xpose.msra.mxu0 0.0
    %1593 = vmatprep.subr.mxu0 0.0
    %1594 = vmatpush1.xpose.msra.mxu0 0.0
    %1595 = vmatprep.subr.mxu0 0.0
    %1596 = vmatpush1.xpose.msra.mxu0 0.0
    %1597 = vmatprep.subr.mxu0 0.0
    %1598 = vmatpush1.xpose.msra.mxu0 0.0
    %1599 = vmatprep.subr.mxu0 0.0
    %1600 = vmatpush1.xpose.msra.mxu0 0.0
    %1601 = vmatprep.subr.mxu0 0.0
    %1602 = vmatpush1.xpose.msra.mxu0 0.0
    %1603 = vmatprep.subr.mxu0 0.0
    %1604 = vmatpush1.xpose.msra.mxu0 0.0
    %1605 = vmatprep.subr.mxu0 0.0
    %1606 = vmatpush1.xpose.msra.mxu0 0.0
    %1607 = vmatprep.subr.mxu0 0.0
    %1608 = vmatpush1.xpose.msra.mxu0 0.0
    %1609 = vmatprep.subr.mxu0 0.0
    %1610 = vmatpush1.xpose.msra.mxu0 0.0
    %1611 = vmatprep.subr.mxu0 0.0
    %1612 = vmatpush1.xpose.msra.mxu0 0.0
    %1613 = vmatprep.subr.mxu0 0.0
    %1614 = vmatpush1.xpose.msra.mxu0 0.0
    %1615 = vmatprep.subr.mxu0 0.0
    %1616 = vmatpush1.xpose.msra.mxu0 0.0
    %1617 = vmatprep.subr.mxu0 0.0
    %1618 = vmatpush1.xpose.msra.mxu0 0.0
    %1619 = vmatprep.subr.mxu0 0.0
    %1620 = vmatpush1.xpose.msra.mxu0 0.0
    %1621 = vmatprep.subr.mxu0 0.0
    %1622 = vmatpush1.xpose.msra.mxu0 0.0
    %1623 = vmatprep.subr.mxu0 0.0
    %1624 = vmatpush1.xpose.msra.mxu0 0.0
    %1625 = vmatprep.subr.mxu0 0.0
    %1626 = vmatpush1.xpose.msra.mxu0 0.0
    %1627 = vmatprep.subr.mxu0 0.0
    %1628 = vmatpush1.xpose.msra.mxu0 0.0
    %1629 = vmatprep.subr.mxu0 0.0
    %1630 = vmatpush1.xpose.msra.mxu0 0.0
    %1631 = vmatprep.subr.mxu0 0.0
    %1632 = vmatpush1.xpose.msra.mxu0 0.0
    %1633 = vmatprep.subr.mxu0 0.0
    %1634 = vmatpush1.xpose.msra.mxu0 0.0
    %1635 = vmatprep.subr.mxu0 0.0
    %1636 = vmatpush1.xpose.msra.mxu0 0.0
    %1637 = vmatprep.subr.mxu0 0.0
    %1638 = vmatpush1.xpose.msra.mxu0 0.0
    %1639 = vmatprep.subr.mxu0 0.0
    %1640 = vmatpush1.xpose.msra.mxu0 0.0
    %1641 = vmatprep.subr.mxu0 0.0
    %1642 = vmatpush1.xpose.msra.mxu0 0.0
    %1643 = vmatprep.subr.mxu0 0.0
    %1644 = vmatpush1.xpose.msra.mxu0 0.0
    %1645 = vmatprep.subr.mxu0 0.0
    %1646 = vmatpush1.xpose.msra.mxu0 0.0
    %1647 = vmatprep.mubr.f32.mxu0 0.0
    %1648 = vmatmul.mubr.f32.gmra.mrb[0].mxu0 %v1566
    %v1649 = vpop.f32.mrb[0].mxu0
    %v1650 = vadd.f32 %v131, %v1649
    %v1651 = vpop.f32.mrb[0].mxu0
    %1652 = vmatprep.mubr.f32.mxu0 0.0
    %1653 = vmatmul.mubr.f32.gmra.mrb[0].mxu0 %v1569
    %v1654 = vpop.f32.mrb[0].mxu0
    %v1655 = vadd.f32 %v132, %v1654
    %v1656 = vpop.f32.mrb[0].mxu0
    %1657 = vdwg.mxu0
    %v1658 = vsel %vm144, %v1650, -inf
    %1659 = vmax.xlane.f32.xlu0 %v1658
    %v1660 = vpop.xlane.xlu0 %1659
    %v1661 = vsel %vm144, %v1655, -inf
    %1662 = vmax.xlane.f32.xlu0 %v1661
    %v1663 = vpop.xlane.xlu0 %1662
    %v1664 = vsub.f32 %v1650, %v1660
    %v1665 = vsub.f32 %v1655, %v1663
    %v1666 = vmul.f32 %v1664, 1.442695
    %v1667 = vpow.pop %v1666
    %v1668 = vmul.f32 %v1665, 1.442695
    %v1669 = vpow.pop %v1668
    %v1670 = vsel %vm144, %v1667, 0.0
    %1671 = vadd.xlane.f32.xlu0 %v1670
    %v1672 = vpop.xlane.xlu0 %1671
    %v1673 = vsel %vm144, %v1669, 0.0
    %1674 = vadd.xlane.f32.xlu0 %v1673
    %v1675 = vpop.xlane.xlu0 %1674
    %v1676 = vrcp.pop %v1672
    %v1677 = vmul.f32 %v1667, %v1676
    %v1678 = vrcp.pop %v1675
    %v1679 = vmul.f32 %v1669, %v1678
    %1680 = vrot.lane.b32.xlu0 %v402, 96
    %v1681 = vpop.permute.xlu0 %1680
    %1682 = vrot.lane.b32.xlu0 %v407, 96
    %v1683 = vpop.permute.xlu0 %1682
    %1684 = vrot.lane.b32.xlu0 %v412, 96
    %v1685 = vpop.permute.xlu0 %1684
    %1686 = vrot.lane.b32.xlu0 %v417, 96
    %v1687 = vpop.permute.xlu0 %1686
    %v1693 = vsel %vm144, %v1677, 0
    %v1696 = vsel %vm144, %v1679, 0
    %1698 = vmatprep.subr.mxu0 0.0
    %1699 = vmatpush1.msra.mxu0 %v1681
    %1700 = vmatprep.subr.mxu0 0.0
    %1701 = vmatpush1.msra.mxu0 %v1683
    %1702 = vmatprep.subr.mxu0 0.0
    %1703 = vmatpush1.msra.mxu0 %v1685
    %1704 = vmatprep.subr.mxu0 0.0
    %1705 = vmatpush1.msra.mxu0 %v1687
    %1706 = vmatprep.subr.mxu0 0.0
    %1707 = vmatpush1.msra.mxu0 0.0
    %1708 = vmatprep.subr.mxu0 0.0
    %1709 = vmatpush1.msra.mxu0 0.0
    %1710 = vmatprep.subr.mxu0 0.0
    %1711 = vmatpush1.msra.mxu0 0.0
    %1712 = vmatprep.subr.mxu0 0.0
    %1713 = vmatpush1.msra.mxu0 0.0
    %1714 = vmatprep.subr.mxu0 0.0
    %1715 = vmatpush1.msra.mxu0 0.0
    %1716 = vmatprep.subr.mxu0 0.0
    %1717 = vmatpush1.msra.mxu0 0.0
    %1718 = vmatprep.subr.mxu0 0.0
    %1719 = vmatpush1.msra.mxu0 0.0
    %1720 = vmatprep.subr.mxu0 0.0
    %1721 = vmatpush1.msra.mxu0 0.0
    %1722 = vmatprep.subr.mxu0 0.0
    %1723 = vmatpush1.msra.mxu0 0.0
    %1724 = vmatprep.subr.mxu0 0.0
    %1725 = vmatpush1.msra.mxu0 0.0
    %1726 = vmatprep.subr.mxu0 0.0
    %1727 = vmatpush1.msra.mxu0 0.0
    %1728 = vmatprep.subr.mxu0 0.0
    %1729 = vmatpush1.msra.mxu0 0.0
    %1730 = vmatprep.subr.mxu0 0.0
    %1731 = vmatpush1.msra.mxu0 0.0
    %1732 = vmatprep.subr.mxu0 0.0
    %1733 = vmatpush1.msra.mxu0 0.0
    %1734 = vmatprep.subr.mxu0 0.0
    %1735 = vmatpush1.msra.mxu0 0.0
    %1736 = vmatprep.subr.mxu0 0.0
    %1737 = vmatpush1.msra.mxu0 0.0
    %1738 = vmatprep.subr.mxu0 0.0
    %1739 = vmatpush1.msra.mxu0 0.0
    %1740 = vmatprep.subr.mxu0 0.0
    %1741 = vmatpush1.msra.mxu0 0.0
    %1742 = vmatprep.subr.mxu0 0.0
    %1743 = vmatpush1.msra.mxu0 0.0
    %1744 = vmatprep.subr.mxu0 0.0
    %1745 = vmatpush1.msra.mxu0 0.0
    %1746 = vmatprep.subr.mxu0 0.0
    %1747 = vmatpush1.msra.mxu0 0.0
    %1748 = vmatprep.subr.mxu0 0.0
    %1749 = vmatpush1.msra.mxu0 0.0
    %1750 = vmatprep.subr.mxu0 0.0
    %1751 = vmatpush1.msra.mxu0 0.0
    %1752 = vmatprep.subr.mxu0 0.0
    %1753 = vmatpush1.msra.mxu0 0.0
    %1754 = vmatprep.subr.mxu0 0.0
    %1755 = vmatpush1.msra.mxu0 0.0
    %1756 = vmatprep.subr.mxu0 0.0
    %1757 = vmatpush1.msra.mxu0 0.0
    %1758 = vmatprep.subr.mxu0 0.0
    %1759 = vmatpush1.msra.mxu0 0.0
    %1760 = vmatprep.subr.mxu0 0.0
    %1761 = vmatpush1.msra.mxu0 0.0
    %1762 = vmatprep.mubr.f32.mxu0 0.0
    %1763 = vmatmul.mubr.f32.gmra.mrb[0].mxu0 %v1693
    %v1764 = vpop.f32.mrb[0].mxu0
    %v1765 = vadd.f32 0.0, %v1764
    %v1766 = vpop.f32.mrb[0].mxu0
    %1767 = vmatprep.mubr.f32.mxu0 0.0
    %1768 = vmatmul.mubr.f32.gmra.mrb[0].mxu0 %v1696
    %v1769 = vpop.f32.mrb[0].mxu0
    %v1770 = vadd.f32 0.0, %v1769
    %v1771 = vpop.f32.mrb[0].mxu0
    %1772 = vdwg.mxu0
    %v1773 = vld [vmem:[%s25] sm:$0xff]
    %1774 = vrot.lane.b32.xlu0 %v304, 120
    %v1775 = vpop.permute.xlu0 %1774
    %1776 = vrot.lane.b32.xlu0 %v309, 120
    %v1777 = vpop.permute.xlu0 %1776
    %1778 = vrot.lane.b32.xlu0 %v402, 120
    %v1779 = vpop.permute.xlu0 %1778
    %1780 = vrot.lane.b32.xlu0 %v407, 120
    %v1781 = vpop.permute.xlu0 %1780
    %1782 = vrot.lane.b32.xlu0 %v412, 120
    %v1783 = vpop.permute.xlu0 %1782
    %1784 = vrot.lane.b32.xlu0 %v417, 120
    %v1785 = vpop.permute.xlu0 %1784
    %v1786 = vsel %vm427, %v1775, 0
    %v1788 = vsel %vm427, %v1777, 0
    %v1790 = vsel %vm427, %v1779, 0
    %v1792 = vsel %vm427, %v1781, 0
    %v1794 = vsel %vm427, %v1783, 0
    %v1796 = vsel %vm427, %v1785, 0
    %1798 = vmatprep.subr.mxu0 0.0
    %1799 = vmatpush1.xpose.msra.mxu0 %v1790
    %1800 = vmatprep.subr.mxu0 0.0
    %1801 = vmatpush1.xpose.msra.mxu0 %v1792
    %1802 = vmatprep.subr.mxu0 0.0
    %1803 = vmatpush1.xpose.msra.mxu0 %v1794
    %1804 = vmatprep.subr.mxu0 0.0
    %1805 = vmatpush1.xpose.msra.mxu0 %v1796
    %1806 = vmatprep.subr.mxu0 0.0
    %1807 = vmatpush1.xpose.msra.mxu0 0.0
    %1808 = vmatprep.subr.mxu0 0.0
    %1809 = vmatpush1.xpose.msra.mxu0 0.0
    %1810 = vmatprep.subr.mxu0 0.0
    %1811 = vmatpush1.xpose.msra.mxu0 0.0
    %1812 = vmatprep.subr.mxu0 0.0
    %1813 = vmatpush1.xpose.msra.mxu0 0.0
    %1814 = vmatprep.subr.mxu0 0.0
    %1815 = vmatpush1.xpose.msra.mxu0 0.0
    %1816 = vmatprep.subr.mxu0 0.0
    %1817 = vmatpush1.xpose.msra.mxu0 0.0
    %1818 = vmatprep.subr.mxu0 0.0
    %1819 = vmatpush1.xpose.msra.mxu0 0.0
    %1820 = vmatprep.subr.mxu0 0.0
    %1821 = vmatpush1.xpose.msra.mxu0 0.0
    %1822 = vmatprep.subr.mxu0 0.0
    %1823 = vmatpush1.xpose.msra.mxu0 0.0
    %1824 = vmatprep.subr.mxu0 0.0
    %1825 = vmatpush1.xpose.msra.mxu0 0.0
    %1826 = vmatprep.subr.mxu0 0.0
    %1827 = vmatpush1.xpose.msra.mxu0 0.0
    %1828 = vmatprep.subr.mxu0 0.0
    %1829 = vmatpush1.xpose.msra.mxu0 0.0
    %1830 = vmatprep.subr.mxu0 0.0
    %1831 = vmatpush1.xpose.msra.mxu0 0.0
    %1832 = vmatprep.subr.mxu0 0.0
    %1833 = vmatpush1.xpose.msra.mxu0 0.0
    %1834 = vmatprep.subr.mxu0 0.0
    %1835 = vmatpush1.xpose.msra.mxu0 0.0
    %1836 = vmatprep.subr.mxu0 0.0
    %1837 = vmatpush1.xpose.msra.mxu0 0.0
    %1838 = vmatprep.subr.mxu0 0.0
    %1839 = vmatpush1.xpose.msra.mxu0 0.0
    %1840 = vmatprep.subr.mxu0 0.0
    %1841 = vmatpush1.xpose.msra.mxu0 0.0
    %1842 = vmatprep.subr.mxu0 0.0
    %1843 = vmatpush1.xpose.msra.mxu0 0.0
    %1844 = vmatprep.subr.mxu0 0.0
    %1845 = vmatpush1.xpose.msra.mxu0 0.0
    %1846 = vmatprep.subr.mxu0 0.0
    %1847 = vmatpush1.xpose.msra.mxu0 0.0
    %1848 = vmatprep.subr.mxu0 0.0
    %1849 = vmatpush1.xpose.msra.mxu0 0.0
    %1850 = vmatprep.subr.mxu0 0.0
    %1851 = vmatpush1.xpose.msra.mxu0 0.0
    %1852 = vmatprep.subr.mxu0 0.0
    %1853 = vmatpush1.xpose.msra.mxu0 0.0
    %1854 = vmatprep.subr.mxu0 0.0
    %1855 = vmatpush1.xpose.msra.mxu0 0.0
    %1856 = vmatprep.subr.mxu0 0.0
    %1857 = vmatpush1.xpose.msra.mxu0 0.0
    %1858 = vmatprep.subr.mxu0 0.0
    %1859 = vmatpush1.xpose.msra.mxu0 0.0
    %1860 = vmatprep.subr.mxu0 0.0
    %1861 = vmatpush1.xpose.msra.mxu0 0.0
    %1862 = vmatprep.mubr.f32.mxu0 0.0
    %1863 = vmatmul.mubr.f32.gmra.mrb[0].mxu0 %v1786
    %v1864 = vpop.f32.mrb[0].mxu0
    %v1865 = vadd.f32 %v131, %v1864
    %v1866 = vpop.f32.mrb[0].mxu0
    %1867 = vmatprep.mubr.f32.mxu0 0.0
    %1868 = vmatmul.mubr.f32.gmra.mrb[0].mxu0 %v1788
    %v1869 = vpop.f32.mrb[0].mxu0
    %v1870 = vadd.f32 %v132, %v1869
    %v1871 = vpop.f32.mrb[0].mxu0
    %1872 = vdwg.mxu0
    %v1873 = vsel %vm144, %v1865, -inf
    %1874 = vmax.xlane.f32.xlu0 %v1873
    %v1875 = vpop.xlane.xlu0 %1874
    %v1876 = vsel %vm144, %v1870, -inf
    %1877 = vmax.xlane.f32.xlu0 %v1876
    %v1878 = vpop.xlane.xlu0 %1877
    %v1879 = vsub.f32 %v1865, %v1875
    %v1880 = vsub.f32 %v1870, %v1878
    %v1881 = vmul.f32 %v1879, 1.442695
    %v1882 = vpow.pop %v1881
    %v1883 = vmul.f32 %v1880, 1.442695
    %v1884 = vpow.pop %v1883
    %v1885 = vsel %vm144, %v1882, 0.0
    %1886 = vadd.xlane.f32.xlu0 %v1885
    %v1887 = vpop.xlane.xlu0 %1886
    %v1888 = vsel %vm144, %v1884, 0.0
    %1889 = vadd.xlane.f32.xlu0 %v1888
    %v1890 = vpop.xlane.xlu0 %1889
    %v1891 = vrcp.pop %v1887
    %v1892 = vmul.f32 %v1882, %v1891
    %v1893 = vrcp.pop %v1890
    %v1894 = vmul.f32 %v1884, %v1893
    %1895 = vrot.lane.b32.xlu0 %v402, 88
    %v1896 = vpop.permute.xlu0 %1895
    %1897 = vrot.lane.b32.xlu0 %v407, 88
    %v1898 = vpop.permute.xlu0 %1897
    %1899 = vrot.lane.b32.xlu0 %v412, 88
    %v1900 = vpop.permute.xlu0 %1899
    %1901 = vrot.lane.b32.xlu0 %v417, 88
    %v1902 = vpop.permute.xlu0 %1901
    %v1908 = vsel %vm144, %v1892, 0
    %v1911 = vsel %vm144, %v1894, 0
    %1913 = vmatprep.subr.mxu0 0.0
    %1914 = vmatpush1.msra.mxu0 %v1896
    %1915 = vmatprep.subr.mxu0 0.0
    %1916 = vmatpush1.msra.mxu0 %v1898
    %1917 = vmatprep.subr.mxu0 0.0
    %1918 = vmatpush1.msra.mxu0 %v1900
    %1919 = vmatprep.subr.mxu0 0.0
    %1920 = vmatpush1.msra.mxu0 %v1902
    %1921 = vmatprep.subr.mxu0 0.0
    %1922 = vmatpush1.msra.mxu0 0.0
    %1923 = vmatprep.subr.mxu0 0.0
    %1924 = vmatpush1.msra.mxu0 0.0
    %1925 = vmatprep.subr.mxu0 0.0
    %1926 = vmatpush1.msra.mxu0 0.0
    %1927 = vmatprep.subr.mxu0 0.0
    %1928 = vmatpush1.msra.mxu0 0.0
    %1929 = vmatprep.subr.mxu0 0.0
    %1930 = vmatpush1.msra.mxu0 0.0
    %1931 = vmatprep.subr.mxu0 0.0
    %1932 = vmatpush1.msra.mxu0 0.0
    %1933 = vmatprep.subr.mxu0 0.0
    %1934 = vmatpush1.msra.mxu0 0.0
    %1935 = vmatprep.subr.mxu0 0.0
    %1936 = vmatpush1.msra.mxu0 0.0
    %1937 = vmatprep.subr.mxu0 0.0
    %1938 = vmatpush1.msra.mxu0 0.0
    %1939 = vmatprep.subr.mxu0 0.0
    %1940 = vmatpush1.msra.mxu0 0.0
    %1941 = vmatprep.subr.mxu0 0.0
    %1942 = vmatpush1.msra.mxu0 0.0
    %1943 = vmatprep.subr.mxu0 0.0
    %1944 = vmatpush1.msra.mxu0 0.0
    %1945 = vmatprep.subr.mxu0 0.0
    %1946 = vmatpush1.msra.mxu0 0.0
    %1947 = vmatprep.subr.mxu0 0.0
    %1948 = vmatpush1.msra.mxu0 0.0
    %1949 = vmatprep.subr.mxu0 0.0
    %1950 = vmatpush1.msra.mxu0 0.0
    %1951 = vmatprep.subr.mxu0 0.0
    %1952 = vmatpush1.msra.mxu0 0.0
    %1953 = vmatprep.subr.mxu0 0.0
    %1954 = vmatpush1.msra.mxu0 0.0
    %1955 = vmatprep.subr.mxu0 0.0
    %1956 = vmatpush1.msra.mxu0 0.0
    %1957 = vmatprep.subr.mxu0 0.0
    %1958 = vmatpush1.msra.mxu0 0.0
    %1959 = vmatprep.subr.mxu0 0.0
    %1960 = vmatpush1.msra.mxu0 0.0
    %1961 = vmatprep.subr.mxu0 0.0
    %1962 = vmatpush1.msra.mxu0 0.0
    %1963 = vmatprep.subr.mxu0 0.0
    %1964 = vmatpush1.msra.mxu0 0.0
    %1965 = vmatprep.subr.mxu0 0.0
    %1966 = vmatpush1.msra.mxu0 0.0
    %1967 = vmatprep.subr.mxu0 0.0
    %1968 = vmatpush1.msra.mxu0 0.0
    %1969 = vmatprep.subr.mxu0 0.0
    %1970 = vmatpush1.msra.mxu0 0.0
    %1971 = vmatprep.subr.mxu0 0.0
    %1972 = vmatpush1.msra.mxu0 0.0
    %1973 = vmatprep.subr.mxu0 0.0
    %1974 = vmatpush1.msra.mxu0 0.0
    %1975 = vmatprep.subr.mxu0 0.0
    %1976 = vmatpush1.msra.mxu0 0.0
    %1977 = vmatprep.mubr.f32.mxu0 0.0
    %1978 = vmatmul.mubr.f32.gmra.mrb[0].mxu0 %v1908
    %v1979 = vpop.f32.mrb[0].mxu0
    %v1980 = vadd.f32 0.0, %v1979
    %v1981 = vpop.f32.mrb[0].mxu0
    %1982 = vmatprep.mubr.f32.mxu0 0.0
    %1983 = vmatmul.mubr.f32.gmra.mrb[0].mxu0 %v1911
    %v1984 = vpop.f32.mrb[0].mxu0
    %v1985 = vadd.f32 0.0, %v1984
    %v1986 = vpop.f32.mrb[0].mxu0
    %1987 = vdwg.mxu0
    %s1988 = scalar_lea.vmem %s25, 8
    %v1989 = vld [vmem:[%s1988] sm:$0xff]
    %v1991 = vsel %vm427, %v1980, 0
    %v1994 = vsel %vm427, %v1985, 0
    %1996 = vmatprep.subr.mxu0 0.0
    %1997 = vmatpush1.msra.mxu0 %v1989
    %1998 = vmatprep.subr.mxu0 0.0
    %1999 = vmatpush1.msra.mxu0 0.0
    %2000 = vmatprep.subr.mxu0 0.0
    %2001 = vmatpush1.msra.mxu0 0.0
    %2002 = vmatprep.subr.mxu0 0.0
    %2003 = vmatpush1.msra.mxu0 0.0
    %2004 = vmatprep.subr.mxu0 0.0
    %2005 = vmatpush1.msra.mxu0 0.0
    %2006 = vmatprep.subr.mxu0 0.0
    %2007 = vmatpush1.msra.mxu0 0.0
    %2008 = vmatprep.subr.mxu0 0.0
    %2009 = vmatpush1.msra.mxu0 0.0
    %2010 = vmatprep.subr.mxu0 0.0
    %2011 = vmatpush1.msra.mxu0 0.0
    %2012 = vmatprep.subr.mxu0 0.0
    %2013 = vmatpush1.msra.mxu0 0.0
    %2014 = vmatprep.subr.mxu0 0.0
    %2015 = vmatpush1.msra.mxu0 0.0
    %2016 = vmatprep.subr.mxu0 0.0
    %2017 = vmatpush1.msra.mxu0 0.0
    %2018 = vmatprep.subr.mxu0 0.0
    %2019 = vmatpush1.msra.mxu0 0.0
    %2020 = vmatprep.subr.mxu0 0.0
    %2021 = vmatpush1.msra.mxu0 0.0
    %2022 = vmatprep.subr.mxu0 0.0
    %2023 = vmatpush1.msra.mxu0 0.0
    %2024 = vmatprep.subr.mxu0 0.0
    %2025 = vmatpush1.msra.mxu0 0.0
    %2026 = vmatprep.subr.mxu0 0.0
    %2027 = vmatpush1.msra.mxu0 0.0
    %2028 = vmatprep.subr.mxu0 0.0
    %2029 = vmatpush1.msra.mxu0 0.0
    %2030 = vmatprep.subr.mxu0 0.0
    %2031 = vmatpush1.msra.mxu0 0.0
    %2032 = vmatprep.subr.mxu0 0.0
    %2033 = vmatpush1.msra.mxu0 0.0
    %2034 = vmatprep.subr.mxu0 0.0
    %2035 = vmatpush1.msra.mxu0 0.0
    %2036 = vmatprep.subr.mxu0 0.0
    %2037 = vmatpush1.msra.mxu0 0.0
    %2038 = vmatprep.subr.mxu0 0.0
    %2039 = vmatpush1.msra.mxu0 0.0
    %2040 = vmatprep.subr.mxu0 0.0
    %2041 = vmatpush1.msra.mxu0 0.0
    %2042 = vmatprep.subr.mxu0 0.0
    %2043 = vmatpush1.msra.mxu0 0.0
    %2044 = vmatprep.subr.mxu0 0.0
    %2045 = vmatpush1.msra.mxu0 0.0
    %2046 = vmatprep.subr.mxu0 0.0
    %2047 = vmatpush1.msra.mxu0 0.0
    %2048 = vmatprep.subr.mxu0 0.0
    %2049 = vmatpush1.msra.mxu0 0.0
    %2050 = vmatprep.subr.mxu0 0.0
    %2051 = vmatpush1.msra.mxu0 0.0
    %2052 = vmatprep.subr.mxu0 0.0
    %2053 = vmatpush1.msra.mxu0 0.0
    %2054 = vmatprep.subr.mxu0 0.0
    %2055 = vmatpush1.msra.mxu0 0.0
    %2056 = vmatprep.subr.mxu0 0.0
    %2057 = vmatpush1.msra.mxu0 0.0
    %2058 = vmatprep.subr.mxu0 0.0
    %2059 = vmatpush1.msra.mxu0 0.0
    %2060 = vmatprep.mubr.f32.mxu0 0.0
    %2061 = vmatmul.mubr.f32.gmra.mrb[0].mxu0 %v1991
    %v2062 = vpop.f32.mrb[0].mxu0
    %v2063 = vadd.f32 0.0, %v2062
    %v2064 = vpop.f32.mrb[0].mxu0
    %2065 = vmatprep.mubr.f32.mxu0 0.0
    %2066 = vmatmul.mubr.f32.gmra.mrb[0].mxu0 %v1994
    %v2067 = vpop.f32.mrb[0].mxu0
    %v2068 = vadd.f32 0.0, %v2067
    %v2069 = vpop.f32.mrb[0].mxu0
    %2070 = vdwg.mxu0
    %v2072 = vsel %vm427, %v1765, 0
    %v2075 = vsel %vm427, %v1770, 0
    %2077 = vmatprep.subr.mxu0 0.0
    %2078 = vmatpush1.msra.mxu0 %v1773
    %2079 = vmatprep.subr.mxu0 0.0
    %2080 = vmatpush1.msra.mxu0 0.0
    %2081 = vmatprep.subr.mxu0 0.0
    %2082 = vmatpush1.msra.mxu0 0.0
    %2083 = vmatprep.subr.mxu0 0.0
    %2084 = vmatpush1.msra.mxu0 0.0
    %2085 = vmatprep.subr.mxu0 0.0
    %2086 = vmatpush1.msra.mxu0 0.0
    %2087 = vmatprep.subr.mxu0 0.0
    %2088 = vmatpush1.msra.mxu0 0.0
    %2089 = vmatprep.subr.mxu0 0.0
    %2090 = vmatpush1.msra.mxu0 0.0
    %2091 = vmatprep.subr.mxu0 0.0
    %2092 = vmatpush1.msra.mxu0 0.0
    %2093 = vmatprep.subr.mxu0 0.0
    %2094 = vmatpush1.msra.mxu0 0.0
    %2095 = vmatprep.subr.mxu0 0.0
    %2096 = vmatpush1.msra.mxu0 0.0
    %2097 = vmatprep.subr.mxu0 0.0
    %2098 = vmatpush1.msra.mxu0 0.0
    %2099 = vmatprep.subr.mxu0 0.0
    %2100 = vmatpush1.msra.mxu0 0.0
    %2101 = vmatprep.subr.mxu0 0.0
    %2102 = vmatpush1.msra.mxu0 0.0
    %2103 = vmatprep.subr.mxu0 0.0
    %2104 = vmatpush1.msra.mxu0 0.0
    %2105 = vmatprep.subr.mxu0 0.0
    %2106 = vmatpush1.msra.mxu0 0.0
    %2107 = vmatprep.subr.mxu0 0.0
    %2108 = vmatpush1.msra.mxu0 0.0
    %2109 = vmatprep.subr.mxu0 0.0
    %2110 = vmatpush1.msra.mxu0 0.0
    %2111 = vmatprep.subr.mxu0 0.0
    %2112 = vmatpush1.msra.mxu0 0.0
    %2113 = vmatprep.subr.mxu0 0.0
    %2114 = vmatpush1.msra.mxu0 0.0
    %2115 = vmatprep.subr.mxu0 0.0
    %2116 = vmatpush1.msra.mxu0 0.0
    %2117 = vmatprep.subr.mxu0 0.0
    %2118 = vmatpush1.msra.mxu0 0.0
    %2119 = vmatprep.subr.mxu0 0.0
    %2120 = vmatpush1.msra.mxu0 0.0
    %2121 = vmatprep.subr.mxu0 0.0
    %2122 = vmatpush1.msra.mxu0 0.0
    %2123 = vmatprep.subr.mxu0 0.0
    %2124 = vmatpush1.msra.mxu0 0.0
    %2125 = vmatprep.subr.mxu0 0.0
    %2126 = vmatpush1.msra.mxu0 0.0
    %2127 = vmatprep.subr.mxu0 0.0
    %2128 = vmatpush1.msra.mxu0 0.0
    %2129 = vmatprep.subr.mxu0 0.0
    %2130 = vmatpush1.msra.mxu0 0.0
    %2131 = vmatprep.subr.mxu0 0.0
    %2132 = vmatpush1.msra.mxu0 0.0
    %2133 = vmatprep.subr.mxu0 0.0
    %2134 = vmatpush1.msra.mxu0 0.0
    %2135 = vmatprep.subr.mxu0 0.0
    %2136 = vmatpush1.msra.mxu0 0.0
    %2137 = vmatprep.subr.mxu0 0.0
    %2138 = vmatpush1.msra.mxu0 0.0
    %2139 = vmatprep.subr.mxu0 0.0
    %2140 = vmatpush1.msra.mxu0 0.0
    %2141 = vmatprep.mubr.f32.mxu0 0.0
    %2142 = vmatmul.mubr.f32.gmra.mrb[0].mxu0 %v2072
    %v2143 = vpop.f32.mrb[0].mxu0
    %v2144 = vadd.f32 %v2063, %v2143
    %v2145 = vpop.f32.mrb[0].mxu0
    %2146 = vmatprep.mubr.f32.mxu0 0.0
    %2147 = vmatmul.mubr.f32.gmra.mrb[0].mxu0 %v2075
    %v2148 = vpop.f32.mrb[0].mxu0
    %v2149 = vadd.f32 %v2068, %v2148
    %v2150 = vpop.f32.mrb[0].mxu0
    %2151 = vdwg.mxu0
    %2152 = vrot.lane.b32.xlu0 %v304, 112
    %v2153 = vpop.permute.xlu0 %2152
    %2154 = vrot.lane.b32.xlu0 %v309, 112
    %v2155 = vpop.permute.xlu0 %2154
    %2156 = vrot.lane.b32.xlu0 %v402, 112
    %v2157 = vpop.permute.xlu0 %2156
    %2158 = vrot.lane.b32.xlu0 %v407, 112
    %v2159 = vpop.permute.xlu0 %2158
    %2160 = vrot.lane.b32.xlu0 %v412, 112
    %v2161 = vpop.permute.xlu0 %2160
    %2162 = vrot.lane.b32.xlu0 %v417, 112
    %v2163 = vpop.permute.xlu0 %2162
    %v2164 = vsel %vm427, %v2153, 0
    %v2166 = vsel %vm427, %v2155, 0
    %v2168 = vsel %vm427, %v2157, 0
    %v2170 = vsel %vm427, %v2159, 0
    %v2172 = vsel %vm427, %v2161, 0
    %v2174 = vsel %vm427, %v2163, 0
    %2176 = vmatprep.subr.mxu0 0.0
    %2177 = vmatpush1.xpose.msra.mxu0 %v2168
    %2178 = vmatprep.subr.mxu0 0.0
    %2179 = vmatpush1.xpose.msra.mxu0 %v2170
    %2180 = vmatprep.subr.mxu0 0.0
    %2181 = vmatpush1.xpose.msra.mxu0 %v2172
    %2182 = vmatprep.subr.mxu0 0.0
    %2183 = vmatpush1.xpose.msra.mxu0 %v2174
    %2184 = vmatprep.subr.mxu0 0.0
    %2185 = vmatpush1.xpose.msra.mxu0 0.0
    %2186 = vmatprep.subr.mxu0 0.0
    %2187 = vmatpush1.xpose.msra.mxu0 0.0
    %2188 = vmatprep.subr.mxu0 0.0
    %2189 = vmatpush1.xpose.msra.mxu0 0.0
    %2190 = vmatprep.subr.mxu0 0.0
    %2191 = vmatpush1.xpose.msra.mxu0 0.0
    %2192 = vmatprep.subr.mxu0 0.0
    %2193 = vmatpush1.xpose.msra.mxu0 0.0
    %2194 = vmatprep.subr.mxu0 0.0
    %2195 = vmatpush1.xpose.msra.mxu0 0.0
    %2196 = vmatprep.subr.mxu0 0.0
    %2197 = vmatpush1.xpose.msra.mxu0 0.0
    %2198 = vmatprep.subr.mxu0 0.0
    %2199 = vmatpush1.xpose.msra.mxu0 0.0
    %2200 = vmatprep.subr.mxu0 0.0
    %2201 = vmatpush1.xpose.msra.mxu0 0.0
    %2202 = vmatprep.subr.mxu0 0.0
    %2203 = vmatpush1.xpose.msra.mxu0 0.0
    %2204 = vmatprep.subr.mxu0 0.0
    %2205 = vmatpush1.xpose.msra.mxu0 0.0
    %2206 = vmatprep.subr.mxu0 0.0
    %2207 = vmatpush1.xpose.msra.mxu0 0.0
    %2208 = vmatprep.subr.mxu0 0.0
    %2209 = vmatpush1.xpose.msra.mxu0 0.0
    %2210 = vmatprep.subr.mxu0 0.0
    %2211 = vmatpush1.xpose.msra.mxu0 0.0
    %2212 = vmatprep.subr.mxu0 0.0
    %2213 = vmatpush1.xpose.msra.mxu0 0.0
    %2214 = vmatprep.subr.mxu0 0.0
    %2215 = vmatpush1.xpose.msra.mxu0 0.0
    %2216 = vmatprep.subr.mxu0 0.0
    %2217 = vmatpush1.xpose.msra.mxu0 0.0
    %2218 = vmatprep.subr.mxu0 0.0
    %2219 = vmatpush1.xpose.msra.mxu0 0.0
    %2220 = vmatprep.subr.mxu0 0.0
    %2221 = vmatpush1.xpose.msra.mxu0 0.0
    %2222 = vmatprep.subr.mxu0 0.0
    %2223 = vmatpush1.xpose.msra.mxu0 0.0
    %2224 = vmatprep.subr.mxu0 0.0
    %2225 = vmatpush1.xpose.msra.mxu0 0.0
    %2226 = vmatprep.subr.mxu0 0.0
    %2227 = vmatpush1.xpose.msra.mxu0 0.0
    %2228 = vmatprep.subr.mxu0 0.0
    %2229 = vmatpush1.xpose.msra.mxu0 0.0
    %2230 = vmatprep.subr.mxu0 0.0
    %2231 = vmatpush1.xpose.msra.mxu0 0.0
    %2232 = vmatprep.subr.mxu0 0.0
    %2233 = vmatpush1.xpose.msra.mxu0 0.0
    %2234 = vmatprep.subr.mxu0 0.0
    %2235 = vmatpush1.xpose.msra.mxu0 0.0
    %2236 = vmatprep.subr.mxu0 0.0
    %2237 = vmatpush1.xpose.msra.mxu0 0.0
    %2238 = vmatprep.subr.mxu0 0.0
    %2239 = vmatpush1.xpose.msra.mxu0 0.0
    %2240 = vmatprep.mubr.f32.mxu0 0.0
    %2241 = vmatmul.mubr.f32.gmra.mrb[0].mxu0 %v2164
    %v2242 = vpop.f32.mrb[0].mxu0
    %v2243 = vadd.f32 %v131, %v2242
    %v2244 = vpop.f32.mrb[0].mxu0
    %2245 = vmatprep.mubr.f32.mxu0 0.0
    %2246 = vmatmul.mubr.f32.gmra.mrb[0].mxu0 %v2166
    %v2247 = vpop.f32.mrb[0].mxu0
    %v2248 = vadd.f32 %v132, %v2247
    %v2249 = vpop.f32.mrb[0].mxu0
    %2250 = vdwg.mxu0
    %v2251 = vsel %vm144, %v2243, -inf
    %2252 = vmax.xlane.f32.xlu0 %v2251
    %v2253 = vpop.xlane.xlu0 %2252
    %v2254 = vsel %vm144, %v2248, -inf
    %2255 = vmax.xlane.f32.xlu0 %v2254
    %v2256 = vpop.xlane.xlu0 %2255
    %v2257 = vsub.f32 %v2243, %v2253
    %v2258 = vsub.f32 %v2248, %v2256
    %v2259 = vmul.f32 %v2257, 1.442695
    %v2260 = vpow.pop %v2259
    %v2261 = vmul.f32 %v2258, 1.442695
    %v2262 = vpow.pop %v2261
    %v2263 = vsel %vm144, %v2260, 0.0
    %2264 = vadd.xlane.f32.xlu0 %v2263
    %v2265 = vpop.xlane.xlu0 %2264
    %v2266 = vsel %vm144, %v2262, 0.0
    %2267 = vadd.xlane.f32.xlu0 %v2266
    %v2268 = vpop.xlane.xlu0 %2267
    %v2269 = vrcp.pop %v2265
    %v2270 = vmul.f32 %v2260, %v2269
    %v2271 = vrcp.pop %v2268
    %v2272 = vmul.f32 %v2262, %v2271
    %2273 = vrot.lane.b32.xlu0 %v402, 80
    %v2274 = vpop.permute.xlu0 %2273
    %2275 = vrot.lane.b32.xlu0 %v407, 80
    %v2276 = vpop.permute.xlu0 %2275
    %2277 = vrot.lane.b32.xlu0 %v412, 80
    %v2278 = vpop.permute.xlu0 %2277
    %2279 = vrot.lane.b32.xlu0 %v417, 80
    %v2280 = vpop.permute.xlu0 %2279
    %v2286 = vsel %vm144, %v2270, 0
    %v2289 = vsel %vm144, %v2272, 0
    %2291 = vmatprep.subr.mxu0 0.0
    %2292 = vmatpush1.msra.mxu0 %v2274
    %2293 = vmatprep.subr.mxu0 0.0
    %2294 = vmatpush1.msra.mxu0 %v2276
    %2295 = vmatprep.subr.mxu0 0.0
    %2296 = vmatpush1.msra.mxu0 %v2278
    %2297 = vmatprep.subr.mxu0 0.0
    %2298 = vmatpush1.msra.mxu0 %v2280
    %2299 = vmatprep.subr.mxu0 0.0
    %2300 = vmatpush1.msra.mxu0 0.0
    %2301 = vmatprep.subr.mxu0 0.0
    %2302 = vmatpush1.msra.mxu0 0.0
    %2303 = vmatprep.subr.mxu0 0.0
    %2304 = vmatpush1.msra.mxu0 0.0
    %2305 = vmatprep.subr.mxu0 0.0
    %2306 = vmatpush1.msra.mxu0 0.0
    %2307 = vmatprep.subr.mxu0 0.0
    %2308 = vmatpush1.msra.mxu0 0.0
    %2309 = vmatprep.subr.mxu0 0.0
    %2310 = vmatpush1.msra.mxu0 0.0
    %2311 = vmatprep.subr.mxu0 0.0
    %2312 = vmatpush1.msra.mxu0 0.0
    %2313 = vmatprep.subr.mxu0 0.0
    %2314 = vmatpush1.msra.mxu0 0.0
    %2315 = vmatprep.subr.mxu0 0.0
    %2316 = vmatpush1.msra.mxu0 0.0
    %2317 = vmatprep.subr.mxu0 0.0
    %2318 = vmatpush1.msra.mxu0 0.0
    %2319 = vmatprep.subr.mxu0 0.0
    %2320 = vmatpush1.msra.mxu0 0.0
    %2321 = vmatprep.subr.mxu0 0.0
    %2322 = vmatpush1.msra.mxu0 0.0
    %2323 = vmatprep.subr.mxu0 0.0
    %2324 = vmatpush1.msra.mxu0 0.0
    %2325 = vmatprep.subr.mxu0 0.0
    %2326 = vmatpush1.msra.mxu0 0.0
    %2327 = vmatprep.subr.mxu0 0.0
    %2328 = vmatpush1.msra.mxu0 0.0
    %2329 = vmatprep.subr.mxu0 0.0
    %2330 = vmatpush1.msra.mxu0 0.0
    %2331 = vmatprep.subr.mxu0 0.0
    %2332 = vmatpush1.msra.mxu0 0.0
    %2333 = vmatprep.subr.mxu0 0.0
    %2334 = vmatpush1.msra.mxu0 0.0
    %2335 = vmatprep.subr.mxu0 0.0
    %2336 = vmatpush1.msra.mxu0 0.0
    %2337 = vmatprep.subr.mxu0 0.0
    %2338 = vmatpush1.msra.mxu0 0.0
    %2339 = vmatprep.subr.mxu0 0.0
    %2340 = vmatpush1.msra.mxu0 0.0
    %2341 = vmatprep.subr.mxu0 0.0
    %2342 = vmatpush1.msra.mxu0 0.0
    %2343 = vmatprep.subr.mxu0 0.0
    %2344 = vmatpush1.msra.mxu0 0.0
    %2345 = vmatprep.subr.mxu0 0.0
    %2346 = vmatpush1.msra.mxu0 0.0
    %2347 = vmatprep.subr.mxu0 0.0
    %2348 = vmatpush1.msra.mxu0 0.0
    %2349 = vmatprep.subr.mxu0 0.0
    %2350 = vmatpush1.msra.mxu0 0.0
    %2351 = vmatprep.subr.mxu0 0.0
    %2352 = vmatpush1.msra.mxu0 0.0
    %2353 = vmatprep.subr.mxu0 0.0
    %2354 = vmatpush1.msra.mxu0 0.0
    %2355 = vmatprep.mubr.f32.mxu0 0.0
    %2356 = vmatmul.mubr.f32.gmra.mrb[0].mxu0 %v2286
    %v2357 = vpop.f32.mrb[0].mxu0
    %v2358 = vadd.f32 0.0, %v2357
    %v2359 = vpop.f32.mrb[0].mxu0
    %2360 = vmatprep.mubr.f32.mxu0 0.0
    %2361 = vmatmul.mubr.f32.gmra.mrb[0].mxu0 %v2289
    %v2362 = vpop.f32.mrb[0].mxu0
    %v2363 = vadd.f32 0.0, %v2362
    %v2364 = vpop.f32.mrb[0].mxu0
    %2365 = vdwg.mxu0
    %s2366 = scalar_lea.vmem %s25, 16
    %v2367 = vld [vmem:[%s2366] sm:$0xff]
    %v2369 = vsel %vm427, %v2358, 0
    %v2372 = vsel %vm427, %v2363, 0
    %2374 = vmatprep.subr.mxu0 0.0
    %2375 = vmatpush1.msra.mxu0 %v2367
    %2376 = vmatprep.subr.mxu0 0.0
    %2377 = vmatpush1.msra.mxu0 0.0
    %2378 = vmatprep.subr.mxu0 0.0
    %2379 = vmatpush1.msra.mxu0 0.0
    %2380 = vmatprep.subr.mxu0 0.0
    %2381 = vmatpush1.msra.mxu0 0.0
    %2382 = vmatprep.subr.mxu0 0.0
    %2383 = vmatpush1.msra.mxu0 0.0
    %2384 = vmatprep.subr.mxu0 0.0
    %2385 = vmatpush1.msra.mxu0 0.0
    %2386 = vmatprep.subr.mxu0 0.0
    %2387 = vmatpush1.msra.mxu0 0.0
    %2388 = vmatprep.subr.mxu0 0.0
    %2389 = vmatpush1.msra.mxu0 0.0
    %2390 = vmatprep.subr.mxu0 0.0
    %2391 = vmatpush1.msra.mxu0 0.0
    %2392 = vmatprep.subr.mxu0 0.0
    %2393 = vmatpush1.msra.mxu0 0.0
    %2394 = vmatprep.subr.mxu0 0.0
    %2395 = vmatpush1.msra.mxu0 0.0
    %2396 = vmatprep.subr.mxu0 0.0
    %2397 = vmatpush1.msra.mxu0 0.0
    %2398 = vmatprep.subr.mxu0 0.0
    %2399 = vmatpush1.msra.mxu0 0.0
    %2400 = vmatprep.subr.mxu0 0.0
    %2401 = vmatpush1.msra.mxu0 0.0
    %2402 = vmatprep.subr.mxu0 0.0
    %2403 = vmatpush1.msra.mxu0 0.0
    %2404 = vmatprep.subr.mxu0 0.0
    %2405 = vmatpush1.msra.mxu0 0.0
    %2406 = vmatprep.subr.mxu0 0.0
    %2407 = vmatpush1.msra.mxu0 0.0
    %2408 = vmatprep.subr.mxu0 0.0
    %2409 = vmatpush1.msra.mxu0 0.0
    %2410 = vmatprep.subr.mxu0 0.0
    %2411 = vmatpush1.msra.mxu0 0.0
    %2412 = vmatprep.subr.mxu0 0.0
    %2413 = vmatpush1.msra.mxu0 0.0
    %2414 = vmatprep.subr.mxu0 0.0
    %2415 = vmatpush1.msra.mxu0 0.0
    %2416 = vmatprep.subr.mxu0 0.0
    %2417 = vmatpush1.msra.mxu0 0.0
    %2418 = vmatprep.subr.mxu0 0.0
    %2419 = vmatpush1.msra.mxu0 0.0
    %2420 = vmatprep.subr.mxu0 0.0
    %2421 = vmatpush1.msra.mxu0 0.0
    %2422 = vmatprep.subr.mxu0 0.0
    %2423 = vmatpush1.msra.mxu0 0.0
    %2424 = vmatprep.subr.mxu0 0.0
    %2425 = vmatpush1.msra.mxu0 0.0
    %2426 = vmatprep.subr.mxu0 0.0
    %2427 = vmatpush1.msra.mxu0 0.0
    %2428 = vmatprep.subr.mxu0 0.0
    %2429 = vmatpush1.msra.mxu0 0.0
    %2430 = vmatprep.subr.mxu0 0.0
    %2431 = vmatpush1.msra.mxu0 0.0
    %2432 = vmatprep.subr.mxu0 0.0
    %2433 = vmatpush1.msra.mxu0 0.0
    %2434 = vmatprep.subr.mxu0 0.0
    %2435 = vmatpush1.msra.mxu0 0.0
    %2436 = vmatprep.subr.mxu0 0.0
    %2437 = vmatpush1.msra.mxu0 0.0
    %2438 = vmatprep.mubr.f32.mxu0 0.0
    %2439 = vmatmul.mubr.f32.gmra.mrb[0].mxu0 %v2369
    %v2440 = vpop.f32.mrb[0].mxu0
    %v2441 = vadd.f32 0.0, %v2440
    %v2442 = vpop.f32.mrb[0].mxu0
    %2443 = vmatprep.mubr.f32.mxu0 0.0
    %2444 = vmatmul.mubr.f32.gmra.mrb[0].mxu0 %v2372
    %v2445 = vpop.f32.mrb[0].mxu0
    %v2446 = vadd.f32 0.0, %v2445
    %v2447 = vpop.f32.mrb[0].mxu0
    %2448 = vdwg.mxu0
    %v2449 = vadd.f32 %v2144, %v2441
    %v2450 = vadd.f32 %v2149, %v2446
    %2451 = vrot.lane.b32.xlu0 %v304, 104
    %v2452 = vpop.permute.xlu0 %2451
    %2453 = vrot.lane.b32.xlu0 %v309, 104
    %v2454 = vpop.permute.xlu0 %2453
    %2455 = vrot.lane.b32.xlu0 %v402, 104
    %v2456 = vpop.permute.xlu0 %2455
    %2457 = vrot.lane.b32.xlu0 %v407, 104
    %v2458 = vpop.permute.xlu0 %2457
    %2459 = vrot.lane.b32.xlu0 %v412, 104
    %v2460 = vpop.permute.xlu0 %2459
    %2461 = vrot.lane.b32.xlu0 %v417, 104
    %v2462 = vpop.permute.xlu0 %2461
    %v2463 = vsel %vm427, %v2452, 0
    %v2465 = vsel %vm427, %v2454, 0
    %v2467 = vsel %vm427, %v2456, 0
    %v2469 = vsel %vm427, %v2458, 0
    %v2471 = vsel %vm427, %v2460, 0
    %v2473 = vsel %vm427, %v2462, 0
    %2475 = vmatprep.subr.mxu0 0.0
    %2476 = vmatpush1.xpose.msra.mxu0 %v2467
    %2477 = vmatprep.subr.mxu0 0.0
    %2478 = vmatpush1.xpose.msra.mxu0 %v2469
    %2479 = vmatprep.subr.mxu0 0.0
    %2480 = vmatpush1.xpose.msra.mxu0 %v2471
    %2481 = vmatprep.subr.mxu0 0.0
    %2482 = vmatpush1.xpose.msra.mxu0 %v2473
    %2483 = vmatprep.subr.mxu0 0.0
    %2484 = vmatpush1.xpose.msra.mxu0 0.0
    %2485 = vmatprep.subr.mxu0 0.0
    %2486 = vmatpush1.xpose.msra.mxu0 0.0
    %2487 = vmatprep.subr.mxu0 0.0
    %2488 = vmatpush1.xpose.msra.mxu0 0.0
    %2489 = vmatprep.subr.mxu0 0.0
    %2490 = vmatpush1.xpose.msra.mxu0 0.0
    %2491 = vmatprep.subr.mxu0 0.0
    %2492 = vmatpush1.xpose.msra.mxu0 0.0
    %2493 = vmatprep.subr.mxu0 0.0
    %2494 = vmatpush1.xpose.msra.mxu0 0.0
    %2495 = vmatprep.subr.mxu0 0.0
    %2496 = vmatpush1.xpose.msra.mxu0 0.0
    %2497 = vmatprep.subr.mxu0 0.0
    %2498 = vmatpush1.xpose.msra.mxu0 0.0
    %2499 = vmatprep.subr.mxu0 0.0
    %2500 = vmatpush1.xpose.msra.mxu0 0.0
    %2501 = vmatprep.subr.mxu0 0.0
    %2502 = vmatpush1.xpose.msra.mxu0 0.0
    %2503 = vmatprep.subr.mxu0 0.0
    %2504 = vmatpush1.xpose.msra.mxu0 0.0
    %2505 = vmatprep.subr.mxu0 0.0
    %2506 = vmatpush1.xpose.msra.mxu0 0.0
    %2507 = vmatprep.subr.mxu0 0.0
    %2508 = vmatpush1.xpose.msra.mxu0 0.0
    %2509 = vmatprep.subr.mxu0 0.0
    %2510 = vmatpush1.xpose.msra.mxu0 0.0
    %2511 = vmatprep.subr.mxu0 0.0
    %2512 = vmatpush1.xpose.msra.mxu0 0.0
    %2513 = vmatprep.subr.mxu0 0.0
    %2514 = vmatpush1.xpose.msra.mxu0 0.0
    %2515 = vmatprep.subr.mxu0 0.0
    %2516 = vmatpush1.xpose.msra.mxu0 0.0
    %2517 = vmatprep.subr.mxu0 0.0
    %2518 = vmatpush1.xpose.msra.mxu0 0.0
    %2519 = vmatprep.subr.mxu0 0.0
    %2520 = vmatpush1.xpose.msra.mxu0 0.0
    %2521 = vmatprep.subr.mxu0 0.0
    %2522 = vmatpush1.xpose.msra.mxu0 0.0
    %2523 = vmatprep.subr.mxu0 0.0
    %2524 = vmatpush1.xpose.msra.mxu0 0.0
    %2525 = vmatprep.subr.mxu0 0.0
    %2526 = vmatpush1.xpose.msra.mxu0 0.0
    %2527 = vmatprep.subr.mxu0 0.0
    %2528 = vmatpush1.xpose.msra.mxu0 0.0
    %2529 = vmatprep.subr.mxu0 0.0
    %2530 = vmatpush1.xpose.msra.mxu0 0.0
    %2531 = vmatprep.subr.mxu0 0.0
    %2532 = vmatpush1.xpose.msra.mxu0 0.0
    %2533 = vmatprep.subr.mxu0 0.0
    %2534 = vmatpush1.xpose.msra.mxu0 0.0
    %2535 = vmatprep.subr.mxu0 0.0
    %2536 = vmatpush1.xpose.msra.mxu0 0.0
    %2537 = vmatprep.subr.mxu0 0.0
    %2538 = vmatpush1.xpose.msra.mxu0 0.0
    %2539 = vmatprep.mubr.f32.mxu0 0.0
    %2540 = vmatmul.mubr.f32.gmra.mrb[0].mxu0 %v2463
    %v2541 = vpop.f32.mrb[0].mxu0
    %v2542 = vadd.f32 %v131, %v2541
    %v2543 = vpop.f32.mrb[0].mxu0
    %2544 = vmatprep.mubr.f32.mxu0 0.0
    %2545 = vmatmul.mubr.f32.gmra.mrb[0].mxu0 %v2465
    %v2546 = vpop.f32.mrb[0].mxu0
    %v2547 = vadd.f32 %v132, %v2546
    %v2548 = vpop.f32.mrb[0].mxu0
    %2549 = vdwg.mxu0
    %v2550 = vsel %vm144, %v2542, -inf
    %2551 = vmax.xlane.f32.xlu0 %v2550
    %v2552 = vpop.xlane.xlu0 %2551
    %v2553 = vsel %vm144, %v2547, -inf
    %2554 = vmax.xlane.f32.xlu0 %v2553
    %v2555 = vpop.xlane.xlu0 %2554
    %v2556 = vsub.f32 %v2542, %v2552
    %v2557 = vsub.f32 %v2547, %v2555
    %v2558 = vmul.f32 %v2556, 1.442695
    %v2559 = vpow.pop %v2558
    %v2560 = vmul.f32 %v2557, 1.442695
    %v2561 = vpow.pop %v2560
    %v2562 = vsel %vm144, %v2559, 0.0
    %2563 = vadd.xlane.f32.xlu0 %v2562
    %v2564 = vpop.xlane.xlu0 %2563
    %v2565 = vsel %vm144, %v2561, 0.0
    %2566 = vadd.xlane.f32.xlu0 %v2565
    %v2567 = vpop.xlane.xlu0 %2566
    %v2568 = vrcp.pop %v2564
    %v2569 = vmul.f32 %v2559, %v2568
    %v2570 = vrcp.pop %v2567
    %v2571 = vmul.f32 %v2561, %v2570
    %2572 = vrot.lane.b32.xlu0 %v402, 72
    %v2573 = vpop.permute.xlu0 %2572
    %2574 = vrot.lane.b32.xlu0 %v407, 72
    %v2575 = vpop.permute.xlu0 %2574
    %2576 = vrot.lane.b32.xlu0 %v412, 72
    %v2577 = vpop.permute.xlu0 %2576
    %2578 = vrot.lane.b32.xlu0 %v417, 72
    %v2579 = vpop.permute.xlu0 %2578
    %v2585 = vsel %vm144, %v2569, 0
    %v2588 = vsel %vm144, %v2571, 0
    %2590 = vmatprep.subr.mxu0 0.0
    %2591 = vmatpush1.msra.mxu0 %v2573
    %2592 = vmatprep.subr.mxu0 0.0
    %2593 = vmatpush1.msra.mxu0 %v2575
    %2594 = vmatprep.subr.mxu0 0.0
    %2595 = vmatpush1.msra.mxu0 %v2577
    %2596 = vmatprep.subr.mxu0 0.0
    %2597 = vmatpush1.msra.mxu0 %v2579
    %2598 = vmatprep.subr.mxu0 0.0
    %2599 = vmatpush1.msra.mxu0 0.0
    %2600 = vmatprep.subr.mxu0 0.0
    %2601 = vmatpush1.msra.mxu0 0.0
    %2602 = vmatprep.subr.mxu0 0.0
    %2603 = vmatpush1.msra.mxu0 0.0
    %2604 = vmatprep.subr.mxu0 0.0
    %2605 = vmatpush1.msra.mxu0 0.0
    %2606 = vmatprep.subr.mxu0 0.0
    %2607 = vmatpush1.msra.mxu0 0.0
    %2608 = vmatprep.subr.mxu0 0.0
    %2609 = vmatpush1.msra.mxu0 0.0
    %2610 = vmatprep.subr.mxu0 0.0
    %2611 = vmatpush1.msra.mxu0 0.0
    %2612 = vmatprep.subr.mxu0 0.0
    %2613 = vmatpush1.msra.mxu0 0.0
    %2614 = vmatprep.subr.mxu0 0.0
    %2615 = vmatpush1.msra.mxu0 0.0
    %2616 = vmatprep.subr.mxu0 0.0
    %2617 = vmatpush1.msra.mxu0 0.0
    %2618 = vmatprep.subr.mxu0 0.0
    %2619 = vmatpush1.msra.mxu0 0.0
    %2620 = vmatprep.subr.mxu0 0.0
    %2621 = vmatpush1.msra.mxu0 0.0
    %2622 = vmatprep.subr.mxu0 0.0
    %2623 = vmatpush1.msra.mxu0 0.0
    %2624 = vmatprep.subr.mxu0 0.0
    %2625 = vmatpush1.msra.mxu0 0.0
    %2626 = vmatprep.subr.mxu0 0.0
    %2627 = vmatpush1.msra.mxu0 0.0
    %2628 = vmatprep.subr.mxu0 0.0
    %2629 = vmatpush1.msra.mxu0 0.0
    %2630 = vmatprep.subr.mxu0 0.0
    %2631 = vmatpush1.msra.mxu0 0.0
    %2632 = vmatprep.subr.mxu0 0.0
    %2633 = vmatpush1.msra.mxu0 0.0
    %2634 = vmatprep.subr.mxu0 0.0
    %2635 = vmatpush1.msra.mxu0 0.0
    %2636 = vmatprep.subr.mxu0 0.0
    %2637 = vmatpush1.msra.mxu0 0.0
    %2638 = vmatprep.subr.mxu0 0.0
    %2639 = vmatpush1.msra.mxu0 0.0
    %2640 = vmatprep.subr.mxu0 0.0
    %2641 = vmatpush1.msra.mxu0 0.0
    %2642 = vmatprep.subr.mxu0 0.0
    %2643 = vmatpush1.msra.mxu0 0.0
    %2644 = vmatprep.subr.mxu0 0.0
    %2645 = vmatpush1.msra.mxu0 0.0
    %2646 = vmatprep.subr.mxu0 0.0
    %2647 = vmatpush1.msra.mxu0 0.0
    %2648 = vmatprep.subr.mxu0 0.0
    %2649 = vmatpush1.msra.mxu0 0.0
    %2650 = vmatprep.subr.mxu0 0.0
    %2651 = vmatpush1.msra.mxu0 0.0
    %2652 = vmatprep.subr.mxu0 0.0
    %2653 = vmatpush1.msra.mxu0 0.0
    %2654 = vmatprep.mubr.f32.mxu0 0.0
    %2655 = vmatmul.mubr.f32.gmra.mrb[0].mxu0 %v2585
    %v2656 = vpop.f32.mrb[0].mxu0
    %v2657 = vadd.f32 0.0, %v2656
    %v2658 = vpop.f32.mrb[0].mxu0
    %2659 = vmatprep.mubr.f32.mxu0 0.0
    %2660 = vmatmul.mubr.f32.gmra.mrb[0].mxu0 %v2588
    %v2661 = vpop.f32.mrb[0].mxu0
    %v2662 = vadd.f32 0.0, %v2661
    %v2663 = vpop.f32.mrb[0].mxu0
    %2664 = vdwg.mxu0
    %s2665 = scalar_lea.vmem %s25, 24
    %v2666 = vld [vmem:[%s2665] sm:$0xff]
    %v2668 = vsel %vm427, %v2657, 0
    %v2671 = vsel %vm427, %v2662, 0
    %2673 = vmatprep.subr.mxu0 0.0
    %2674 = vmatpush1.msra.mxu0 %v2666
    %2675 = vmatprep.subr.mxu0 0.0
    %2676 = vmatpush1.msra.mxu0 0.0
    %2677 = vmatprep.subr.mxu0 0.0
    %2678 = vmatpush1.msra.mxu0 0.0
    %2679 = vmatprep.subr.mxu0 0.0
    %2680 = vmatpush1.msra.mxu0 0.0
    %2681 = vmatprep.subr.mxu0 0.0
    %2682 = vmatpush1.msra.mxu0 0.0
    %2683 = vmatprep.subr.mxu0 0.0
    %2684 = vmatpush1.msra.mxu0 0.0
    %2685 = vmatprep.subr.mxu0 0.0
    %2686 = vmatpush1.msra.mxu0 0.0
    %2687 = vmatprep.subr.mxu0 0.0
    %2688 = vmatpush1.msra.mxu0 0.0
    %2689 = vmatprep.subr.mxu0 0.0
    %2690 = vmatpush1.msra.mxu0 0.0
    %2691 = vmatprep.subr.mxu0 0.0
    %2692 = vmatpush1.msra.mxu0 0.0
    %2693 = vmatprep.subr.mxu0 0.0
    %2694 = vmatpush1.msra.mxu0 0.0
    %2695 = vmatprep.subr.mxu0 0.0
    %2696 = vmatpush1.msra.mxu0 0.0
    %2697 = vmatprep.subr.mxu0 0.0
    %2698 = vmatpush1.msra.mxu0 0.0
    %2699 = vmatprep.subr.mxu0 0.0
    %2700 = vmatpush1.msra.mxu0 0.0
    %2701 = vmatprep.subr.mxu0 0.0
    %2702 = vmatpush1.msra.mxu0 0.0
    %2703 = vmatprep.subr.mxu0 0.0
    %2704 = vmatpush1.msra.mxu0 0.0
    %2705 = vmatprep.subr.mxu0 0.0
    %2706 = vmatpush1.msra.mxu0 0.0
    %2707 = vmatprep.subr.mxu0 0.0
    %2708 = vmatpush1.msra.mxu0 0.0
    %2709 = vmatprep.subr.mxu0 0.0
    %2710 = vmatpush1.msra.mxu0 0.0
    %2711 = vmatprep.subr.mxu0 0.0
    %2712 = vmatpush1.msra.mxu0 0.0
    %2713 = vmatprep.subr.mxu0 0.0
    %2714 = vmatpush1.msra.mxu0 0.0
    %2715 = vmatprep.subr.mxu0 0.0
    %2716 = vmatpush1.msra.mxu0 0.0
    %2717 = vmatprep.subr.mxu0 0.0
    %2718 = vmatpush1.msra.mxu0 0.0
    %2719 = vmatprep.subr.mxu0 0.0
    %2720 = vmatpush1.msra.mxu0 0.0
    %2721 = vmatprep.subr.mxu0 0.0
    %2722 = vmatpush1.msra.mxu0 0.0
    %2723 = vmatprep.subr.mxu0 0.0
    %2724 = vmatpush1.msra.mxu0 0.0
    %2725 = vmatprep.subr.mxu0 0.0
    %2726 = vmatpush1.msra.mxu0 0.0
    %2727 = vmatprep.subr.mxu0 0.0
    %2728 = vmatpush1.msra.mxu0 0.0
    %2729 = vmatprep.subr.mxu0 0.0
    %2730 = vmatpush1.msra.mxu0 0.0
    %2731 = vmatprep.subr.mxu0 0.0
    %2732 = vmatpush1.msra.mxu0 0.0
    %2733 = vmatprep.subr.mxu0 0.0
    %2734 = vmatpush1.msra.mxu0 0.0
    %2735 = vmatprep.subr.mxu0 0.0
    %2736 = vmatpush1.msra.mxu0 0.0
    %2737 = vmatprep.mubr.f32.mxu0 0.0
    %2738 = vmatmul.mubr.f32.gmra.mrb[0].mxu0 %v2668
    %v2739 = vpop.f32.mrb[0].mxu0
    %v2740 = vadd.f32 0.0, %v2739
    %v2741 = vpop.f32.mrb[0].mxu0
    %2742 = vmatprep.mubr.f32.mxu0 0.0
    %2743 = vmatmul.mubr.f32.gmra.mrb[0].mxu0 %v2671
    %v2744 = vpop.f32.mrb[0].mxu0
    %v2745 = vadd.f32 0.0, %v2744
    %v2746 = vpop.f32.mrb[0].mxu0
    %2747 = vdwg.mxu0
    %v2748 = vadd.f32 %v2449, %v2740
    %v2749 = vadd.f32 %v2450, %v2745
    %v2751 = vlaneseq
    %v2752 = vshrl.u32 %v2751, 7
    %v2753 = vsub.s32 0, %v2752
    %v2754 = vrot.slane %v1564, %v2753
    %v2756 = vadd.f32 %v2748, %v2754
    %v2757 = vadd.f32 %v2749, %v2754
    %v2758 = vmul.f32 %v123, %v1562
    %v2759 = vmul.f32 %v124, %v1563
    %v2760 = vld [vmem:[%s29] sm:$0xff]
    %v2761 = vld [vmem:[%s29 + $0x8] sm:$0xff]
    %v2762 = vld [vmem:[%s29 + $0x10] sm:$0xff]
    %v2763 = vld [vmem:[%s29 + $0x18] sm:$0xff]
    %v2764 = vld [vmem:[%s31] sm:$0x1]
    %v2766 = vlaneseq
    %v2767 = vshrl.u32 %v2766, 7
    %v2768 = vsub.s32 0, %v2767
    %v2769 = vrot.slane %v2764, %v2768
    %v2772 = vsel %vm144, %v2758, 0
    %v2775 = vsel %vm144, %v2759, 0
    %2777 = vmatprep.subr.mxu0 0.0
    %2778 = vmatpush1.msra.mxu0 %v2760
    %2779 = vmatprep.subr.mxu0 0.0
    %2780 = vmatpush1.msra.mxu0 %v2761
    %2781 = vmatprep.subr.mxu0 0.0
    %2782 = vmatpush1.msra.mxu0 %v2762
    %2783 = vmatprep.subr.mxu0 0.0
    %2784 = vmatpush1.msra.mxu0 %v2763
    %2785 = vmatprep.subr.mxu0 0.0
    %2786 = vmatpush1.msra.mxu0 0.0
    %2787 = vmatprep.subr.mxu0 0.0
    %2788 = vmatpush1.msra.mxu0 0.0
    %2789 = vmatprep.subr.mxu0 0.0
    %2790 = vmatpush1.msra.mxu0 0.0
    %2791 = vmatprep.subr.mxu0 0.0
    %2792 = vmatpush1.msra.mxu0 0.0
    %2793 = vmatprep.subr.mxu0 0.0
    %2794 = vmatpush1.msra.mxu0 0.0
    %2795 = vmatprep.subr.mxu0 0.0
    %2796 = vmatpush1.msra.mxu0 0.0
    %2797 = vmatprep.subr.mxu0 0.0
    %2798 = vmatpush1.msra.mxu0 0.0
    %2799 = vmatprep.subr.mxu0 0.0
    %2800 = vmatpush1.msra.mxu0 0.0
    %2801 = vmatprep.subr.mxu0 0.0
    %2802 = vmatpush1.msra.mxu0 0.0
    %2803 = vmatprep.subr.mxu0 0.0
    %2804 = vmatpush1.msra.mxu0 0.0
    %2805 = vmatprep.subr.mxu0 0.0
    %2806 = vmatpush1.msra.mxu0 0.0
    %2807 = vmatprep.subr.mxu0 0.0
    %2808 = vmatpush1.msra.mxu0 0.0
    %2809 = vmatprep.subr.mxu0 0.0
    %2810 = vmatpush1.msra.mxu0 0.0
    %2811 = vmatprep.subr.mxu0 0.0
    %2812 = vmatpush1.msra.mxu0 0.0
    %2813 = vmatprep.subr.mxu0 0.0
    %2814 = vmatpush1.msra.mxu0 0.0
    %2815 = vmatprep.subr.mxu0 0.0
    %2816 = vmatpush1.msra.mxu0 0.0
    %2817 = vmatprep.subr.mxu0 0.0
    %2818 = vmatpush1.msra.mxu0 0.0
    %2819 = vmatprep.subr.mxu0 0.0
    %2820 = vmatpush1.msra.mxu0 0.0
    %2821 = vmatprep.subr.mxu0 0.0
    %2822 = vmatpush1.msra.mxu0 0.0
    %2823 = vmatprep.subr.mxu0 0.0
    %2824 = vmatpush1.msra.mxu0 0.0
    %2825 = vmatprep.subr.mxu0 0.0
    %2826 = vmatpush1.msra.mxu0 0.0
    %2827 = vmatprep.subr.mxu0 0.0
    %2828 = vmatpush1.msra.mxu0 0.0
    %2829 = vmatprep.subr.mxu0 0.0
    %2830 = vmatpush1.msra.mxu0 0.0
    %2831 = vmatprep.subr.mxu0 0.0
    %2832 = vmatpush1.msra.mxu0 0.0
    %2833 = vmatprep.subr.mxu0 0.0
    %2834 = vmatpush1.msra.mxu0 0.0
    %2835 = vmatprep.subr.mxu0 0.0
    %2836 = vmatpush1.msra.mxu0 0.0
    %2837 = vmatprep.subr.mxu0 0.0
    %2838 = vmatpush1.msra.mxu0 0.0
    %2839 = vmatprep.subr.mxu0 0.0
    %2840 = vmatpush1.msra.mxu0 0.0
    %2841 = vmatprep.mubr.f32.mxu0 0.0
    %2842 = vmatmul.mubr.f32.gmra.mrb[0].mxu0 %v2772
    %v2843 = vpop.f32.mrb[0].mxu0
    %v2844 = vadd.f32 %v2769, %v2843
    %v2845 = vpop.f32.mrb[0].mxu0
    %2846 = vmatprep.mubr.f32.mxu0 0.0
    %2847 = vmatmul.mubr.f32.gmra.mrb[0].mxu0 %v2775
    %v2848 = vpop.f32.mrb[0].mxu0
    %v2849 = vadd.f32 %v2769, %v2848
    %v2850 = vpop.f32.mrb[0].mxu0
    %2851 = vdwg.mxu0
    %v2852 = vxor.u32 %v2844, 2147483648
    %v2853 = vxor.u32 %v2849, 2147483648
    %v2854 = vmul.f32 %v2852, 1.442695
    %v2855 = vpow.pop %v2854
    %v2856 = vmul.f32 %v2853, 1.442695
    %v2857 = vpow.pop %v2856
    %v2858 = vadd.f32 %v2855, 1.0
    %v2859 = vadd.f32 %v2857, 1.0
    %v2860 = vrcp.pop %v2858
    %v2861 = vmul.f32 1.0, %v2860
    %v2862 = vrcp.pop %v2859
    %v2863 = vmul.f32 1.0, %v2862
    %v2864 = vmul.f32 %v123, %v2756
    %v2865 = vmul.f32 %v124, %v2757
    %v2866 = vld [vmem:[%s33] sm:$0xff]
    %v2867 = vld [vmem:[%s33 + $0x8] sm:$0xff]
    %v2868 = vld [vmem:[%s33 + $0x10] sm:$0xff]
    %v2869 = vld [vmem:[%s33 + $0x18] sm:$0xff]
    %v2870 = vld [vmem:[%s35] sm:$0x1]
    %v2872 = vlaneseq
    %v2873 = vshrl.u32 %v2872, 7
    %v2874 = vsub.s32 0, %v2873
    %v2875 = vrot.slane %v2870, %v2874
    %v2878 = vsel %vm144, %v2864, 0
    %v2881 = vsel %vm144, %v2865, 0
    %2883 = vmatprep.subr.mxu0 0.0
    %2884 = vmatpush1.msra.mxu0 %v2866
    %2885 = vmatprep.subr.mxu0 0.0
    %2886 = vmatpush1.msra.mxu0 %v2867
    %2887 = vmatprep.subr.mxu0 0.0
    %2888 = vmatpush1.msra.mxu0 %v2868
    %2889 = vmatprep.subr.mxu0 0.0
    %2890 = vmatpush1.msra.mxu0 %v2869
    %2891 = vmatprep.subr.mxu0 0.0
    %2892 = vmatpush1.msra.mxu0 0.0
    %2893 = vmatprep.subr.mxu0 0.0
    %2894 = vmatpush1.msra.mxu0 0.0
    %2895 = vmatprep.subr.mxu0 0.0
    %2896 = vmatpush1.msra.mxu0 0.0
    %2897 = vmatprep.subr.mxu0 0.0
    %2898 = vmatpush1.msra.mxu0 0.0
    %2899 = vmatprep.subr.mxu0 0.0
    %2900 = vmatpush1.msra.mxu0 0.0
    %2901 = vmatprep.subr.mxu0 0.0
    %2902 = vmatpush1.msra.mxu0 0.0
    %2903 = vmatprep.subr.mxu0 0.0
    %2904 = vmatpush1.msra.mxu0 0.0
    %2905 = vmatprep.subr.mxu0 0.0
    %2906 = vmatpush1.msra.mxu0 0.0
    %2907 = vmatprep.subr.mxu0 0.0
    %2908 = vmatpush1.msra.mxu0 0.0
    %2909 = vmatprep.subr.mxu0 0.0
    %2910 = vmatpush1.msra.mxu0 0.0
    %2911 = vmatprep.subr.mxu0 0.0
    %2912 = vmatpush1.msra.mxu0 0.0
    %2913 = vmatprep.subr.mxu0 0.0
    %2914 = vmatpush1.msra.mxu0 0.0
    %2915 = vmatprep.subr.mxu0 0.0
    %2916 = vmatpush1.msra.mxu0 0.0
    %2917 = vmatprep.subr.mxu0 0.0
    %2918 = vmatpush1.msra.mxu0 0.0
    %2919 = vmatprep.subr.mxu0 0.0
    %2920 = vmatpush1.msra.mxu0 0.0
    %2921 = vmatprep.subr.mxu0 0.0
    %2922 = vmatpush1.msra.mxu0 0.0
    %2923 = vmatprep.subr.mxu0 0.0
    %2924 = vmatpush1.msra.mxu0 0.0
    %2925 = vmatprep.subr.mxu0 0.0
    %2926 = vmatpush1.msra.mxu0 0.0
    %2927 = vmatprep.subr.mxu0 0.0
    %2928 = vmatpush1.msra.mxu0 0.0
    %2929 = vmatprep.subr.mxu0 0.0
    %2930 = vmatpush1.msra.mxu0 0.0
    %2931 = vmatprep.subr.mxu0 0.0
    %2932 = vmatpush1.msra.mxu0 0.0
    %2933 = vmatprep.subr.mxu0 0.0
    %2934 = vmatpush1.msra.mxu0 0.0
    %2935 = vmatprep.subr.mxu0 0.0
    %2936 = vmatpush1.msra.mxu0 0.0
    %2937 = vmatprep.subr.mxu0 0.0
    %2938 = vmatpush1.msra.mxu0 0.0
    %2939 = vmatprep.subr.mxu0 0.0
    %2940 = vmatpush1.msra.mxu0 0.0
    %2941 = vmatprep.subr.mxu0 0.0
    %2942 = vmatpush1.msra.mxu0 0.0
    %2943 = vmatprep.subr.mxu0 0.0
    %2944 = vmatpush1.msra.mxu0 0.0
    %2945 = vmatprep.subr.mxu0 0.0
    %2946 = vmatpush1.msra.mxu0 0.0
    %2947 = vmatprep.mubr.f32.mxu0 0.0
    %2948 = vmatmul.mubr.f32.gmra.mrb[0].mxu0 %v2878
    %v2949 = vpop.f32.mrb[0].mxu0
    %v2950 = vadd.f32 %v2875, %v2949
    %v2951 = vpop.f32.mrb[0].mxu0
    %2952 = vmatprep.mubr.f32.mxu0 0.0
    %2953 = vmatmul.mubr.f32.gmra.mrb[0].mxu0 %v2881
    %v2954 = vpop.f32.mrb[0].mxu0
    %v2955 = vadd.f32 %v2875, %v2954
    %v2956 = vpop.f32.mrb[0].mxu0
    %2957 = vdwg.mxu0
    %v2958 = vxor.u32 %v2950, 2147483648
    %v2959 = vxor.u32 %v2955, 2147483648
    %v2960 = vmul.f32 %v2958, 1.442695
    %v2961 = vpow.pop %v2960
    %v2962 = vmul.f32 %v2959, 1.442695
    %v2963 = vpow.pop %v2962
    %v2964 = vadd.f32 %v2961, 1.0
    %v2965 = vadd.f32 %v2963, 1.0
    %v2966 = vrcp.pop %v2964
    %v2967 = vmul.f32 1.0, %v2966
    %v2968 = vrcp.pop %v2965
    %v2969 = vmul.f32 1.0, %v2968
    %v2970 = vsub.f32 %v2861, %v2967
    %v2971 = vsub.f32 %v2863, %v2969
    %v2972 = vxor.u32 %v2970, 2147483648
    %v2973 = vxor.u32 %v2971, 2147483648
    %v2974 = vmul.f32 %v2972, 1.442695
    %v2975 = vpow.pop %v2974
    %v2976 = vmul.f32 %v2973, 1.442695
    %v2977 = vpow.pop %v2976
    %v2978 = vadd.f32 %v2975, 1.0
    %v2979 = vadd.f32 %v2977, 1.0
    %v2980 = vrcp.pop %v2978
    %v2981 = vmul.f32 1.0, %v2980
    %v2982 = vrcp.pop %v2979
    %v2983 = vmul.f32 1.0, %v2982
    %v2984 = vsub.f32 1.0, %v2981
    %v2985 = vsub.f32 1.0, %v2983
    %v2986 = vmul.f32 %v2981, %v1562
    %v2987 = vmul.f32 %v2983, %v1563
    %v2988 = vld [vmem:[%s37] sm:$0xff]
    %v2989 = vld [vmem:[%s37 + $0x8] sm:$0xff]
    %v2990 = vld [vmem:[%s37 + $0x10] sm:$0xff]
    %v2991 = vld [vmem:[%s37 + $0x18] sm:$0xff]
    %v2992 = vld [vmem:[%s37 + $0x20] sm:$0xff]
    %v2993 = vld [vmem:[%s37 + $0x28] sm:$0xff]
    %v2994 = vld [vmem:[%s37 + $0x30] sm:$0xff]
    %v2995 = vld [vmem:[%s37 + $0x38] sm:$0xff]
    %v2996 = vld [vmem:[%s39] sm:$0x3]
    %v2998 = vlaneseq
    %v2999 = vshrl.u32 %v2998, 7
    %v3000 = vsub.s32 0, %v2999
    %v3001 = vrot.slane %v2996, %v3000
    %v3002 = vlaneseq
    %v3003 = vshrl.u32 %v3002, 7
    %v3004 = vsub.s32 1, %v3003
    %v3005 = vrot.slane %v2996, %v3004
    %v3009 = vsel %vm144, %v2986, 0
    %v3012 = vsel %vm144, %v2987, 0
    %3014 = vmatprep.subr.mxu0 %v2989
    %3015 = vmatpush1.msra.mxu0 %v2988
    %3016 = vmatprep.subr.mxu0 %v2991
    %3017 = vmatpush1.msra.mxu0 %v2990
    %3018 = vmatprep.subr.mxu0 %v2993
    %3019 = vmatpush1.msra.mxu0 %v2992
    %3020 = vmatprep.subr.mxu0 %v2995
    %3021 = vmatpush1.msra.mxu0 %v2994
    %3022 = vmatprep.subr.mxu0 0.0
    %3023 = vmatpush1.msra.mxu0 0.0
    %3024 = vmatprep.subr.mxu0 0.0
    %3025 = vmatpush1.msra.mxu0 0.0
    %3026 = vmatprep.subr.mxu0 0.0
    %3027 = vmatpush1.msra.mxu0 0.0
    %3028 = vmatprep.subr.mxu0 0.0
    %3029 = vmatpush1.msra.mxu0 0.0
    %3030 = vmatprep.subr.mxu0 0.0
    %3031 = vmatpush1.msra.mxu0 0.0
    %3032 = vmatprep.subr.mxu0 0.0
    %3033 = vmatpush1.msra.mxu0 0.0
    %3034 = vmatprep.subr.mxu0 0.0
    %3035 = vmatpush1.msra.mxu0 0.0
    %3036 = vmatprep.subr.mxu0 0.0
    %3037 = vmatpush1.msra.mxu0 0.0
    %3038 = vmatprep.subr.mxu0 0.0
    %3039 = vmatpush1.msra.mxu0 0.0
    %3040 = vmatprep.subr.mxu0 0.0
    %3041 = vmatpush1.msra.mxu0 0.0
    %3042 = vmatprep.subr.mxu0 0.0
    %3043 = vmatpush1.msra.mxu0 0.0
    %3044 = vmatprep.subr.mxu0 0.0
    %3045 = vmatpush1.msra.mxu0 0.0
    %3046 = vmatprep.subr.mxu0 0.0
    %3047 = vmatpush1.msra.mxu0 0.0
    %3048 = vmatprep.subr.mxu0 0.0
    %3049 = vmatpush1.msra.mxu0 0.0
    %3050 = vmatprep.subr.mxu0 0.0
    %3051 = vmatpush1.msra.mxu0 0.0
    %3052 = vmatprep.subr.mxu0 0.0
    %3053 = vmatpush1.msra.mxu0 0.0
    %3054 = vmatprep.subr.mxu0 0.0
    %3055 = vmatpush1.msra.mxu0 0.0
    %3056 = vmatprep.subr.mxu0 0.0
    %3057 = vmatpush1.msra.mxu0 0.0
    %3058 = vmatprep.subr.mxu0 0.0
    %3059 = vmatpush1.msra.mxu0 0.0
    %3060 = vmatprep.subr.mxu0 0.0
    %3061 = vmatpush1.msra.mxu0 0.0
    %3062 = vmatprep.subr.mxu0 0.0
    %3063 = vmatpush1.msra.mxu0 0.0
    %3064 = vmatprep.subr.mxu0 0.0
    %3065 = vmatpush1.msra.mxu0 0.0
    %3066 = vmatprep.subr.mxu0 0.0
    %3067 = vmatpush1.msra.mxu0 0.0
    %3068 = vmatprep.subr.mxu0 0.0
    %3069 = vmatpush1.msra.mxu0 0.0
    %3070 = vmatprep.subr.mxu0 0.0
    %3071 = vmatpush1.msra.mxu0 0.0
    %3072 = vmatprep.subr.mxu0 0.0
    %3073 = vmatpush1.msra.mxu0 0.0
    %3074 = vmatprep.subr.mxu0 0.0
    %3075 = vmatpush1.msra.mxu0 0.0
    %3076 = vmatprep.subr.mxu0 0.0
    %3077 = vmatpush1.msra.mxu0 0.0
    %3078 = vmatprep.mubr.f32.mxu0 0.0
    %3079 = vmatmul.mubr.f32.gmra.mrb[0].mxu0 %v3009
    %v3080 = vpop.f32.mrb[0].mxu0
    %v3081 = vadd.f32 %v3001, %v3080
    %v3082 = vpop.f32.mrb[0].mxu0
    %v3083 = vadd.f32 %v3005, %v3082
    %3084 = vmatprep.mubr.f32.mxu0 0.0
    %3085 = vmatmul.mubr.f32.gmra.mrb[0].mxu0 %v3012
    %v3086 = vpop.f32.mrb[0].mxu0
    %v3087 = vadd.f32 %v3001, %v3086
    %v3088 = vpop.f32.mrb[0].mxu0
    %v3089 = vadd.f32 %v3005, %v3088
    %3090 = vdwg.mxu0
    %v3091 = vmul.f32 %v2984, %v2756
    %v3092 = vmul.f32 %v2985, %v2757
    %v3093 = vld [vmem:[%s41] sm:$0xff]
    %v3094 = vld [vmem:[%s41 + $0x8] sm:$0xff]
    %v3095 = vld [vmem:[%s41 + $0x10] sm:$0xff]
    %v3096 = vld [vmem:[%s41 + $0x18] sm:$0xff]
    %v3097 = vld [vmem:[%s41 + $0x20] sm:$0xff]
    %v3098 = vld [vmem:[%s41 + $0x28] sm:$0xff]
    %v3099 = vld [vmem:[%s41 + $0x30] sm:$0xff]
    %v3100 = vld [vmem:[%s41 + $0x38] sm:$0xff]
    %v3101 = vld [vmem:[%s43] sm:$0x3]
    %v3103 = vlaneseq
    %v3104 = vshrl.u32 %v3103, 7
    %v3105 = vsub.s32 0, %v3104
    %v3106 = vrot.slane %v3101, %v3105
    %v3107 = vlaneseq
    %v3108 = vshrl.u32 %v3107, 7
    %v3109 = vsub.s32 1, %v3108
    %v3110 = vrot.slane %v3101, %v3109
    %v3114 = vsel %vm144, %v3091, 0
    %v3117 = vsel %vm144, %v3092, 0
    %3119 = vmatprep.subr.mxu0 %v3094
    %3120 = vmatpush1.msra.mxu0 %v3093
    %3121 = vmatprep.subr.mxu0 %v3096
    %3122 = vmatpush1.msra.mxu0 %v3095
    %3123 = vmatprep.subr.mxu0 %v3098
    %3124 = vmatpush1.msra.mxu0 %v3097
    %3125 = vmatprep.subr.mxu0 %v3100
    %3126 = vmatpush1.msra.mxu0 %v3099
    %3127 = vmatprep.subr.mxu0 0.0
    %3128 = vmatpush1.msra.mxu0 0.0
    %3129 = vmatprep.subr.mxu0 0.0
    %3130 = vmatpush1.msra.mxu0 0.0
    %3131 = vmatprep.subr.mxu0 0.0
    %3132 = vmatpush1.msra.mxu0 0.0
    %3133 = vmatprep.subr.mxu0 0.0
    %3134 = vmatpush1.msra.mxu0 0.0
    %3135 = vmatprep.subr.mxu0 0.0
    %3136 = vmatpush1.msra.mxu0 0.0
    %3137 = vmatprep.subr.mxu0 0.0
    %3138 = vmatpush1.msra.mxu0 0.0
    %3139 = vmatprep.subr.mxu0 0.0
    %3140 = vmatpush1.msra.mxu0 0.0
    %3141 = vmatprep.subr.mxu0 0.0
    %3142 = vmatpush1.msra.mxu0 0.0
    %3143 = vmatprep.subr.mxu0 0.0
    %3144 = vmatpush1.msra.mxu0 0.0
    %3145 = vmatprep.subr.mxu0 0.0
    %3146 = vmatpush1.msra.mxu0 0.0
    %3147 = vmatprep.subr.mxu0 0.0
    %3148 = vmatpush1.msra.mxu0 0.0
    %3149 = vmatprep.subr.mxu0 0.0
    %3150 = vmatpush1.msra.mxu0 0.0
    %3151 = vmatprep.subr.mxu0 0.0
    %3152 = vmatpush1.msra.mxu0 0.0
    %3153 = vmatprep.subr.mxu0 0.0
    %3154 = vmatpush1.msra.mxu0 0.0
    %3155 = vmatprep.subr.mxu0 0.0
    %3156 = vmatpush1.msra.mxu0 0.0
    %3157 = vmatprep.subr.mxu0 0.0
    %3158 = vmatpush1.msra.mxu0 0.0
    %3159 = vmatprep.subr.mxu0 0.0
    %3160 = vmatpush1.msra.mxu0 0.0
    %3161 = vmatprep.subr.mxu0 0.0
    %3162 = vmatpush1.msra.mxu0 0.0
    %3163 = vmatprep.subr.mxu0 0.0
    %3164 = vmatpush1.msra.mxu0 0.0
    %3165 = vmatprep.subr.mxu0 0.0
    %3166 = vmatpush1.msra.mxu0 0.0
    %3167 = vmatprep.subr.mxu0 0.0
    %3168 = vmatpush1.msra.mxu0 0.0
    %3169 = vmatprep.subr.mxu0 0.0
    %3170 = vmatpush1.msra.mxu0 0.0
    %3171 = vmatprep.subr.mxu0 0.0
    %3172 = vmatpush1.msra.mxu0 0.0
    %3173 = vmatprep.subr.mxu0 0.0
    %3174 = vmatpush1.msra.mxu0 0.0
    %3175 = vmatprep.subr.mxu0 0.0
    %3176 = vmatpush1.msra.mxu0 0.0
    %3177 = vmatprep.subr.mxu0 0.0
    %3178 = vmatpush1.msra.mxu0 0.0
    %3179 = vmatprep.subr.mxu0 0.0
    %3180 = vmatpush1.msra.mxu0 0.0
    %3181 = vmatprep.subr.mxu0 0.0
    %3182 = vmatpush1.msra.mxu0 0.0
    %3183 = vmatprep.mubr.f32.mxu0 0.0
    %3184 = vmatmul.mubr.f32.gmra.mrb[0].mxu0 %v3114
    %v3185 = vpop.f32.mrb[0].mxu0
    %v3186 = vadd.f32 %v3106, %v3185
    %v3187 = vpop.f32.mrb[0].mxu0
    %v3188 = vadd.f32 %v3110, %v3187
    %3189 = vmatprep.mubr.f32.mxu0 0.0
    %3190 = vmatmul.mubr.f32.gmra.mrb[0].mxu0 %v3117
    %v3191 = vpop.f32.mrb[0].mxu0
    %v3192 = vadd.f32 %v3106, %v3191
    %v3193 = vpop.f32.mrb[0].mxu0
    %v3194 = vadd.f32 %v3110, %v3193
    %3195 = vdwg.mxu0
    %v3196 = vmul.f32 %v3081, %v3186
    %v3197 = vmul.f32 %v3083, %v3188
    %v3198 = vmul.f32 %v3087, %v3192
    %v3199 = vmul.f32 %v3089, %v3194
    %v3200 = vld [vmem:[%s45] sm:$0xff]
    %v3201 = vld [vmem:[%s45 + $0x8] sm:$0xff]
    %v3202 = vld [vmem:[%s45 + $0x10] sm:$0xff]
    %v3203 = vld [vmem:[%s45 + $0x18] sm:$0xff]
    %v3204 = vld [vmem:[%s45 + $0x20] sm:$0xff]
    %v3205 = vld [vmem:[%s45 + $0x28] sm:$0xff]
    %v3206 = vld [vmem:[%s45 + $0x30] sm:$0xff]
    %v3207 = vld [vmem:[%s45 + $0x38] sm:$0xff]
    %v3208 = vld [vmem:[%s45 + $0x40] sm:$0xff]
    %v3209 = vld [vmem:[%s45 + $0x48] sm:$0xff]
    %v3210 = vld [vmem:[%s45 + $0x50] sm:$0xff]
    %v3211 = vld [vmem:[%s45 + $0x58] sm:$0xff]
    %v3212 = vld [vmem:[%s45 + $0x60] sm:$0xff]
    %v3213 = vld [vmem:[%s45 + $0x68] sm:$0xff]
    %v3214 = vld [vmem:[%s45 + $0x70] sm:$0xff]
    %v3215 = vld [vmem:[%s45 + $0x78] sm:$0xff]
    %v3216 = vld [vmem:[%s45 + $0x80] sm:$0xff]
    %v3217 = vld [vmem:[%s45 + $0x88] sm:$0xff]
    %v3218 = vld [vmem:[%s45 + $0x90] sm:$0xff]
    %v3219 = vld [vmem:[%s45 + $0x98] sm:$0xff]
    %v3220 = vld [vmem:[%s45 + $0xa0] sm:$0xff]
    %v3221 = vld [vmem:[%s45 + $0xa8] sm:$0xff]
    %v3222 = vld [vmem:[%s45 + $0xb0] sm:$0xff]
    %v3223 = vld [vmem:[%s45 + $0xb8] sm:$0xff]
    %v3224 = vld [vmem:[%s45 + $0xc0] sm:$0xff]
    %v3225 = vld [vmem:[%s45 + $0xc8] sm:$0xff]
    %v3226 = vld [vmem:[%s45 + $0xd0] sm:$0xff]
    %v3227 = vld [vmem:[%s45 + $0xd8] sm:$0xff]
    %v3228 = vld [vmem:[%s45 + $0xe0] sm:$0xff]
    %v3229 = vld [vmem:[%s45 + $0xe8] sm:$0xff]
    %v3230 = vld [vmem:[%s45 + $0xf0] sm:$0xff]
    %v3231 = vld [vmem:[%s45 + $0xf8] sm:$0xff]
    %3232 = vmatprep.subr.mxu0 0.0
    %3233 = vmatpush1.msra.mxu0 %v3200
    %3234 = vmatprep.subr.mxu0 0.0
    %3235 = vmatpush1.msra.mxu0 %v3201
    %3236 = vmatprep.subr.mxu0 0.0
    %3237 = vmatpush1.msra.mxu0 %v3202
    %3238 = vmatprep.subr.mxu0 0.0
    %3239 = vmatpush1.msra.mxu0 %v3203
    %3240 = vmatprep.subr.mxu0 0.0
    %3241 = vmatpush1.msra.mxu0 %v3204
    %3242 = vmatprep.subr.mxu0 0.0
    %3243 = vmatpush1.msra.mxu0 %v3205
    %3244 = vmatprep.subr.mxu0 0.0
    %3245 = vmatpush1.msra.mxu0 %v3206
    %3246 = vmatprep.subr.mxu0 0.0
    %3247 = vmatpush1.msra.mxu0 %v3207
    %3248 = vmatprep.subr.mxu0 0.0
    %3249 = vmatpush1.msra.mxu0 %v3208
    %3250 = vmatprep.subr.mxu0 0.0
    %3251 = vmatpush1.msra.mxu0 %v3209
    %3252 = vmatprep.subr.mxu0 0.0
    %3253 = vmatpush1.msra.mxu0 %v3210
    %3254 = vmatprep.subr.mxu0 0.0
    %3255 = vmatpush1.msra.mxu0 %v3211
    %3256 = vmatprep.subr.mxu0 0.0
    %3257 = vmatpush1.msra.mxu0 %v3212
    %3258 = vmatprep.subr.mxu0 0.0
    %3259 = vmatpush1.msra.mxu0 %v3213
    %3260 = vmatprep.subr.mxu0 0.0
    %3261 = vmatpush1.msra.mxu0 %v3214
    %3262 = vmatprep.subr.mxu0 0.0
    %3263 = vmatpush1.msra.mxu0 %v3215
    %3264 = vmatprep.subr.mxu0 0.0
    %3265 = vmatpush1.msra.mxu0 %v3216
    %3266 = vmatprep.subr.mxu0 0.0
    %3267 = vmatpush1.msra.mxu0 %v3217
    %3268 = vmatprep.subr.mxu0 0.0
    %3269 = vmatpush1.msra.mxu0 %v3218
    %3270 = vmatprep.subr.mxu0 0.0
    %3271 = vmatpush1.msra.mxu0 %v3219
    %3272 = vmatprep.subr.mxu0 0.0
    %3273 = vmatpush1.msra.mxu0 %v3220
    %3274 = vmatprep.subr.mxu0 0.0
    %3275 = vmatpush1.msra.mxu0 %v3221
    %3276 = vmatprep.subr.mxu0 0.0
    %3277 = vmatpush1.msra.mxu0 %v3222
    %3278 = vmatprep.subr.mxu0 0.0
    %3279 = vmatpush1.msra.mxu0 %v3223
    %3280 = vmatprep.subr.mxu0 0.0
    %3281 = vmatpush1.msra.mxu0 %v3224
    %3282 = vmatprep.subr.mxu0 0.0
    %3283 = vmatpush1.msra.mxu0 %v3225
    %3284 = vmatprep.subr.mxu0 0.0
    %3285 = vmatpush1.msra.mxu0 %v3226
    %3286 = vmatprep.subr.mxu0 0.0
    %3287 = vmatpush1.msra.mxu0 %v3227
    %3288 = vmatprep.subr.mxu0 0.0
    %3289 = vmatpush1.msra.mxu0 %v3228
    %3290 = vmatprep.subr.mxu0 0.0
    %3291 = vmatpush1.msra.mxu0 %v3229
    %3292 = vmatprep.subr.mxu0 0.0
    %3293 = vmatpush1.msra.mxu0 %v3230
    %3294 = vmatprep.subr.mxu0 0.0
    %3295 = vmatpush1.msra.mxu0 %v3231
    %3296 = vmatprep.mubr.f32.mxu0 %v3197
    %3297 = vmatmul.mubr.f32.gmra.mrb[0].mxu0 %v3196
    %v3298 = vpop.f32.mrb[0].mxu0
    %v3299 = vadd.f32 0.0, %v3298
    %v3300 = vpop.f32.mrb[0].mxu0
    %3301 = vmatprep.mubr.f32.mxu0 %v3199
    %3302 = vmatmul.mubr.f32.gmra.mrb[0].mxu0 %v3198
    %v3303 = vpop.f32.mrb[0].mxu0
    %v3304 = vadd.f32 0.0, %v3303
    %v3305 = vpop.f32.mrb[0].mxu0
    %3306 = vdwg.mxu0
    %v3307 = vld [vmem:[%s47] sm:$0xff]
    %v3308 = vld [vmem:[%s47 + $0x8] sm:$0xff]
    %v3309 = vld [vmem:[%s47 + $0x10] sm:$0xff]
    %v3310 = vld [vmem:[%s47 + $0x18] sm:$0xff]
    %v3311 = vld [vmem:[%s49] sm:$0x1]
    %v3313 = vlaneseq
    %v3314 = vshrl.u32 %v3313, 7
    %v3315 = vsub.s32 0, %v3314
    %v3316 = vrot.slane %v3311, %v3315
    %v3319 = vsel %vm144, %v3299, 0
    %v3322 = vsel %vm144, %v3304, 0
    %3324 = vmatprep.subr.mxu0 0.0
    %3325 = vmatpush1.msra.mxu0 %v3307
    %3326 = vmatprep.subr.mxu0 0.0
    %3327 = vmatpush1.msra.mxu0 %v3308
    %3328 = vmatprep.subr.mxu0 0.0
    %3329 = vmatpush1.msra.mxu0 %v3309
    %3330 = vmatprep.subr.mxu0 0.0
    %3331 = vmatpush1.msra.mxu0 %v3310
    %3332 = vmatprep.subr.mxu0 0.0
    %3333 = vmatpush1.msra.mxu0 0.0
    %3334 = vmatprep.subr.mxu0 0.0
    %3335 = vmatpush1.msra.mxu0 0.0
    %3336 = vmatprep.subr.mxu0 0.0
    %3337 = vmatpush1.msra.mxu0 0.0
    %3338 = vmatprep.subr.mxu0 0.0
    %3339 = vmatpush1.msra.mxu0 0.0
    %3340 = vmatprep.subr.mxu0 0.0
    %3341 = vmatpush1.msra.mxu0 0.0
    %3342 = vmatprep.subr.mxu0 0.0
    %3343 = vmatpush1.msra.mxu0 0.0
    %3344 = vmatprep.subr.mxu0 0.0
    %3345 = vmatpush1.msra.mxu0 0.0
    %3346 = vmatprep.subr.mxu0 0.0
    %3347 = vmatpush1.msra.mxu0 0.0
    %3348 = vmatprep.subr.mxu0 0.0
    %3349 = vmatpush1.msra.mxu0 0.0
    %3350 = vmatprep.subr.mxu0 0.0
    %3351 = vmatpush1.msra.mxu0 0.0
    %3352 = vmatprep.subr.mxu0 0.0
    %3353 = vmatpush1.msra.mxu0 0.0
    %3354 = vmatprep.subr.mxu0 0.0
    %3355 = vmatpush1.msra.mxu0 0.0
    %3356 = vmatprep.subr.mxu0 0.0
    %3357 = vmatpush1.msra.mxu0 0.0
    %3358 = vmatprep.subr.mxu0 0.0
    %3359 = vmatpush1.msra.mxu0 0.0
    %3360 = vmatprep.subr.mxu0 0.0
    %3361 = vmatpush1.msra.mxu0 0.0
    %3362 = vmatprep.subr.mxu0 0.0
    %3363 = vmatpush1.msra.mxu0 0.0
    %3364 = vmatprep.subr.mxu0 0.0
    %3365 = vmatpush1.msra.mxu0 0.0
    %3366 = vmatprep.subr.mxu0 0.0
    %3367 = vmatpush1.msra.mxu0 0.0
    %3368 = vmatprep.subr.mxu0 0.0
    %3369 = vmatpush1.msra.mxu0 0.0
    %3370 = vmatprep.subr.mxu0 0.0
    %3371 = vmatpush1.msra.mxu0 0.0
    %3372 = vmatprep.subr.mxu0 0.0
    %3373 = vmatpush1.msra.mxu0 0.0
    %3374 = vmatprep.subr.mxu0 0.0
    %3375 = vmatpush1.msra.mxu0 0.0
    %3376 = vmatprep.subr.mxu0 0.0
    %3377 = vmatpush1.msra.mxu0 0.0
    %3378 = vmatprep.subr.mxu0 0.0
    %3379 = vmatpush1.msra.mxu0 0.0
    %3380 = vmatprep.subr.mxu0 0.0
    %3381 = vmatpush1.msra.mxu0 0.0
    %3382 = vmatprep.subr.mxu0 0.0
    %3383 = vmatpush1.msra.mxu0 0.0
    %3384 = vmatprep.subr.mxu0 0.0
    %3385 = vmatpush1.msra.mxu0 0.0
    %3386 = vmatprep.subr.mxu0 0.0
    %3387 = vmatpush1.msra.mxu0 0.0
    %3388 = vmatprep.mubr.f32.mxu0 0.0
    %3389 = vmatmul.mubr.f32.gmra.mrb[0].mxu0 %v3319
    %v3390 = vpop.f32.mrb[0].mxu0
    %v3391 = vadd.f32 %v3316, %v3390
    %v3392 = vpop.f32.mrb[0].mxu0
    %3393 = vmatprep.mubr.f32.mxu0 0.0
    %3394 = vmatmul.mubr.f32.gmra.mrb[0].mxu0 %v3322
    %v3395 = vpop.f32.mrb[0].mxu0
    %v3396 = vadd.f32 %v3316, %v3395
    %v3397 = vpop.f32.mrb[0].mxu0
    %3398 = vdwg.mxu0
    %v3399 = vmax.f32 %v3391, 0.0
    %v3400 = vmax.f32 %v3396, 0.0
    %v3401 = vld [vmem:[%s51] sm:$0xff]
    %v3402 = vld [vmem:[%s51 + $0x8] sm:$0xff]
    %v3403 = vld [vmem:[%s51 + $0x10] sm:$0xff]
    %v3404 = vld [vmem:[%s51 + $0x18] sm:$0xff]
    %v3405 = vld [vmem:[%s51 + $0x20] sm:$0xff]
    %v3406 = vld [vmem:[%s51 + $0x28] sm:$0xff]
    %v3407 = vld [vmem:[%s51 + $0x30] sm:$0xff]
    %v3408 = vld [vmem:[%s51 + $0x38] sm:$0xff]
    %v3409 = vld [vmem:[%s51 + $0x40] sm:$0xff]
    %v3410 = vld [vmem:[%s51 + $0x48] sm:$0xff]
    %v3411 = vld [vmem:[%s51 + $0x50] sm:$0xff]
    %v3412 = vld [vmem:[%s51 + $0x58] sm:$0xff]
    %v3413 = vld [vmem:[%s51 + $0x60] sm:$0xff]
    %v3414 = vld [vmem:[%s51 + $0x68] sm:$0xff]
    %v3415 = vld [vmem:[%s51 + $0x70] sm:$0xff]
    %v3416 = vld [vmem:[%s51 + $0x78] sm:$0xff]
    %v3417 = vld [vmem:[%s53] sm:$0x1]
    %v3419 = vlaneseq
    %v3420 = vshrl.u32 %v3419, 7
    %v3421 = vsub.s32 0, %v3420
    %v3422 = vrot.slane %v3417, %v3421
    %3424 = vmatprep.subr.mxu0 0.0
    %3425 = vmatpush1.msra.mxu0 %v3401
    %3426 = vmatprep.subr.mxu0 0.0
    %3427 = vmatpush1.msra.mxu0 %v3402
    %3428 = vmatprep.subr.mxu0 0.0
    %3429 = vmatpush1.msra.mxu0 %v3403
    %3430 = vmatprep.subr.mxu0 0.0
    %3431 = vmatpush1.msra.mxu0 %v3404
    %3432 = vmatprep.subr.mxu0 0.0
    %3433 = vmatpush1.msra.mxu0 %v3405
    %3434 = vmatprep.subr.mxu0 0.0
    %3435 = vmatpush1.msra.mxu0 %v3406
    %3436 = vmatprep.subr.mxu0 0.0
    %3437 = vmatpush1.msra.mxu0 %v3407
    %3438 = vmatprep.subr.mxu0 0.0
    %3439 = vmatpush1.msra.mxu0 %v3408
    %3440 = vmatprep.subr.mxu0 0.0
    %3441 = vmatpush1.msra.mxu0 %v3409
    %3442 = vmatprep.subr.mxu0 0.0
    %3443 = vmatpush1.msra.mxu0 %v3410
    %3444 = vmatprep.subr.mxu0 0.0
    %3445 = vmatpush1.msra.mxu0 %v3411
    %3446 = vmatprep.subr.mxu0 0.0
    %3447 = vmatpush1.msra.mxu0 %v3412
    %3448 = vmatprep.subr.mxu0 0.0
    %3449 = vmatpush1.msra.mxu0 %v3413
    %3450 = vmatprep.subr.mxu0 0.0
    %3451 = vmatpush1.msra.mxu0 %v3414
    %3452 = vmatprep.subr.mxu0 0.0
    %3453 = vmatpush1.msra.mxu0 %v3415
    %3454 = vmatprep.subr.mxu0 0.0
    %3455 = vmatpush1.msra.mxu0 %v3416
    %3456 = vmatprep.subr.mxu0 0.0
    %3457 = vmatpush1.msra.mxu0 0.0
    %3458 = vmatprep.subr.mxu0 0.0
    %3459 = vmatpush1.msra.mxu0 0.0
    %3460 = vmatprep.subr.mxu0 0.0
    %3461 = vmatpush1.msra.mxu0 0.0
    %3462 = vmatprep.subr.mxu0 0.0
    %3463 = vmatpush1.msra.mxu0 0.0
    %3464 = vmatprep.subr.mxu0 0.0
    %3465 = vmatpush1.msra.mxu0 0.0
    %3466 = vmatprep.subr.mxu0 0.0
    %3467 = vmatpush1.msra.mxu0 0.0
    %3468 = vmatprep.subr.mxu0 0.0
    %3469 = vmatpush1.msra.mxu0 0.0
    %3470 = vmatprep.subr.mxu0 0.0
    %3471 = vmatpush1.msra.mxu0 0.0
    %3472 = vmatprep.subr.mxu0 0.0
    %3473 = vmatpush1.msra.mxu0 0.0
    %3474 = vmatprep.subr.mxu0 0.0
    %3475 = vmatpush1.msra.mxu0 0.0
    %3476 = vmatprep.subr.mxu0 0.0
    %3477 = vmatpush1.msra.mxu0 0.0
    %3478 = vmatprep.subr.mxu0 0.0
    %3479 = vmatpush1.msra.mxu0 0.0
    %3480 = vmatprep.subr.mxu0 0.0
    %3481 = vmatpush1.msra.mxu0 0.0
    %3482 = vmatprep.subr.mxu0 0.0
    %3483 = vmatpush1.msra.mxu0 0.0
    %3484 = vmatprep.subr.mxu0 0.0
    %3485 = vmatpush1.msra.mxu0 0.0
    %3486 = vmatprep.subr.mxu0 0.0
    %3487 = vmatpush1.msra.mxu0 0.0
    %3488 = vmatprep.mubr.f32.mxu0 0.0
    %3489 = vmatmul.mubr.f32.gmra.mrb[0].mxu0 %v3399
    %v3490 = vpop.f32.mrb[0].mxu0
    %v3491 = vadd.f32 %v3422, %v3490
    %v3492 = vpop.f32.mrb[0].mxu0
    %3493 = vmatprep.mubr.f32.mxu0 0.0
    %3494 = vmatmul.mubr.f32.gmra.mrb[0].mxu0 %v3400
    %v3495 = vpop.f32.mrb[0].mxu0
    %v3496 = vadd.f32 %v3422, %v3495
    %v3497 = vpop.f32.mrb[0].mxu0
    %3498 = vdwg.mxu0
    %v3499 = vadd.f32 %v3299, %v3491
    %v3500 = vadd.f32 %v3304, %v3496
    %v3501 = vsel %vm144, %v3499, 0.0
    %3502 = vadd.xlane.f32.xlu0 %v3501
    %v3503 = vpop.xlane.xlu0 %3502
    %v3504 = vsel %vm144, %v3500, 0.0
    %3505 = vadd.xlane.f32.xlu0 %v3504
    %v3506 = vpop.xlane.xlu0 %3505
    %v3507 = vrcp.pop 32.0
    %v3508 = vmul.f32 %v3503, %v3507
    %v3509 = vmul.f32 %v3506, %v3507
    %v3510 = vsub.f32 %v3499, %v3508
    %v3511 = vsub.f32 %v3500, %v3509
    %v3512 = vmul.f32 %v3510, %v3510
    %v3513 = vmul.f32 %v3511, %v3511
    %v3514 = vsel %vm144, %v3512, 0.0
    %3515 = vadd.xlane.f32.xlu0 %v3514
    %v3516 = vpop.xlane.xlu0 %3515
    %v3517 = vsel %vm144, %v3513, 0.0
    %3518 = vadd.xlane.f32.xlu0 %v3517
    %v3519 = vpop.xlane.xlu0 %3518
    %v3520 = vmul.f32 %v3516, 0.032258064
    %v3521 = vmul.f32 %v3519, 0.032258064
    %v3522 = vrsqrt.pop %v3520
    %v3523 = vmul.f32 %v3520, %v3522
    %vm3524 = vcmp.eq.f32.partialorder %v3520, inf
    %v3525 = vsel %vm3524, %v3520, %v3523
    %vm3526 = vcmp.eq.f32.partialorder %v3520, 0.0
    %v3527 = vand.u32 %v3520, 2147483648
    %v3528 = vsel %vm3526, %v3527, %v3525
    %v3529 = vrsqrt.pop %v3521
    %v3530 = vmul.f32 %v3521, %v3529
    %vm3531 = vcmp.eq.f32.partialorder %v3521, inf
    %v3532 = vsel %vm3531, %v3521, %v3530
    %vm3533 = vcmp.eq.f32.partialorder %v3521, 0.0
    %v3534 = vand.u32 %v3521, 2147483648
    %v3535 = vsel %vm3533, %v3534, %v3532
    %v3536 = vld [vmem:[%s55] sm:$0x1]
    %v3538 = vlaneseq
    %v3539 = vshrl.u32 %v3538, 7
    %v3540 = vsub.s32 0, %v3539
    %v3541 = vrot.slane %v3536, %v3540
    %v3543 = vmul.f32 %v3541, %v3510
    %v3544 = vmul.f32 %v3541, %v3511
    %v3545 = vadd.f32 %v3528, 1e-06
    %v3546 = vadd.f32 %v3535, 1e-06
    %v3547 = vrcp.pop %v3545
    %v3548 = vmul.f32 %v3543, %v3547
    %v3549 = vrcp.pop %v3546
    %v3550 = vmul.f32 %v3544, %v3549
    %v3551 = vld [vmem:[%s57] sm:$0x1]
    %v3553 = vlaneseq
    %v3554 = vshrl.u32 %v3553, 7
    %v3555 = vsub.s32 0, %v3554
    %v3556 = vrot.slane %v3551, %v3555
    %v3558 = vadd.f32 %v3548, %v3556
    %v3559 = vadd.f32 %v3550, %v3556
    %3560 = vst.msk [vmem:[#allocation2] sm:$0xff] %vm144, %v3558
    %3561 = vst.msk [vmem:[#allocation2 + $0x8] sm:$0xff] %vm144, %v3559
    // Predicated region
    $region118: #{fui_forward.1} parent=1 // pred_check
      _
    $region119: #{fui_forward.1} parent=1 // pred_check_branch
      %3563 = sbr.rel (0) target = $region121
    $region120: #{fui_forward.1} parent=1 // pred_region
      %s3565 = ssub.s32 256, 256
      %3566 = vsyncadd [#allocation3], %s3565
      %s3567 = sshll.u32 [#allocation2], 4
      %s3568 = int_to_ptr.vmem [resolvable:$true] %s3567
      %3573 = dma.vmem_to_hbm [thread:$0]  %s3568, 256, %s59, [#allocation3], 128, 128, 8
    $region121: #{fui_forward.1} parent=1 // pred_fallthru
      _
    // Predicated region
    $region122: #{fui_forward.1} parent=1 // pred_check
      _
    $region123: #{fui_forward.1} parent=1 // pred_check_branch
      %3575 = sbr.rel (0) target = $region125
    $region124: #{fui_forward.1} parent=1 // pred_region
      %3576 = dma.done [#allocation3], 256
    $region125: #{fui_forward.1} parent=1 // pred_fallthru
      _
    %3577 = vsyncpa [#allocation3], 1

</llo_original>
